<compile_context>
chip_gen: v5e
topology: v5e:2x2
jax: 0.10.0
libtpu: 0.0.40
codegen_flags: <defaults>
</compile_context>

<pallas_src>
import functools

import jax
import jax.numpy as jnp
from jax.experimental import pallas as pl
from jax.experimental.pallas import tpu as pltpu

EPS = 1e-5


# ----------------------------------------------------------------------------
# Kernels
# ----------------------------------------------------------------------------
def _conv3x3_body(a_f32, w_ref, y_ref, stat_ref, pad_sc):
    """3x3 'same' conv of one image as 9 accumulating MXU dots on shifted views of a
    zero-halo VMEM scratch, plus per-image BatchNorm partials (sum, sumsq) computed
    from the exact f32 conv output (before any downcast).

    a_f32: (H, W, Cin) float32 input (already BN/ReLU'd if needed)."""
    H, W, Cin = a_f32.shape
    Cp = w_ref.shape[-1]
    Hp2, Wp, _ = pad_sc.shape
    cdt = pad_sc.dtype

    if Cin == Cp:
        # Channels already lane-dense: only the 1-pixel halo strips need zeroing,
        # the interior is fully overwritten below.
        pad_sc[0:1, :, :] = jnp.zeros((1, Wp, Cp), cdt)
        pad_sc[H + 1:H + 2, :, :] = jnp.zeros((1, Wp, Cp), cdt)
        pad_sc[:, 0:1, :] = jnp.zeros((Hp2, 1, Cp), cdt)
        pad_sc[:, W + 1:W + 2, :] = jnp.zeros((Hp2, 1, Cp), cdt)
    else:
        # Channel-padded case (Cin < Cp): zero everything so lanes Cin..Cp-1 are 0.
        pad_sc[...] = jnp.zeros_like(pad_sc)
    pad_sc[1:H + 1, 1:W + 1, 0:Cin] = a_f32.astype(cdt)

    # 9 per-tap accumulating dots (K = Cp each) -- no im2col buffer / copies.
    y = jnp.zeros((H * W, Cp), jnp.float32)
    for dh in range(3):
        for dw in range(3):
            lhs = pad_sc[dh:dh + H, dw:dw + W, :].reshape(H * W, Cp)
            y = y + jnp.dot(lhs, w_ref[dh * 3 + dw],
                            preferred_element_type=jnp.float32)

    # BN partials for this image (sum, sum-of-squares) in f32.
    stat_ref[0:1, 0:1, :] = jnp.sum(y, axis=0, keepdims=True).reshape(1, 1, Cp)
    stat_ref[0:1, 1:2, :] = jnp.sum(y * y, axis=0, keepdims=True).reshape(1, 1, Cp)

    y_ref[...] = y.reshape(1, H, W, Cp).astype(y_ref.dtype)


def conv1_kernel(x_ref, w_ref, y_ref, stat_ref, pad_sc):
    _, H, W, C = x_ref.shape
    a = x_ref[...].reshape(H, W, C).astype(jnp.float32)
    _conv3x3_body(a, w_ref, y_ref, stat_ref, pad_sc)


def conv2_kernel(x_ref, aff_ref, w_ref, y_ref, stat_ref, pad_sc):
    """bn1 (already reduced to per-channel scale/shift) + ReLU fused into conv2."""
    _, H, W, Cp = x_ref.shape
    aff = aff_ref[...]                                     # (2, Cp): scale, shift
    a = x_ref[...].reshape(H, W, Cp).astype(jnp.float32)
    a = jnp.maximum(a * aff[0:1].reshape(1, 1, Cp)
                    + aff[1:2].reshape(1, 1, Cp), 0.0)
    _conv3x3_body(a, w_ref, y_ref, stat_ref, pad_sc)


def bn_relu_add_kernel(y_ref, aff_ref, x_ref, out_ref):
    """out = relu(bn2(y)) + identity; only the first C (real) channels are written."""
    C = out_ref.shape[-1]
    aff = aff_ref[...]
    scale = aff[0:1, 0:C].reshape(1, 1, 1, C)
    shift = aff[1:2, 0:C].reshape(1, 1, 1, C)
    y = y_ref[...][..., 0:C].astype(jnp.float32)
    out_ref[...] = (jnp.maximum(y * scale + shift, 0.0)
                    + x_ref[...].astype(jnp.float32))


# ----------------------------------------------------------------------------
# Wrapper
# ----------------------------------------------------------------------------
def _bn_affine(stats, gamma_beta, count):
    """Finalize training-mode BN: per-image (sum, sumsq) -> per-channel (scale, shift)."""
    s = jnp.sum(stats, axis=0)                             # (2, Cp)
    mean = s[0] / count
    var = jnp.maximum(s[1] / count - mean * mean, 0.0)     # biased variance
    scale = gamma_beta[0] * jax.lax.rsqrt(var + EPS)
    shift = gamma_beta[1] - mean * scale
    return jnp.stack([scale, shift])                       # (2, Cp)


@functools.partial(jax.jit, static_argnames=("compute_dtype",))
def basic_block(x_nchw, w1_oihw, w2_oihw, bn1, bn2, *,
                compute_dtype=jnp.bfloat16):
    """x: (N, C, H, W) NCHW; weights OIHW; bn* = (2, C) rows [gamma, beta]. Returns NCHW."""
    N, C, H, W = x_nchw.shape
    Cout, Cin = w1_oihw.shape[0], w1_oihw.shape[1]
    assert Cin == C and Cout == C, \
        "identity-shortcut BasicBlock requires inplanes == planes, stride == 1"
    # TODO(synk): downsample shortcut (BN -> ReLU -> 1x1 strided conv) for stride != 1
    # or inplanes != planes is not implemented.

    Cp = ((C + 127) // 128) * 128                  # lane-dense conv channel width
    Wp = ((W + 2 + 7) // 8) * 8                    # 8-aligned halo-scratch row stride
    act_dtype = jnp.float32 if compute_dtype == jnp.float32 else jnp.bfloat16

    # x stays unpadded / original dtype in HBM (only an NHWC transpose); channel and
    # spatial zero-padding happen in VMEM when building the halo scratch.
    x = jnp.transpose(x_nchw, (0, 2, 3, 1))        # (N, H, W, C)

    def prep_w(w):
        # OIHW -> (kh, kw, Cin, Cout), pad channels, one (Cp, Cp) tile per tap.
        wk = jnp.transpose(w, (2, 3, 1, 0)).astype(jnp.float32)
        wk = jnp.pad(wk, ((0, 0), (0, 0), (0, Cp - C), (0, Cp - C)))
        return wk.reshape(9, Cp, Cp).astype(compute_dtype)

    w1k, w2k = prep_w(w1_oihw), prep_w(w2_oihw)
    g1 = jnp.pad(bn1.astype(jnp.float32), ((0, 0), (0, Cp - C)))
    g2 = jnp.pad(bn2.astype(jnp.float32), ((0, 0), (0, Cp - C)))

    # One image per grid step; batch axis is "parallel" (both TCs busy on v7x).
    grid = (N,)
    x_spec = pl.BlockSpec((1, H, W, C), lambda i: (i, 0, 0, 0))     # unpadded input
    y_spec = pl.BlockSpec((1, H, W, Cp), lambda i: (i, 0, 0, 0))    # padded activations
    out_spec = pl.BlockSpec((1, H, W, C), lambda i: (i, 0, 0, 0))   # unpadded output
    # TODO(synk): on v7x with Cp >= 512, stage the (revisited) weight block once via a
    # manual copy / single-buffering to avoid a 2x-buffered 9*Cp*Cp tile in 64 MiB VMEM.
    w_spec = pl.BlockSpec((9, Cp, Cp), lambda i: (0, 0, 0))
    aff_spec = pl.BlockSpec((2, Cp), lambda i: (0, 0))
    stat_spec = pl.BlockSpec((1, 2, Cp), lambda i: (i, 0, 0))

    itemsize = jnp.dtype(compute_dtype).itemsize
    act_isz = jnp.dtype(act_dtype).itemsize
    x_bytes = H * W * C * jnp.dtype(x.dtype).itemsize
    act_bytes = H * W * Cp * act_isz
    resident = (2 * x_bytes + 4 * act_bytes                 # double-buffered act blocks
                + 2 * 9 * Cp * Cp * itemsize                # weights (worst case 2-buf)
                + (H + 2) * Wp * Cp * itemsize              # halo scratch
                + 8 * Cp * 4 + 8 * Cp * 4)                  # affine + stat blocks
    try:
        vmem_cap = int(pltpu.get_tpu_info().vmem_capacity_bytes)
    except Exception:                                       # conservative fallback
        vmem_cap = 64 * 1024 * 1024
    # ~48 MiB cap on v7x (64 MiB physical), ~96 MiB on v5e/v6e (128 MiB physical).
    vmem_limit = int(min(max(2 * resident, 16 * 1024 * 1024), (3 * vmem_cap) // 4))
    cparams = pltpu.CompilerParams(dimension_semantics=("parallel",),
                                   vmem_limit_bytes=vmem_limit)

    y_out = jax.ShapeDtypeStruct((N, H, W, Cp), act_dtype)
    stat_out = jax.ShapeDtypeStruct((N, 2, Cp), jnp.float32)
    scratch = [pltpu.VMEM((H + 2, Wp, Cp), compute_dtype)]  # zero-halo pad scratch

    # conv1 (+ per-image BN1 partial stats)
    y1, st1 = pl.pallas_call(
        conv1_kernel, grid=grid,
        in_specs=[x_spec, w_spec],
        out_specs=[y_spec, stat_spec],
        out_shape=[y_out, stat_out],
        scratch_shapes=scratch,
        compiler_params=cparams,
    )(x, w1k)
    aff1 = _bn_affine(st1, g1, N * H * W)

    # bn1 + relu + conv2 (+ per-image BN2 partial stats)
    y2, st2 = pl.pallas_call(
        conv2_kernel, grid=grid,
        in_specs=[y_spec, aff_spec, w_spec],
        out_specs=[y_spec, stat_spec],
        out_shape=[y_out, stat_out],
        scratch_shapes=scratch,
        compiler_params=cparams,
    )(y1, aff1, w2k)
    aff2 = _bn_affine(st2, g2, N * H * W)

    # bn2 + relu + identity shortcut add (residual read straight from unpadded x;
    # only the C real channels are written back to HBM).
    out = pl.pallas_call(
        bn_relu_add_kernel, grid=grid,
        in_specs=[y_spec, aff_spec, x_spec],
        out_specs=out_spec,
        out_shape=jax.ShapeDtypeStruct((N, H, W, C), jnp.float32),
        compiler_params=cparams,
    )(y2, aff2, x)

    return jnp.transpose(out, (0, 3, 1, 2))                 # back to NCHW


# ----------------------------------------------------------------------------
# Plain-JAX reference (matches the PyTorch forward, training-mode BN)
# ----------------------------------------------------------------------------
def reference(x, w1, w2, bn1, bn2):
    def conv(xx, ww):
        return jax.lax.conv_general_dilated(
            xx, ww, window_strides=(1, 1), padding=((1, 1), (1, 1)),
            dimension_numbers=("NCHW", "OIHW", "NCHW"))

    def bn_relu(y, p):
        gamma = p[0].reshape(1, -1, 1, 1)
        beta = p[1].reshape(1, -1, 1, 1)
        mean = jnp.mean(y, axis=(0, 2, 3), keepdims=True)
        var = jnp.mean((y - mean) ** 2, axis=(0, 2, 3), keepdims=True)
        return jnp.maximum((y - mean) / jnp.sqrt(var + EPS) * gamma + beta, 0.0)

    out = bn_relu(conv(x, w1), bn1)
    out = bn_relu(conv(out, w2), bn2)
    return out + x


if __name__ == "__main__":
    key = jax.random.PRNGKey(0)
    k_x, k_w1, k_w2, k_g1, k_b1, k_g2, k_b2 = jax.random.split(key, 7)

    N, C, H, W = 2, 4, 16, 16          # inplanes == planes == 4, stride == 1
    x = jax.random.normal(k_x, (N, C, H, W), jnp.float32)
    w1 = 0.1 * jax.random.normal(k_w1, (C, C, 3, 3), jnp.float32)   # OIHW
    w2 = 0.1 * jax.random.normal(k_w2, (C, C, 3, 3), jnp.float32)   # OIHW
    bn1 = jnp.stack([1.0 + 0.1 * jax.random.normal(k_g1, (C,), jnp.float32),
                     0.1 * jax.random.normal(k_b1, (C,), jnp.float32)])
    bn2 = jnp.stack([1.0 + 0.1 * jax.random.normal(k_g2, (C,), jnp.float32),
                     0.1 * jax.random.normal(k_b2, (C,), jnp.float32)])

    ref = reference(x, w1, w2, bn1, bn2)

    # f32 path (f32 intermediates + f32 MXU): tighter numerical check.
    out_f32 = jax.block_until_ready(
        basic_block(x, w1, w2, bn1, bn2, compute_dtype=jnp.float32))
    assert out_f32.shape == (N, C, H, W)
    assert jnp.allclose(out_f32, ref, atol=1e-2, rtol=1e-2), "f32 mismatch vs reference"

    # bf16 path (default; bf16 intermediates + bf16 MXU): looser tolerance.
    out_bf16 = jax.block_until_ready(
        basic_block(x, w1, w2, bn1, bn2, compute_dtype=jnp.bfloat16))
    assert out_bf16.shape == (N, C, H, W)
    assert jnp.allclose(out_bf16, ref, atol=5e-2, rtol=5e-2), "bf16 mismatch vs reference"

    print("KERNEL_OK")
</pallas_src>

<mosaic_0001>
module attributes {stable_mosaic.version = 11 : i64} {
  func.func @conv1_kernel(%arg0: i32, %arg1: memref<1x16x16x4xf32, #tpu.memory_space<vmem>>, %arg2: memref<9x128x128xf32, #tpu.memory_space<vmem>>, %arg3: memref<1x16x16x128xf32, #tpu.memory_space<vmem>>, %arg4: memref<1x2x128xf32, #tpu.memory_space<vmem>>, %arg5: memref<18x24x128xf32, #tpu.memory_space<vmem>>) attributes {dimension_semantics = [#tpu.dimension_semantics<parallel>], iteration_bounds = array<i64: 2>, scalar_prefetch = 0 : i64, scratch_operands = 1 : i64, tpu.core_type = #tpu.core_type<tc>, window_params = [{transform_indices = @transform_0, window_bounds = array<i64: 1, 16, 16, 4>}, {pipeline_mode = #tpu.pipeline_mode<synchronous>, transform_indices = @transform_1, window_bounds = array<i64: 9, 128, 128>}, {transform_indices = @transform_2, window_bounds = array<i64: 1, 16, 16, 128>}, {transform_indices = @transform_3, window_bounds = array<i64: 1, 2, 128>}]} {
    %c0 = arith.constant 0 : index
    %c0_0 = arith.constant 0 : index
    %c0_1 = arith.constant 0 : index
    %c0_2 = arith.constant 0 : index
    %0 = vector.load %arg1[%c0, %c0_0, %c0_1, %c0_2] : memref<1x16x16x4xf32, #tpu.memory_space<vmem>>, vector<1x16x16x4xf32>
    %1 = vector.shape_cast %0 : vector<1x16x16x4xf32> to vector<16x16x4xf32>
    %cst = arith.constant 0.000000e+00 : f32
    %2 = vector.broadcast %cst : f32 to vector<18x24x128xf32>
    %c0_3 = arith.constant 0 : index
    %c0_4 = arith.constant 0 : index
    %c0_5 = arith.constant 0 : index
    %3 = vector.load %arg5[%c0_3, %c0_4, %c0_5] : memref<18x24x128xf32, #tpu.memory_space<vmem>>, vector<18x24x128xf32>
    tpu.vector_store %arg5[%c0_3, %c0_4, %c0_5], %2 {strides = array<i32>} : memref<18x24x128xf32, #tpu.memory_space<vmem>>, vector<18x24x128xf32>,
    %c1 = arith.constant 1 : index
    %c1_6 = arith.constant 1 : index
    %c0_7 = arith.constant 0 : index
    %4 = vector.load %arg5[%c1, %c1_6, %c0_7] : memref<18x24x128xf32, #tpu.memory_space<vmem>>, vector<16x16x4xf32>
    tpu.vector_store %arg5[%c1, %c1_6, %c0_7], %1 {strides = array<i32>} : memref<18x24x128xf32, #tpu.memory_space<vmem>>, vector<16x16x4xf32>,
    %cst_8 = arith.constant 0.000000e+00 : f32
    %5 = vector.broadcast %cst_8 : f32 to vector<256x128xf32>
    %c0_9 = arith.constant 0 : index
    %c0_10 = arith.constant 0 : index
    %c0_11 = arith.constant 0 : index
    %6 = vector.load %arg5[%c0_9, %c0_10, %c0_11] : memref<18x24x128xf32, #tpu.memory_space<vmem>>, vector<16x16x128xf32>
    %7 = vector.shape_cast %6 : vector<16x16x128xf32> to vector<256x128xf32>
    %c0_12 = arith.constant 0 : index
    %c0_13 = arith.constant 0 : index
    %c0_14 = arith.constant 0 : index
    %8 = vector.load %arg2[%c0_12, %c0_13, %c0_14] : memref<9x128x128xf32, #tpu.memory_space<vmem>>, vector<1x128x128xf32>
    %9 = vector.shape_cast %8 : vector<1x128x128xf32> to vector<128x128xf32>
    %cst_15 = arith.constant dense<0.000000e+00> : vector<256x128xf32>
    %10 = tpu.matmul %7, %9, %cst_15 {dimension_numbers = #tpu.dot_dimension_numbers<[1], [0], [0], [1], [0, 0, 1, 1], [], []>} : vector<256x128xf32>, vector<128x128xf32>, vector<256x128xf32> -> vector<256x128xf32>
    %11 = arith.addf %5, %10 : vector<256x128xf32>
    %c0_16 = arith.constant 0 : index
    %c1_17 = arith.constant 1 : index
    %c0_18 = arith.constant 0 : index
    %12 = vector.load %arg5[%c0_16, %c1_17, %c0_18] : memref<18x24x128xf32, #tpu.memory_space<vmem>>, vector<16x16x128xf32>
    %13 = vector.shape_cast %12 : vector<16x16x128xf32> to vector<256x128xf32>
    %c1_19 = arith.constant 1 : index
    %c0_20 = arith.constant 0 : index
    %c0_21 = arith.constant 0 : index
    %14 = vector.load %arg2[%c1_19, %c0_20, %c0_21] : memref<9x128x128xf32, #tpu.memory_space<vmem>>, vector<1x128x128xf32>
    %15 = vector.shape_cast %14 : vector<1x128x128xf32> to vector<128x128xf32>
    %cst_22 = arith.constant dense<0.000000e+00> : vector<256x128xf32>
    %16 = tpu.matmul %13, %15, %cst_22 {dimension_numbers = #tpu.dot_dimension_numbers<[1], [0], [0], [1], [0, 0, 1, 1], [], []>} : vector<256x128xf32>, vector<128x128xf32>, vector<256x128xf32> -> vector<256x128xf32>
    %17 = arith.addf %11, %16 : vector<256x128xf32>
    %c0_23 = arith.constant 0 : index
    %c2 = arith.constant 2 : index
    %c0_24 = arith.constant 0 : index
    %18 = vector.load %arg5[%c0_23, %c2, %c0_24] : memref<18x24x128xf32, #tpu.memory_space<vmem>>, vector<16x16x128xf32>
    %19 = vector.shape_cast %18 : vector<16x16x128xf32> to vector<256x128xf32>
    %c2_25 = arith.constant 2 : index
    %c0_26 = arith.constant 0 : index
    %c0_27 = arith.constant 0 : index
    %20 = vector.load %arg2[%c2_25, %c0_26, %c0_27] : memref<9x128x128xf32, #tpu.memory_space<vmem>>, vector<1x128x128xf32>
    %21 = vector.shape_cast %20 : vector<1x128x128xf32> to vector<128x128xf32>
    %cst_28 = arith.constant dense<0.000000e+00> : vector<256x128xf32>
    %22 = tpu.matmul %19, %21, %cst_28 {dimension_numbers = #tpu.dot_dimension_numbers<[1], [0], [0], [1], [0, 0, 1, 1], [], []>} : vector<256x128xf32>, vector<128x128xf32>, vector<256x128xf32> -> vector<256x128xf32>
    %23 = arith.addf %17, %22 : vector<256x128xf32>
    %c1_29 = arith.constant 1 : index
    %c0_30 = arith.constant 0 : index
    %c0_31 = arith.constant 0 : index
    %24 = vector.load %arg5[%c1_29, %c0_30, %c0_31] : memref<18x24x128xf32, #tpu.memory_space<vmem>>, vector<16x16x128xf32>
    %25 = vector.shape_cast %24 : vector<16x16x128xf32> to vector<256x128xf32>
    %c3 = arith.constant 3 : index
    %c0_32 = arith.constant 0 : index
    %c0_33 = arith.constant 0 : index
    %26 = vector.load %arg2[%c3, %c0_32, %c0_33] : memref<9x128x128xf32, #tpu.memory_space<vmem>>, vector<1x128x128xf32>
    %27 = vector.shape_cast %26 : vector<1x128x128xf32> to vector<128x128xf32>
    %cst_34 = arith.constant dense<0.000000e+00> : vector<256x128xf32>
    %28 = tpu.matmul %25, %27, %cst_34 {dimension_numbers = #tpu.dot_dimension_numbers<[1], [0], [0], [1], [0, 0, 1, 1], [], []>} : vector<256x128xf32>, vector<128x128xf32>, vector<256x128xf32> -> vector<256x128xf32>
    %29 = arith.addf %23, %28 : vector<256x128xf32>
    %c1_35 = arith.constant 1 : index
    %c1_36 = arith.constant 1 : index
    %c0_37 = arith.constant 0 : index
    %30 = vector.load %arg5[%c1_35, %c1_36, %c0_37] : memref<18x24x128xf32, #tpu.memory_space<vmem>>, vector<16x16x128xf32>
    %31 = vector.shape_cast %30 : vector<16x16x128xf32> to vector<256x128xf32>
    %c4 = arith.constant 4 : index
    %c0_38 = arith.constant 0 : index
    %c0_39 = arith.constant 0 : index
    %32 = vector.load %arg2[%c4, %c0_38, %c0_39] : memref<9x128x128xf32, #tpu.memory_space<vmem>>, vector<1x128x128xf32>
    %33 = vector.shape_cast %32 : vector<1x128x128xf32> to vector<128x128xf32>
    %cst_40 = arith.constant dense<0.000000e+00> : vector<256x128xf32>
    %34 = tpu.matmul %31, %33, %cst_40 {dimension_numbers = #tpu.dot_dimension_numbers<[1], [0], [0], [1], [0, 0, 1, 1], [], []>} : vector<256x128xf32>, vector<128x128xf32>, vector<256x128xf32> -> vector<256x128xf32>
    %35 = arith.addf %29, %34 : vector<256x128xf32>
    %c1_41 = arith.constant 1 : index
    %c2_42 = arith.constant 2 : index
    %c0_43 = arith.constant 0 : index
    %36 = vector.load %arg5[%c1_41, %c2_42, %c0_43] : memref<18x24x128xf32, #tpu.memory_space<vmem>>, vector<16x16x128xf32>
    %37 = vector.shape_cast %36 : vector<16x16x128xf32> to vector<256x128xf32>
    %c5 = arith.constant 5 : index
    %c0_44 = arith.constant 0 : index
    %c0_45 = arith.constant 0 : index
    %38 = vector.load %arg2[%c5, %c0_44, %c0_45] : memref<9x128x128xf32, #tpu.memory_space<vmem>>, vector<1x128x128xf32>
    %39 = vector.shape_cast %38 : vector<1x128x128xf32> to vector<128x128xf32>
    %cst_46 = arith.constant dense<0.000000e+00> : vector<256x128xf32>
    %40 = tpu.matmul %37, %39, %cst_46 {dimension_numbers = #tpu.dot_dimension_numbers<[1], [0], [0], [1], [0, 0, 1, 1], [], []>} : vector<256x128xf32>, vector<128x128xf32>, vector<256x128xf32> -> vector<256x128xf32>
    %41 = arith.addf %35, %40 : vector<256x128xf32>
    %c2_47 = arith.constant 2 : index
    %c0_48 = arith.constant 0 : index
    %c0_49 = arith.constant 0 : index
    %42 = vector.load %arg5[%c2_47, %c0_48, %c0_49] : memref<18x24x128xf32, #tpu.memory_space<vmem>>, vector<16x16x128xf32>
    %43 = vector.shape_cast %42 : vector<16x16x128xf32> to vector<256x128xf32>
    %c6 = arith.constant 6 : index
    %c0_50 = arith.constant 0 : index
    %c0_51 = arith.constant 0 : index
    %44 = vector.load %arg2[%c6, %c0_50, %c0_51] : memref<9x128x128xf32, #tpu.memory_space<vmem>>, vector<1x128x128xf32>
    %45 = vector.shape_cast %44 : vector<1x128x128xf32> to vector<128x128xf32>
    %cst_52 = arith.constant dense<0.000000e+00> : vector<256x128xf32>
    %46 = tpu.matmul %43, %45, %cst_52 {dimension_numbers = #tpu.dot_dimension_numbers<[1], [0], [0], [1], [0, 0, 1, 1], [], []>} : vector<256x128xf32>, vector<128x128xf32>, vector<256x128xf32> -> vector<256x128xf32>
    %47 = arith.addf %41, %46 : vector<256x128xf32>
    %c2_53 = arith.constant 2 : index
    %c1_54 = arith.constant 1 : index
    %c0_55 = arith.constant 0 : index
    %48 = vector.load %arg5[%c2_53, %c1_54, %c0_55] : memref<18x24x128xf32, #tpu.memory_space<vmem>>, vector<16x16x128xf32>
    %49 = vector.shape_cast %48 : vector<16x16x128xf32> to vector<256x128xf32>
    %c7 = arith.constant 7 : index
    %c0_56 = arith.constant 0 : index
    %c0_57 = arith.constant 0 : index
    %50 = vector.load %arg2[%c7, %c0_56, %c0_57] : memref<9x128x128xf32, #tpu.memory_space<vmem>>, vector<1x128x128xf32>
    %51 = vector.shape_cast %50 : vector<1x128x128xf32> to vector<128x128xf32>
    %cst_58 = arith.constant dense<0.000000e+00> : vector<256x128xf32>
    %52 = tpu.matmul %49, %51, %cst_58 {dimension_numbers = #tpu.dot_dimension_numbers<[1], [0], [0], [1], [0, 0, 1, 1], [], []>} : vector<256x128xf32>, vector<128x128xf32>, vector<256x128xf32> -> vector<256x128xf32>
    %53 = arith.addf %47, %52 : vector<256x128xf32>
    %c2_59 = arith.constant 2 : index
    %c2_60 = arith.constant 2 : index
    %c0_61 = arith.constant 0 : index
    %54 = vector.load %arg5[%c2_59, %c2_60, %c0_61] : memref<18x24x128xf32, #tpu.memory_space<vmem>>, vector<16x16x128xf32>
    %55 = vector.shape_cast %54 : vector<16x16x128xf32> to vector<256x128xf32>
    %c8 = arith.constant 8 : index
    %c0_62 = arith.constant 0 : index
    %c0_63 = arith.constant 0 : index
    %56 = vector.load %arg2[%c8, %c0_62, %c0_63] : memref<9x128x128xf32, #tpu.memory_space<vmem>>, vector<1x128x128xf32>
    %57 = vector.shape_cast %56 : vector<1x128x128xf32> to vector<128x128xf32>
    %cst_64 = arith.constant dense<0.000000e+00> : vector<256x128xf32>
    %58 = tpu.matmul %55, %57, %cst_64 {dimension_numbers = #tpu.dot_dimension_numbers<[1], [0], [0], [1], [0, 0, 1, 1], [], []>} : vector<256x128xf32>, vector<128x128xf32>, vector<256x128xf32> -> vector<256x128xf32>
    %59 = arith.addf %53, %58 : vector<256x128xf32>
    %cst_65 = arith.constant dense<0.000000e+00> : vector<128xf32>
    %60 = vector.multi_reduction <add>, %59, %cst_65 [0] : vector<256x128xf32> to vector<128xf32>
    %61 = vector.shape_cast %60 : vector<128xf32> to vector<1x128xf32>
    %62 = vector.shape_cast %61 : vector<1x128xf32> to vector<1x1x128xf32>
    %c0_66 = arith.constant 0 : index
    %c0_67 = arith.constant 0 : index
    %c0_68 = arith.constant 0 : index
    %63 = vector.load %arg4[%c0_66, %c0_67, %c0_68] : memref<1x2x128xf32, #tpu.memory_space<vmem>>, vector<1x1x128xf32>
    tpu.vector_store %arg4[%c0_66, %c0_67, %c0_68], %62 {strides = array<i32>} : memref<1x2x128xf32, #tpu.memory_space<vmem>>, vector<1x1x128xf32>,
    %64 = arith.mulf %59, %59 : vector<256x128xf32>
    %cst_69 = arith.constant dense<0.000000e+00> : vector<128xf32>
    %65 = vector.multi_reduction <add>, %64, %cst_69 [0] : vector<256x128xf32> to vector<128xf32>
    %66 = vector.shape_cast %65 : vector<128xf32> to vector<1x128xf32>
    %67 = vector.shape_cast %66 : vector<1x128xf32> to vector<1x1x128xf32>
    %c0_70 = arith.constant 0 : index
    %c1_71 = arith.constant 1 : index
    %c0_72 = arith.constant 0 : index
    %68 = vector.load %arg4[%c0_70, %c1_71, %c0_72] : memref<1x2x128xf32, #tpu.memory_space<vmem>>, vector<1x1x128xf32>
    tpu.vector_store %arg4[%c0_70, %c1_71, %c0_72], %67 {strides = array<i32>} : memref<1x2x128xf32, #tpu.memory_space<vmem>>, vector<1x1x128xf32>,
    %69 = vector.shape_cast %59 : vector<256x128xf32> to vector<1x16x16x128xf32>
    %c0_73 = arith.constant 0 : index
    %c0_74 = arith.constant 0 : index
    %c0_75 = arith.constant 0 : index
    %c0_76 = arith.constant 0 : index
    %70 = vector.load %arg3[%c0_73, %c0_74, %c0_75, %c0_76] : memref<1x16x16x128xf32, #tpu.memory_space<vmem>>, vector<1x16x16x128xf32>
    tpu.vector_store %arg3[%c0_73, %c0_74, %c0_75, %c0_76], %69 {strides = array<i32>} : memref<1x16x16x128xf32, #tpu.memory_space<vmem>>, vector<1x16x16x128xf32>,
    return
  }
  func.func @transform_0(%arg0: i32) -> (i32, i32, i32, i32) {
    %c0_i32 = arith.constant 0 : i32
    %c0_i32_0 = arith.constant 0 : i32
    %c0_i32_1 = arith.constant 0 : i32
    %c0_i32_2 = arith.constant 0 : i32
    return %arg0, %c0_i32, %c0_i32_0, %c0_i32_1 : i32, i32, i32, i32
  }
  func.func @transform_1(%arg0: i32) -> (i32, i32, i32) {
    %c0_i32 = arith.constant 0 : i32
    %c0_i32_0 = arith.constant 0 : i32
    %c0_i32_1 = arith.constant 0 : i32
    %c0_i32_2 = arith.constant 0 : i32
    return %c0_i32, %c0_i32_0, %c0_i32_1 : i32, i32, i32
  }
  func.func @transform_2(%arg0: i32) -> (i32, i32, i32, i32) {
    %c0_i32 = arith.constant 0 : i32
    %c0_i32_0 = arith.constant 0 : i32
    %c0_i32_1 = arith.constant 0 : i32
    %c0_i32_2 = arith.constant 0 : i32
    return %arg0, %c0_i32, %c0_i32_0, %c0_i32_1 : i32, i32, i32, i32
  }
  func.func @transform_3(%arg0: i32) -> (i32, i32, i32) {
    %c0_i32 = arith.constant 0 : i32
    %c0_i32_0 = arith.constant 0 : i32
    %c0_i32_1 = arith.constant 0 : i32
    return %arg0, %c0_i32, %c0_i32_0 : i32, i32, i32
  }
}

module attributes {stable_mosaic.version = 11 : i64} {
  func.func @bn_relu_add_kernel(%arg0: i32, %arg1: memref<1x16x16x128xf32, #tpu.memory_space<vmem>>, %arg2: memref<2x128xf32, #tpu.memory_space<vmem>>, %arg3: memref<1x16x16x4xf32, #tpu.memory_space<vmem>>, %arg4: memref<1x16x16x4xf32, #tpu.memory_space<vmem>>) attributes {dimension_semantics = [#tpu.dimension_semantics<parallel>], iteration_bounds = array<i64: 2>, scalar_prefetch = 0 : i64, scratch_operands = 0 : i64, tpu.core_type = #tpu.core_type<tc>, window_params = [{transform_indices = @transform_0, window_bounds = array<i64: 1, 16, 16, 128>}, {pipeline_mode = #tpu.pipeline_mode<synchronous>, transform_indices = @transform_1, window_bounds = array<i64: 2, 128>}, {transform_indices = @transform_2, window_bounds = array<i64: 1, 16, 16, 4>}, {transform_indices = @transform_3, window_bounds = array<i64: 1, 16, 16, 4>}]} {
    %c0 = arith.constant 0 : index
    %c0_0 = arith.constant 0 : index
    %0 = vector.load %arg2[%c0, %c0_0] : memref<2x128xf32, #tpu.memory_space<vmem>>, vector<2x128xf32>
    %1 = vector.extract_strided_slice %0 {offsets = [0, 0], sizes = [1, 4], strides = [1, 1]} : vector<2x128xf32> to vector<1x4xf32>
    %2 = vector.shape_cast %1 : vector<1x4xf32> to vector<1x1x1x4xf32>
    %3 = vector.extract_strided_slice %0 {offsets = [1, 0], sizes = [1, 4], strides = [1, 1]} : vector<2x128xf32> to vector<1x4xf32>
    %4 = vector.shape_cast %3 : vector<1x4xf32> to vector<1x1x1x4xf32>
    %c0_1 = arith.constant 0 : index
    %c0_2 = arith.constant 0 : index
    %c0_3 = arith.constant 0 : index
    %c0_4 = arith.constant 0 : index
    %5 = vector.load %arg1[%c0_1, %c0_2, %c0_3, %c0_4] : memref<1x16x16x128xf32, #tpu.memory_space<vmem>>, vector<1x16x16x128xf32>
    %6 = vector.extract_strided_slice %5 {offsets = [0, 0, 0, 0], sizes = [1, 16, 16, 4], strides = [1, 1, 1, 1]} : vector<1x16x16x128xf32> to vector<1x16x16x4xf32>
    %7 = vector.broadcast %2 : vector<1x1x1x4xf32> to vector<1x16x16x4xf32>
    %8 = arith.mulf %6, %7 : vector<1x16x16x4xf32>
    %9 = vector.broadcast %4 : vector<1x1x1x4xf32> to vector<1x16x16x4xf32>
    %10 = arith.addf %8, %9 : vector<1x16x16x4xf32>
    %cst = arith.constant 0.000000e+00 : f32
    %11 = vector.broadcast %cst : f32 to vector<1x16x16x4xf32>
    %12 = arith.maximumf %10, %11 : vector<1x16x16x4xf32>
    %c0_5 = arith.constant 0 : index
    %c0_6 = arith.constant 0 : index
    %c0_7 = arith.constant 0 : index
    %c0_8 = arith.constant 0 : index
    %13 = vector.load %arg3[%c0_5, %c0_6, %c0_7, %c0_8] : memref<1x16x16x4xf32, #tpu.memory_space<vmem>>, vector<1x16x16x4xf32>
    %14 = arith.addf %12, %13 : vector<1x16x16x4xf32>
    %c0_9 = arith.constant 0 : index
    %c0_10 = arith.constant 0 : index
    %c0_11 = arith.constant 0 : index
    %c0_12 = arith.constant 0 : index
    %15 = vector.load %arg4[%c0_9, %c0_10, %c0_11, %c0_12] : memref<1x16x16x4xf32, #tpu.memory_space<vmem>>, vector<1x16x16x4xf32>
    tpu.vector_store %arg4[%c0_9, %c0_10, %c0_11, %c0_12], %14 {strides = array<i32>} : memref<1x16x16x4xf32, #tpu.memory_space<vmem>>, vector<1x16x16x4xf32>,
    return
  }
  func.func @transform_0(%arg0: i32) -> (i32, i32, i32, i32) {
    %c0_i32 = arith.constant 0 : i32
    %c0_i32_0 = arith.constant 0 : i32
    %c0_i32_1 = arith.constant 0 : i32
    %c0_i32_2 = arith.constant 0 : i32
    return %arg0, %c0_i32, %c0_i32_0, %c0_i32_1 : i32, i32, i32, i32
  }
  func.func @transform_1(%arg0: i32) -> (i32, i32) {
    %c0_i32 = arith.constant 0 : i32
    %c0_i32_0 = arith.constant 0 : i32
    %c0_i32_1 = arith.constant 0 : i32
    return %c0_i32, %c0_i32_0 : i32, i32
  }
  func.func @transform_2(%arg0: i32) -> (i32, i32, i32, i32) {
    %c0_i32 = arith.constant 0 : i32
    %c0_i32_0 = arith.constant 0 : i32
    %c0_i32_1 = arith.constant 0 : i32
    %c0_i32_2 = arith.constant 0 : i32
    return %arg0, %c0_i32, %c0_i32_0, %c0_i32_1 : i32, i32, i32, i32
  }
  func.func @transform_3(%arg0: i32) -> (i32, i32, i32, i32) {
    %c0_i32 = arith.constant 0 : i32
    %c0_i32_0 = arith.constant 0 : i32
    %c0_i32_1 = arith.constant 0 : i32
    %c0_i32_2 = arith.constant 0 : i32
    return %arg0, %c0_i32, %c0_i32_0, %c0_i32_1 : i32, i32, i32, i32
  }
}

module attributes {stable_mosaic.version = 11 : i64} {
  func.func @conv2_kernel(%arg0: i32, %arg1: memref<1x16x16x128xf32, #tpu.memory_space<vmem>>, %arg2: memref<2x128xf32, #tpu.memory_space<vmem>>, %arg3: memref<9x128x128xf32, #tpu.memory_space<vmem>>, %arg4: memref<1x16x16x128xf32, #tpu.memory_space<vmem>>, %arg5: memref<1x2x128xf32, #tpu.memory_space<vmem>>, %arg6: memref<18x24x128xf32, #tpu.memory_space<vmem>>) attributes {dimension_semantics = [#tpu.dimension_semantics<parallel>], iteration_bounds = array<i64: 2>, scalar_prefetch = 0 : i64, scratch_operands = 1 : i64, tpu.core_type = #tpu.core_type<tc>, window_params = [{transform_indices = @transform_0, window_bounds = array<i64: 1, 16, 16, 128>}, {pipeline_mode = #tpu.pipeline_mode<synchronous>, transform_indices = @transform_1, window_bounds = array<i64: 2, 128>}, {pipeline_mode = #tpu.pipeline_mode<synchronous>, transform_indices = @transform_2, window_bounds = array<i64: 9, 128, 128>}, {transform_indices = @transform_3, window_bounds = array<i64: 1, 16, 16, 128>}, {transform_indices = @transform_4, window_bounds = array<i64: 1, 2, 128>}]} {
    %c0 = arith.constant 0 : index
    %c0_0 = arith.constant 0 : index
    %0 = vector.load %arg2[%c0, %c0_0] : memref<2x128xf32, #tpu.memory_space<vmem>>, vector<2x128xf32>
    %c0_1 = arith.constant 0 : index
    %c0_2 = arith.constant 0 : index
    %c0_3 = arith.constant 0 : index
    %c0_4 = arith.constant 0 : index
    %1 = vector.load %arg1[%c0_1, %c0_2, %c0_3, %c0_4] : memref<1x16x16x128xf32, #tpu.memory_space<vmem>>, vector<1x16x16x128xf32>
    %2 = vector.shape_cast %1 : vector<1x16x16x128xf32> to vector<16x16x128xf32>
    %3 = vector.extract_strided_slice %0 {offsets = [0, 0], sizes = [1, 128], strides = [1, 1]} : vector<2x128xf32> to vector<1x128xf32>
    %4 = vector.shape_cast %3 : vector<1x128xf32> to vector<1x1x128xf32>
    %5 = vector.broadcast %4 : vector<1x1x128xf32> to vector<16x16x128xf32>
    %6 = arith.mulf %2, %5 : vector<16x16x128xf32>
    %7 = vector.extract_strided_slice %0 {offsets = [1, 0], sizes = [1, 128], strides = [1, 1]} : vector<2x128xf32> to vector<1x128xf32>
    %8 = vector.shape_cast %7 : vector<1x128xf32> to vector<1x1x128xf32>
    %9 = vector.broadcast %8 : vector<1x1x128xf32> to vector<16x16x128xf32>
    %10 = arith.addf %6, %9 : vector<16x16x128xf32>
    %cst = arith.constant 0.000000e+00 : f32
    %11 = vector.broadcast %cst : f32 to vector<16x16x128xf32>
    %12 = arith.maximumf %10, %11 : vector<16x16x128xf32>
    %cst_5 = arith.constant 0.000000e+00 : f32
    %13 = vector.broadcast %cst_5 : f32 to vector<1x24x128xf32>
    %c0_6 = arith.constant 0 : index
    %c0_7 = arith.constant 0 : index
    %c0_8 = arith.constant 0 : index
    %14 = vector.load %arg6[%c0_6, %c0_7, %c0_8] : memref<18x24x128xf32, #tpu.memory_space<vmem>>, vector<1x24x128xf32>
    tpu.vector_store %arg6[%c0_6, %c0_7, %c0_8], %13 {strides = array<i32>} : memref<18x24x128xf32, #tpu.memory_space<vmem>>, vector<1x24x128xf32>,
    %cst_9 = arith.constant 0.000000e+00 : f32
    %15 = vector.broadcast %cst_9 : f32 to vector<1x24x128xf32>
    %c17 = arith.constant 17 : index
    %c0_10 = arith.constant 0 : index
    %c0_11 = arith.constant 0 : index
    %16 = vector.load %arg6[%c17, %c0_10, %c0_11] : memref<18x24x128xf32, #tpu.memory_space<vmem>>, vector<1x24x128xf32>
    tpu.vector_store %arg6[%c17, %c0_10, %c0_11], %15 {strides = array<i32>} : memref<18x24x128xf32, #tpu.memory_space<vmem>>, vector<1x24x128xf32>,
    %cst_12 = arith.constant 0.000000e+00 : f32
    %17 = vector.broadcast %cst_12 : f32 to vector<18x1x128xf32>
    %c0_13 = arith.constant 0 : index
    %c0_14 = arith.constant 0 : index
    %c0_15 = arith.constant 0 : index
    %18 = vector.load %arg6[%c0_13, %c0_14, %c0_15] : memref<18x24x128xf32, #tpu.memory_space<vmem>>, vector<18x1x128xf32>
    tpu.vector_store %arg6[%c0_13, %c0_14, %c0_15], %17 {strides = array<i32>} : memref<18x24x128xf32, #tpu.memory_space<vmem>>, vector<18x1x128xf32>,
    %cst_16 = arith.constant 0.000000e+00 : f32
    %19 = vector.broadcast %cst_16 : f32 to vector<18x1x128xf32>
    %c0_17 = arith.constant 0 : index
    %c17_18 = arith.constant 17 : index
    %c0_19 = arith.constant 0 : index
    %20 = vector.load %arg6[%c0_17, %c17_18, %c0_19] : memref<18x24x128xf32, #tpu.memory_space<vmem>>, vector<18x1x128xf32>
    tpu.vector_store %arg6[%c0_17, %c17_18, %c0_19], %19 {strides = array<i32>} : memref<18x24x128xf32, #tpu.memory_space<vmem>>, vector<18x1x128xf32>,
    %c1 = arith.constant 1 : index
    %c1_20 = arith.constant 1 : index
    %c0_21 = arith.constant 0 : index
    %21 = vector.load %arg6[%c1, %c1_20, %c0_21] : memref<18x24x128xf32, #tpu.memory_space<vmem>>, vector<16x16x128xf32>
    tpu.vector_store %arg6[%c1, %c1_20, %c0_21], %12 {strides = array<i32>} : memref<18x24x128xf32, #tpu.memory_space<vmem>>, vector<16x16x128xf32>,
    %cst_22 = arith.constant 0.000000e+00 : f32
    %22 = vector.broadcast %cst_22 : f32 to vector<256x128xf32>
    %c0_23 = arith.constant 0 : index
    %c0_24 = arith.constant 0 : index
    %c0_25 = arith.constant 0 : index
    %23 = vector.load %arg6[%c0_23, %c0_24, %c0_25] : memref<18x24x128xf32, #tpu.memory_space<vmem>>, vector<16x16x128xf32>
    %24 = vector.shape_cast %23 : vector<16x16x128xf32> to vector<256x128xf32>
    %c0_26 = arith.constant 0 : index
    %c0_27 = arith.constant 0 : index
    %c0_28 = arith.constant 0 : index
    %25 = vector.load %arg3[%c0_26, %c0_27, %c0_28] : memref<9x128x128xf32, #tpu.memory_space<vmem>>, vector<1x128x128xf32>
    %26 = vector.shape_cast %25 : vector<1x128x128xf32> to vector<128x128xf32>
    %cst_29 = arith.constant dense<0.000000e+00> : vector<256x128xf32>
    %27 = tpu.matmul %24, %26, %cst_29 {dimension_numbers = #tpu.dot_dimension_numbers<[1], [0], [0], [1], [0, 0, 1, 1], [], []>} : vector<256x128xf32>, vector<128x128xf32>, vector<256x128xf32> -> vector<256x128xf32>
    %28 = arith.addf %22, %27 : vector<256x128xf32>
    %c0_30 = arith.constant 0 : index
    %c1_31 = arith.constant 1 : index
    %c0_32 = arith.constant 0 : index
    %29 = vector.load %arg6[%c0_30, %c1_31, %c0_32] : memref<18x24x128xf32, #tpu.memory_space<vmem>>, vector<16x16x128xf32>
    %30 = vector.shape_cast %29 : vector<16x16x128xf32> to vector<256x128xf32>
    %c1_33 = arith.constant 1 : index
    %c0_34 = arith.constant 0 : index
    %c0_35 = arith.constant 0 : index
    %31 = vector.load %arg3[%c1_33, %c0_34, %c0_35] : memref<9x128x128xf32, #tpu.memory_space<vmem>>, vector<1x128x128xf32>
    %32 = vector.shape_cast %31 : vector<1x128x128xf32> to vector<128x128xf32>
    %cst_36 = arith.constant dense<0.000000e+00> : vector<256x128xf32>
    %33 = tpu.matmul %30, %32, %cst_36 {dimension_numbers = #tpu.dot_dimension_numbers<[1], [0], [0], [1], [0, 0, 1, 1], [], []>} : vector<256x128xf32>, vector<128x128xf32>, vector<256x128xf32> -> vector<256x128xf32>
    %34 = arith.addf %28, %33 : vector<256x128xf32>
    %c0_37 = arith.constant 0 : index
    %c2 = arith.constant 2 : index
    %c0_38 = arith.constant 0 : index
    %35 = vector.load %arg6[%c0_37, %c2, %c0_38] : memref<18x24x128xf32, #tpu.memory_space<vmem>>, vector<16x16x128xf32>
    %36 = vector.shape_cast %35 : vector<16x16x128xf32> to vector<256x128xf32>
    %c2_39 = arith.constant 2 : index
    %c0_40 = arith.constant 0 : index
    %c0_41 = arith.constant 0 : index
    %37 = vector.load %arg3[%c2_39, %c0_40, %c0_41] : memref<9x128x128xf32, #tpu.memory_space<vmem>>, vector<1x128x128xf32>
    %38 = vector.shape_cast %37 : vector<1x128x128xf32> to vector<128x128xf32>
    %cst_42 = arith.constant dense<0.000000e+00> : vector<256x128xf32>
    %39 = tpu.matmul %36, %38, %cst_42 {dimension_numbers = #tpu.dot_dimension_numbers<[1], [0], [0], [1], [0, 0, 1, 1], [], []>} : vector<256x128xf32>, vector<128x128xf32>, vector<256x128xf32> -> vector<256x128xf32>
    %40 = arith.addf %34, %39 : vector<256x128xf32>
    %c1_43 = arith.constant 1 : index
    %c0_44 = arith.constant 0 : index
    %c0_45 = arith.constant 0 : index
    %41 = vector.load %arg6[%c1_43, %c0_44, %c0_45] : memref<18x24x128xf32, #tpu.memory_space<vmem>>, vector<16x16x128xf32>
    %42 = vector.shape_cast %41 : vector<16x16x128xf32> to vector<256x128xf32>
    %c3 = arith.constant 3 : index
    %c0_46 = arith.constant 0 : index
    %c0_47 = arith.constant 0 : index
    %43 = vector.load %arg3[%c3, %c0_46, %c0_47] : memref<9x128x128xf32, #tpu.memory_space<vmem>>, vector<1x128x128xf32>
    %44 = vector.shape_cast %43 : vector<1x128x128xf32> to vector<128x128xf32>
    %cst_48 = arith.constant dense<0.000000e+00> : vector<256x128xf32>
    %45 = tpu.matmul %42, %44, %cst_48 {dimension_numbers = #tpu.dot_dimension_numbers<[1], [0], [0], [1], [0, 0, 1, 1], [], []>} : vector<256x128xf32>, vector<128x128xf32>, vector<256x128xf32> -> vector<256x128xf32>
    %46 = arith.addf %40, %45 : vector<256x128xf32>
    %c1_49 = arith.constant 1 : index
    %c1_50 = arith.constant 1 : index
    %c0_51 = arith.constant 0 : index
    %47 = vector.load %arg6[%c1_49, %c1_50, %c0_51] : memref<18x24x128xf32, #tpu.memory_space<vmem>>, vector<16x16x128xf32>
    %48 = vector.shape_cast %47 : vector<16x16x128xf32> to vector<256x128xf32>
    %c4 = arith.constant 4 : index
    %c0_52 = arith.constant 0 : index
    %c0_53 = arith.constant 0 : index
    %49 = vector.load %arg3[%c4, %c0_52, %c0_53] : memref<9x128x128xf32, #tpu.memory_space<vmem>>, vector<1x128x128xf32>
    %50 = vector.shape_cast %49 : vector<1x128x128xf32> to vector<128x128xf32>
    %cst_54 = arith.constant dense<0.000000e+00> : vector<256x128xf32>
    %51 = tpu.matmul %48, %50, %cst_54 {dimension_numbers = #tpu.dot_dimension_numbers<[1], [0], [0], [1], [0, 0, 1, 1], [], []>} : vector<256x128xf32>, vector<128x128xf32>, vector<256x128xf32> -> vector<256x128xf32>
    %52 = arith.addf %46, %51 : vector<256x128xf32>
    %c1_55 = arith.constant 1 : index
    %c2_56 = arith.constant 2 : index
    %c0_57 = arith.constant 0 : index
    %53 = vector.load %arg6[%c1_55, %c2_56, %c0_57] : memref<18x24x128xf32, #tpu.memory_space<vmem>>, vector<16x16x128xf32>
    %54 = vector.shape_cast %53 : vector<16x16x128xf32> to vector<256x128xf32>
    %c5 = arith.constant 5 : index
    %c0_58 = arith.constant 0 : index
    %c0_59 = arith.constant 0 : index
    %55 = vector.load %arg3[%c5, %c0_58, %c0_59] : memref<9x128x128xf32, #tpu.memory_space<vmem>>, vector<1x128x128xf32>
    %56 = vector.shape_cast %55 : vector<1x128x128xf32> to vector<128x128xf32>
    %cst_60 = arith.constant dense<0.000000e+00> : vector<256x128xf32>
    %57 = tpu.matmul %54, %56, %cst_60 {dimension_numbers = #tpu.dot_dimension_numbers<[1], [0], [0], [1], [0, 0, 1, 1], [], []>} : vector<256x128xf32>, vector<128x128xf32>, vector<256x128xf32> -> vector<256x128xf32>
    %58 = arith.addf %52, %57 : vector<256x128xf32>
    %c2_61 = arith.constant 2 : index
    %c0_62 = arith.constant 0 : index
    %c0_63 = arith.constant 0 : index
    %59 = vector.load %arg6[%c2_61, %c0_62, %c0_63] : memref<18x24x128xf32, #tpu.memory_space<vmem>>, vector<16x16x128xf32>
    %60 = vector.shape_cast %59 : vector<16x16x128xf32> to vector<256x128xf32>
    %c6 = arith.constant 6 : index
    %c0_64 = arith.constant 0 : index
    %c0_65 = arith.constant 0 : index
    %61 = vector.load %arg3[%c6, %c0_64, %c0_65] : memref<9x128x128xf32, #tpu.memory_space<vmem>>, vector<1x128x128xf32>
    %62 = vector.shape_cast %61 : vector<1x128x128xf32> to vector<128x128xf32>
    %cst_66 = arith.constant dense<0.000000e+00> : vector<256x128xf32>
    %63 = tpu.matmul %60, %62, %cst_66 {dimension_numbers = #tpu.dot_dimension_numbers<[1], [0], [0], [1], [0, 0, 1, 1], [], []>} : vector<256x128xf32>, vector<128x128xf32>, vector<256x128xf32> -> vector<256x128xf32>
    %64 = arith.addf %58, %63 : vector<256x128xf32>
    %c2_67 = arith.constant 2 : index
    %c1_68 = arith.constant 1 : index
    %c0_69 = arith.constant 0 : index
    %65 = vector.load %arg6[%c2_67, %c1_68, %c0_69] : memref<18x24x128xf32, #tpu.memory_space<vmem>>, vector<16x16x128xf32>
    %66 = vector.shape_cast %65 : vector<16x16x128xf32> to vector<256x128xf32>
    %c7 = arith.constant 7 : index
    %c0_70 = arith.constant 0 : index
    %c0_71 = arith.constant 0 : index
    %67 = vector.load %arg3[%c7, %c0_70, %c0_71] : memref<9x128x128xf32, #tpu.memory_space<vmem>>, vector<1x128x128xf32>
    %68 = vector.shape_cast %67 : vector<1x128x128xf32> to vector<128x128xf32>
    %cst_72 = arith.constant dense<0.000000e+00> : vector<256x128xf32>
    %69 = tpu.matmul %66, %68, %cst_72 {dimension_numbers = #tpu.dot_dimension_numbers<[1], [0], [0], [1], [0, 0, 1, 1], [], []>} : vector<256x128xf32>, vector<128x128xf32>, vector<256x128xf32> -> vector<256x128xf32>
    %70 = arith.addf %64, %69 : vector<256x128xf32>
    %c2_73 = arith.constant 2 : index
    %c2_74 = arith.constant 2 : index
    %c0_75 = arith.constant 0 : index
    %71 = vector.load %arg6[%c2_73, %c2_74, %c0_75] : memref<18x24x128xf32, #tpu.memory_space<vmem>>, vector<16x16x128xf32>
    %72 = vector.shape_cast %71 : vector<16x16x128xf32> to vector<256x128xf32>
    %c8 = arith.constant 8 : index
    %c0_76 = arith.constant 0 : index
    %c0_77 = arith.constant 0 : index
    %73 = vector.load %arg3[%c8, %c0_76, %c0_77] : memref<9x128x128xf32, #tpu.memory_space<vmem>>, vector<1x128x128xf32>
    %74 = vector.shape_cast %73 : vector<1x128x128xf32> to vector<128x128xf32>
    %cst_78 = arith.constant dense<0.000000e+00> : vector<256x128xf32>
    %75 = tpu.matmul %72, %74, %cst_78 {dimension_numbers = #tpu.dot_dimension_numbers<[1], [0], [0], [1], [0, 0, 1, 1], [], []>} : vector<256x128xf32>, vector<128x128xf32>, vector<256x128xf32> -> vector<256x128xf32>
    %76 = arith.addf %70, %75 : vector<256x128xf32>
    %cst_79 = arith.constant dense<0.000000e+00> : vector<128xf32>
    %77 = vector.multi_reduction <add>, %76, %cst_79 [0] : vector<256x128xf32> to vector<128xf32>
    %78 = vector.shape_cast %77 : vector<128xf32> to vector<1x128xf32>
    %79 = vector.shape_cast %78 : vector<1x128xf32> to vector<1x1x128xf32>
    %c0_80 = arith.constant 0 : index
    %c0_81 = arith.constant 0 : index
    %c0_82 = arith.constant 0 : index
    %80 = vector.load %arg5[%c0_80, %c0_81, %c0_82] : memref<1x2x128xf32, #tpu.memory_space<vmem>>, vector<1x1x128xf32>
    tpu.vector_store %arg5[%c0_80, %c0_81, %c0_82], %79 {strides = array<i32>} : memref<1x2x128xf32, #tpu.memory_space<vmem>>, vector<1x1x128xf32>,
    %81 = arith.mulf %76, %76 : vector<256x128xf32>
    %cst_83 = arith.constant dense<0.000000e+00> : vector<128xf32>
    %82 = vector.multi_reduction <add>, %81, %cst_83 [0] : vector<256x128xf32> to vector<128xf32>
    %83 = vector.shape_cast %82 : vector<128xf32> to vector<1x128xf32>
    %84 = vector.shape_cast %83 : vector<1x128xf32> to vector<1x1x128xf32>
    %c0_84 = arith.constant 0 : index
    %c1_85 = arith.constant 1 : index
    %c0_86 = arith.constant 0 : index
    %85 = vector.load %arg5[%c0_84, %c1_85, %c0_86] : memref<1x2x128xf32, #tpu.memory_space<vmem>>, vector<1x1x128xf32>
    tpu.vector_store %arg5[%c0_84, %c1_85, %c0_86], %84 {strides = array<i32>} : memref<1x2x128xf32, #tpu.memory_space<vmem>>, vector<1x1x128xf32>,
    %86 = vector.shape_cast %76 : vector<256x128xf32> to vector<1x16x16x128xf32>
    %c0_87 = arith.constant 0 : index
    %c0_88 = arith.constant 0 : index
    %c0_89 = arith.constant 0 : index
    %c0_90 = arith.constant 0 : index
    %87 = vector.load %arg4[%c0_87, %c0_88, %c0_89, %c0_90] : memref<1x16x16x128xf32, #tpu.memory_space<vmem>>, vector<1x16x16x128xf32>
    tpu.vector_store %arg4[%c0_87, %c0_88, %c0_89, %c0_90], %86 {strides = array<i32>} : memref<1x16x16x128xf32, #tpu.memory_space<vmem>>, vector<1x16x16x128xf32>,
    return
  }
  func.func @transform_0(%arg0: i32) -> (i32, i32, i32, i32) {
    %c0_i32 = arith.constant 0 : i32
    %c0_i32_0 = arith.constant 0 : i32
    %c0_i32_1 = arith.constant 0 : i32
    %c0_i32_2 = arith.constant 0 : i32
    return %arg0, %c0_i32, %c0_i32_0, %c0_i32_1 : i32, i32, i32, i32
  }
  func.func @transform_1(%arg0: i32) -> (i32, i32) {
    %c0_i32 = arith.constant 0 : i32
    %c0_i32_0 = arith.constant 0 : i32
    %c0_i32_1 = arith.constant 0 : i32
    return %c0_i32, %c0_i32_0 : i32, i32
  }
  func.func @transform_2(%arg0: i32) -> (i32, i32, i32) {
    %c0_i32 = arith.constant 0 : i32
    %c0_i32_0 = arith.constant 0 : i32
    %c0_i32_1 = arith.constant 0 : i32
    %c0_i32_2 = arith.constant 0 : i32
    return %c0_i32, %c0_i32_0, %c0_i32_1 : i32, i32, i32
  }
  func.func @transform_3(%arg0: i32) -> (i32, i32, i32, i32) {
    %c0_i32 = arith.constant 0 : i32
    %c0_i32_0 = arith.constant 0 : i32
    %c0_i32_1 = arith.constant 0 : i32
    %c0_i32_2 = arith.constant 0 : i32
    return %arg0, %c0_i32, %c0_i32_0, %c0_i32_1 : i32, i32, i32, i32
  }
  func.func @transform_4(%arg0: i32) -> (i32, i32, i32) {
    %c0_i32 = arith.constant 0 : i32
    %c0_i32_0 = arith.constant 0 : i32
    %c0_i32_1 = arith.constant 0 : i32
    return %arg0, %c0_i32, %c0_i32_0 : i32, i32, i32
  }
}

</mosaic_0001>

<llo_original>
// kernel: basic_block.5
$region0: #{basic_block.5}
  #allocation0 [shape = 'u32[]', space=smem, size = 0x4, offset = 0x4, fixed_abs, tag = 'smem constant byte address 0x4 - core index']
  #allocation1 [shape = 'u32[72,128]{1,0:T(1,128)}', space=vmem, size = 0x9000, scoped, tag = 'internal scratch']
  %s0 = inlined_call_operand.vmem [shape: f32[2,16,16,128], index: 0, kind: input, shape index: {}]
  %s1 = inlined_call_operand.vmem [shape: f32[2,128], index: 1, kind: input, shape index: {}]
  %s2 = inlined_call_operand.vmem [shape: f32[2,16,16,4], index: 2, kind: input, shape index: {}]
  %s3 = inlined_call_operand.vmem [shape: f32[2,16,16,4], index: 3, kind: output, shape index: {}]
  %s4 = sld [smem:[#allocation0]]
  $region45: #{basic_block.5} parent=0
    _
  %s6 = ssub.s32 1, %s4
  %s7 = scalar_select 0, %s6, %s4
  loop: start=0, step=1, limit=4
  $region2: #{basic_block.5} parent=0 // loop_pre_header
    _
  $region3: #{basic_block.5} parent=0 // loop_header
    %s9 = sphi 0, %s13
    %p10 = scmp.ge.s32.totalorder %s9, 4
    %s19 = sphi 0, %s21
    %s22 = sphi 0, %s19
    %s23 = sphi 0, %s22
    %s39 = sphi 0, %s23
    %s43 = sphi 0, %s43
    %s45 = sphi 0, %s43
    %s46 = sphi 0, %s45
    %s60 = sphi 0, %s46
    %s66 = sphi 0, %s68
    %s69 = sphi 0, %s66
    %s70 = sphi 0, %s69
    %s86 = sphi 0, %s70
    %s92 = sphi 0, %s94
    %s95 = sphi 0, %s92
    %s96 = sphi 0, %s95
    %s112 = sphi 0, %s96
  $region4: #{basic_block.5} parent=0 // loop_header_branch
    %12 = sbr.rel (%p10) target = $region8
  $region5: #{basic_block.5} parent=0 // loop_body
    %s14 = ssub.s32 %s9, 1
    %s15 = ssub.s32 %s9, 2
    %s16 = sadd.s32 %s9, 1
    %s17 = ssub.s32 %s9, %s16
    %p18 = scmp.eq.s32.totalorder %s17, 0
    %s20 = sadd.s32 %s19, 1
    %s21 = scalar_select %p18, %s19, %s20
    %p24 = pneg %p18
    %p25 = scmp.eq.s32.totalorder %s9, 1
    %p26 = por %p24, %p25
    %p27 = scmp.ne.s32.totalorder %s19, %s22
    %p28 = scmp.eq.s32.totalorder %s9, 0
    %p29 = por %p27, %p28
    %p30 = scmp.ne.s32.totalorder %s19, %s22
    %p31 = scmp.eq.s32.totalorder %s14, 1
    %p32 = por %p30, %p31
    %p33 = scmp.ne.s32.totalorder %s22, %s23
    %p34 = scmp.eq.s32.totalorder %s14, 0
    %p35 = por %p33, %p34
    %p36 = scmp.ne.s32.totalorder %s22, %s23
    %p37 = scmp.eq.s32.totalorder %s15, 1
    %p38 = por %p36, %p37
    %p40 = scmp.ne.s32.totalorder %s23, %s39
    %p41 = scmp.eq.s32.totalorder %s15, 0
    %p42 = por %p40, %p41
    %s44 = sadd.s32 %s43, 1
    %p47 = scmp.eq.s32.totalorder %s9, 1
    %p48 = scmp.ne.s32.totalorder %s43, %s45
    %p49 = scmp.eq.s32.totalorder %s9, 0
    %p50 = por %p48, %p49
    %p51 = scmp.ne.s32.totalorder %s43, %s45
    %p52 = scmp.eq.s32.totalorder %s14, 1
    %p53 = por %p51, %p52
    %p54 = scmp.ne.s32.totalorder %s45, %s46
    %p55 = scmp.eq.s32.totalorder %s14, 0
    %p56 = por %p54, %p55
    %p57 = scmp.ne.s32.totalorder %s45, %s46
    %p58 = scmp.eq.s32.totalorder %s15, 1
    %p59 = por %p57, %p58
    %p61 = scmp.ne.s32.totalorder %s46, %s60
    %p62 = scmp.eq.s32.totalorder %s15, 0
    %p63 = por %p61, %p62
    %s64 = ssub.s32 %s9, %s16
    %p65 = scmp.eq.s32.totalorder %s64, 0
    %s67 = sadd.s32 %s66, 1
    %s68 = scalar_select %p65, %s66, %s67
    %p71 = pneg %p65
    %p72 = scmp.eq.s32.totalorder %s9, 1
    %p73 = por %p71, %p72
    %p74 = scmp.ne.s32.totalorder %s66, %s69
    %p75 = scmp.eq.s32.totalorder %s9, 0
    %p76 = por %p74, %p75
    %p77 = scmp.ne.s32.totalorder %s66, %s69
    %p78 = scmp.eq.s32.totalorder %s14, 1
    %p79 = por %p77, %p78
    %p80 = scmp.ne.s32.totalorder %s69, %s70
    %p81 = scmp.eq.s32.totalorder %s14, 0
    %p82 = por %p80, %p81
    %p83 = scmp.ne.s32.totalorder %s69, %s70
    %p84 = scmp.eq.s32.totalorder %s15, 1
    %p85 = por %p83, %p84
    %p87 = scmp.ne.s32.totalorder %s70, %s86
    %p88 = scmp.eq.s32.totalorder %s15, 0
    %p89 = por %p87, %p88
    %s90 = ssub.s32 %s9, %s16
    %p91 = scmp.eq.s32.totalorder %s90, 0
    %s93 = sadd.s32 %s92, 1
    %s94 = scalar_select %p91, %s92, %s93
    %p97 = pneg %p91
    %p98 = scmp.eq.s32.totalorder %s9, 1
    %p99 = por %p97, %p98
    %p100 = scmp.ne.s32.totalorder %s92, %s95
    %p101 = scmp.eq.s32.totalorder %s9, 0
    %p102 = por %p100, %p101
    %p103 = scmp.ne.s32.totalorder %s92, %s95
    %p104 = scmp.eq.s32.totalorder %s14, 1
    %p105 = por %p103, %p104
    %p106 = scmp.ne.s32.totalorder %s95, %s96
    %p107 = scmp.eq.s32.totalorder %s14, 0
    %p108 = por %p106, %p107
    %p109 = scmp.ne.s32.totalorder %s95, %s96
    %p110 = scmp.eq.s32.totalorder %s15, 1
    %p111 = por %p109, %p110
    %p113 = scmp.ne.s32.totalorder %s96, %s112
    %p114 = scmp.eq.s32.totalorder %s15, 0
    %p115 = por %p113, %p114
    %p116 = scmp.le.s32.totalorder 1, %s9
    %p117 = scmp.lt.s32.totalorder %s9, 3
    %p118 = pnand %p116, %p117
    %p119 = pneg %p118
    // Predicated region
    $region9: #{basic_block.5} parent=5 // pred_check
      _
    $region10: #{basic_block.5} parent=5 // pred_check_branch
      %121 = sbr.rel (%p118) target = $region12
    $region11: #{basic_block.5} parent=5 // pred_region
      %s122 = ssub.s32 %s9, 1
      // Predicated region
      $region13: #{basic_block.5} parent=11 // pred_check
        %p123 = pneg %p56
      $region14: #{basic_block.5} parent=11 // pred_check_branch
        %125 = sbr.rel (%p123) target = $region16
      $region15: #{basic_block.5} parent=11 // pred_region
        _
      $region16: #{basic_block.5} parent=11 // pred_fallthru
        _
    $region12: #{basic_block.5} parent=5 // pred_fallthru
      _
    %p126 = scmp.lt.s32.totalorder %s9, 2
    // Predicated region
    $region17: #{basic_block.5} parent=5 // pred_check
      %p127 = pneg %p126
    $region18: #{basic_block.5} parent=5 // pred_check_branch
      %129 = sbr.rel (%p127) target = $region20
    $region19: #{basic_block.5} parent=5 // pred_region
      // Predicated region
      $region21: #{basic_block.5} parent=19 // pred_check
        %p130 = pneg %p29
      $region22: #{basic_block.5} parent=19 // pred_check_branch
        %132 = sbr.rel (%p130) target = $region24
      $region23: #{basic_block.5} parent=19 // pred_region
        %p133 = scmp.lt.s32.totalorder %s9, 1
        %s134 = scalar_select %p133, %s9, 1
        %s135 = smul.addr %s134, 32
        %s136 = smul.addr %s135, 8
        %s137 = scalar_lea.vmem %s0, %s136
      $region24: #{basic_block.5} parent=19 // pred_fallthru
        _
      // Predicated region
      $region25: #{basic_block.5} parent=19 // pred_check
        %p138 = pneg %p76
      $region26: #{basic_block.5} parent=19 // pred_check_branch
        %140 = sbr.rel (%p138) target = $region28
      $region27: #{basic_block.5} parent=19 // pred_region
        %p141 = scmp.lt.s32.totalorder %s9, 1
        %s142 = scalar_select %p141, %s9, 1
        %s143 = smul.addr %s142, 32
        %s144 = smul.addr %s143, 8
        %s145 = scalar_lea.vmem %s2, %s144
      $region28: #{basic_block.5} parent=19 // pred_fallthru
        _
    $region20: #{basic_block.5} parent=5 // pred_fallthru
      _
    %p146 = scmp.le.s32.totalorder 1, %s9
    %p147 = scmp.lt.s32.totalorder %s9, 3
    %p148 = pnand %p146, %p147
    %p149 = pneg %p148
    // Predicated region
    $region29: #{basic_block.5} parent=5 // pred_check
      _
    $region30: #{basic_block.5} parent=5 // pred_check_branch
      %151 = sbr.rel (%p148) target = $region32
    $region31: #{basic_block.5} parent=5 // pred_region
      %s152 = ssub.s32 %s9, 1
      %p153 = scmp.lt.s32.totalorder %s14, 1
      %s154 = scalar_select %p153, %s14, 1
      %s155 = smul.addr %s154, 32
      %s156 = smul.addr %s155, 8
      %s157 = scalar_lea.vmem %s0, %s156
      %p158 = pneg %p35
      %p159 = pneg %p32
      %p160 = pneg %p56
      %p161 = pneg %p53
      %p162 = scmp.lt.s32.totalorder %s14, 1
      %s163 = scalar_select %p162, %s14, 1
      %s164 = smul.addr %s163, 32
      %s165 = smul.addr %s164, 8
      %s166 = scalar_lea.vmem %s2, %s165
      %p167 = pneg %p82
      %p168 = pneg %p79
      %p169 = pneg %p108
      %p170 = pneg %p105
      %p171 = scmp.lt.s32.totalorder %s14, 1
      %s172 = scalar_select %p171, %s14, 1
      %s173 = smul.addr %s172, 32
      %s174 = smul.addr %s173, 8
      %s175 = scalar_lea.vmem %s3, %s174
      %p176 = scmp.lt.s32.totalorder %s14, 1
      %s177 = scalar_select %p176, %s14, 1
      %s178 = smul.addr %s177, 32
      %s179 = smul.addr %s178, 8
      %s180 = scalar_lea.vmem %s0, %s179
      %p181 = scmp.lt.s32.totalorder %s14, 1
      %s182 = scalar_select %p181, %s14, 1
      %s183 = smul.addr %s182, 32
      %s184 = smul.addr %s183, 8
      %s185 = scalar_lea.vmem %s2, %s184
      %p186 = scmp.lt.s32.totalorder %s14, 1
      %s187 = scalar_select %p186, %s14, 1
      %s188 = smul.addr %s187, 32
      %s189 = smul.addr %s188, 8
      %s190 = scalar_lea.vmem %s3, %s189
      %v191 = vld [vmem:[%s1] sm:$0x3]
      %v192 = vld [vmem:[%s180] sm:$0xff]
      %v193 = vld [vmem:[%s180 + $0x8] sm:$0xff]
      %v194 = vld [vmem:[%s180 + $0x10] sm:$0xff]
      %v195 = vld [vmem:[%s180 + $0x18] sm:$0xff]
      %v196 = vld [vmem:[%s180 + $0x20] sm:$0xff]
      %v197 = vld [vmem:[%s180 + $0x28] sm:$0xff]
      %v198 = vld [vmem:[%s180 + $0x30] sm:$0xff]
      %v199 = vld [vmem:[%s180 + $0x38] sm:$0xff]
      %v200 = vld [vmem:[%s180 + $0x40] sm:$0xff]
      %v201 = vld [vmem:[%s180 + $0x48] sm:$0xff]
      %v202 = vld [vmem:[%s180 + $0x50] sm:$0xff]
      %v203 = vld [vmem:[%s180 + $0x58] sm:$0xff]
      %v204 = vld [vmem:[%s180 + $0x60] sm:$0xff]
      %v205 = vld [vmem:[%s180 + $0x68] sm:$0xff]
      %v206 = vld [vmem:[%s180 + $0x70] sm:$0xff]
      %v207 = vld [vmem:[%s180 + $0x78] sm:$0xff]
      %v208 = vld [vmem:[%s180 + $0x80] sm:$0xff]
      %v209 = vld [vmem:[%s180 + $0x88] sm:$0xff]
      %v210 = vld [vmem:[%s180 + $0x90] sm:$0xff]
      %v211 = vld [vmem:[%s180 + $0x98] sm:$0xff]
      %v212 = vld [vmem:[%s180 + $0xa0] sm:$0xff]
      %v213 = vld [vmem:[%s180 + $0xa8] sm:$0xff]
      %v214 = vld [vmem:[%s180 + $0xb0] sm:$0xff]
      %v215 = vld [vmem:[%s180 + $0xb8] sm:$0xff]
      %v216 = vld [vmem:[%s180 + $0xc0] sm:$0xff]
      %v217 = vld [vmem:[%s180 + $0xc8] sm:$0xff]
      %v218 = vld [vmem:[%s180 + $0xd0] sm:$0xff]
      %v219 = vld [vmem:[%s180 + $0xd8] sm:$0xff]
      %v220 = vld [vmem:[%s180 + $0xe0] sm:$0xff]
      %v221 = vld [vmem:[%s180 + $0xe8] sm:$0xff]
      %v222 = vld [vmem:[%s180 + $0xf0] sm:$0xff]
      %v223 = vld [vmem:[%s180 + $0xf8] sm:$0xff]
      %v224 = vperm.slane %v191, 0
      %v225 = vmul.f32 %v192, %v224
      %v226 = vmul.f32 %v193, %v224
      %v227 = vmul.f32 %v194, %v224
      %v228 = vmul.f32 %v195, %v224
      %v229 = vmul.f32 %v196, %v224
      %v230 = vmul.f32 %v197, %v224
      %v231 = vmul.f32 %v198, %v224
      %v232 = vmul.f32 %v199, %v224
      %v233 = vmul.f32 %v200, %v224
      %v234 = vmul.f32 %v201, %v224
      %v235 = vmul.f32 %v202, %v224
      %v236 = vmul.f32 %v203, %v224
      %v237 = vmul.f32 %v204, %v224
      %v238 = vmul.f32 %v205, %v224
      %v239 = vmul.f32 %v206, %v224
      %v240 = vmul.f32 %v207, %v224
      %v241 = vmul.f32 %v208, %v224
      %v242 = vmul.f32 %v209, %v224
      %v243 = vmul.f32 %v210, %v224
      %v244 = vmul.f32 %v211, %v224
      %v245 = vmul.f32 %v212, %v224
      %v246 = vmul.f32 %v213, %v224
      %v247 = vmul.f32 %v214, %v224
      %v248 = vmul.f32 %v215, %v224
      %v249 = vmul.f32 %v216, %v224
      %v250 = vmul.f32 %v217, %v224
      %v251 = vmul.f32 %v218, %v224
      %v252 = vmul.f32 %v219, %v224
      %v253 = vmul.f32 %v220, %v224
      %v254 = vmul.f32 %v221, %v224
      %v255 = vmul.f32 %v222, %v224
      %v256 = vmul.f32 %v223, %v224
      %v257 = vperm.slane %v191, 1
      %v258 = vadd.f32 %v225, %v257
      %v259 = vadd.f32 %v226, %v257
      %v260 = vadd.f32 %v227, %v257
      %v261 = vadd.f32 %v228, %v257
      %v262 = vadd.f32 %v229, %v257
      %v263 = vadd.f32 %v230, %v257
      %v264 = vadd.f32 %v231, %v257
      %v265 = vadd.f32 %v232, %v257
      %v266 = vadd.f32 %v233, %v257
      %v267 = vadd.f32 %v234, %v257
      %v268 = vadd.f32 %v235, %v257
      %v269 = vadd.f32 %v236, %v257
      %v270 = vadd.f32 %v237, %v257
      %v271 = vadd.f32 %v238, %v257
      %v272 = vadd.f32 %v239, %v257
      %v273 = vadd.f32 %v240, %v257
      %v274 = vadd.f32 %v241, %v257
      %v275 = vadd.f32 %v242, %v257
      %v276 = vadd.f32 %v243, %v257
      %v277 = vadd.f32 %v244, %v257
      %v278 = vadd.f32 %v245, %v257
      %v279 = vadd.f32 %v246, %v257
      %v280 = vadd.f32 %v247, %v257
      %v281 = vadd.f32 %v248, %v257
      %v282 = vadd.f32 %v249, %v257
      %v283 = vadd.f32 %v250, %v257
      %v284 = vadd.f32 %v251, %v257
      %v285 = vadd.f32 %v252, %v257
      %v286 = vadd.f32 %v253, %v257
      %v287 = vadd.f32 %v254, %v257
      %v288 = vadd.f32 %v255, %v257
      %v289 = vadd.f32 %v256, %v257
      %v290 = vmax.f32 %v258, 0.0
      %v291 = vmax.f32 %v259, 0.0
      %v292 = vmax.f32 %v260, 0.0
      %v293 = vmax.f32 %v261, 0.0
      %v294 = vmax.f32 %v262, 0.0
      %v295 = vmax.f32 %v263, 0.0
      %v296 = vmax.f32 %v264, 0.0
      %v297 = vmax.f32 %v265, 0.0
      %v298 = vmax.f32 %v266, 0.0
      %v299 = vmax.f32 %v267, 0.0
      %v300 = vmax.f32 %v268, 0.0
      %v301 = vmax.f32 %v269, 0.0
      %v302 = vmax.f32 %v270, 0.0
      %v303 = vmax.f32 %v271, 0.0
      %v304 = vmax.f32 %v272, 0.0
      %v305 = vmax.f32 %v273, 0.0
      %v306 = vmax.f32 %v274, 0.0
      %v307 = vmax.f32 %v275, 0.0
      %v308 = vmax.f32 %v276, 0.0
      %v309 = vmax.f32 %v277, 0.0
      %v310 = vmax.f32 %v278, 0.0
      %v311 = vmax.f32 %v279, 0.0
      %v312 = vmax.f32 %v280, 0.0
      %v313 = vmax.f32 %v281, 0.0
      %v314 = vmax.f32 %v282, 0.0
      %v315 = vmax.f32 %v283, 0.0
      %v316 = vmax.f32 %v284, 0.0
      %v317 = vmax.f32 %v285, 0.0
      %v318 = vmax.f32 %v286, 0.0
      %v319 = vmax.f32 %v287, 0.0
      %v320 = vmax.f32 %v288, 0.0
      %v321 = vmax.f32 %v289, 0.0
      %v322 = vld [vmem:[%s185] sm:$0xff]
      %v323 = vld [vmem:[%s185 + $0x8] sm:$0xff]
      %v324 = vld [vmem:[%s185 + $0x10] sm:$0xff]
      %v325 = vld [vmem:[%s185 + $0x18] sm:$0xff]
      %v326 = vld [vmem:[%s185 + $0x20] sm:$0xff]
      %v327 = vld [vmem:[%s185 + $0x28] sm:$0xff]
      %v328 = vld [vmem:[%s185 + $0x30] sm:$0xff]
      %v329 = vld [vmem:[%s185 + $0x38] sm:$0xff]
      %v330 = vld [vmem:[%s185 + $0x40] sm:$0xff]
      %v331 = vld [vmem:[%s185 + $0x48] sm:$0xff]
      %v332 = vld [vmem:[%s185 + $0x50] sm:$0xff]
      %v333 = vld [vmem:[%s185 + $0x58] sm:$0xff]
      %v334 = vld [vmem:[%s185 + $0x60] sm:$0xff]
      %v335 = vld [vmem:[%s185 + $0x68] sm:$0xff]
      %v336 = vld [vmem:[%s185 + $0x70] sm:$0xff]
      %v337 = vld [vmem:[%s185 + $0x78] sm:$0xff]
      %v338 = vld [vmem:[%s185 + $0x80] sm:$0xff]
      %v339 = vld [vmem:[%s185 + $0x88] sm:$0xff]
      %v340 = vld [vmem:[%s185 + $0x90] sm:$0xff]
      %v341 = vld [vmem:[%s185 + $0x98] sm:$0xff]
      %v342 = vld [vmem:[%s185 + $0xa0] sm:$0xff]
      %v343 = vld [vmem:[%s185 + $0xa8] sm:$0xff]
      %v344 = vld [vmem:[%s185 + $0xb0] sm:$0xff]
      %v345 = vld [vmem:[%s185 + $0xb8] sm:$0xff]
      %v346 = vld [vmem:[%s185 + $0xc0] sm:$0xff]
      %v347 = vld [vmem:[%s185 + $0xc8] sm:$0xff]
      %v348 = vld [vmem:[%s185 + $0xd0] sm:$0xff]
      %v349 = vld [vmem:[%s185 + $0xd8] sm:$0xff]
      %v350 = vld [vmem:[%s185 + $0xe0] sm:$0xff]
      %v351 = vld [vmem:[%s185 + $0xe8] sm:$0xff]
      %v352 = vld [vmem:[%s185 + $0xf0] sm:$0xff]
      %v353 = vld [vmem:[%s185 + $0xf8] sm:$0xff]
      %v354 = vadd.f32 %v290, %v322
      %v355 = vadd.f32 %v291, %v323
      %v356 = vadd.f32 %v292, %v324
      %v357 = vadd.f32 %v293, %v325
      %v358 = vadd.f32 %v294, %v326
      %v359 = vadd.f32 %v295, %v327
      %v360 = vadd.f32 %v296, %v328
      %v361 = vadd.f32 %v297, %v329
      %v362 = vadd.f32 %v298, %v330
      %v363 = vadd.f32 %v299, %v331
      %v364 = vadd.f32 %v300, %v332
      %v365 = vadd.f32 %v301, %v333
      %v366 = vadd.f32 %v302, %v334
      %v367 = vadd.f32 %v303, %v335
      %v368 = vadd.f32 %v304, %v336
      %v369 = vadd.f32 %v305, %v337
      %v370 = vadd.f32 %v306, %v338
      %v371 = vadd.f32 %v307, %v339
      %v372 = vadd.f32 %v308, %v340
      %v373 = vadd.f32 %v309, %v341
      %v374 = vadd.f32 %v310, %v342
      %v375 = vadd.f32 %v311, %v343
      %v376 = vadd.f32 %v312, %v344
      %v377 = vadd.f32 %v313, %v345
      %v378 = vadd.f32 %v314, %v346
      %v379 = vadd.f32 %v315, %v347
      %v380 = vadd.f32 %v316, %v348
      %v381 = vadd.f32 %v317, %v349
      %v382 = vadd.f32 %v318, %v350
      %v383 = vadd.f32 %v319, %v351
      %v384 = vadd.f32 %v320, %v352
      %v385 = vadd.f32 %v321, %v353
      %vm386 = vcmask 31744
      %387 = vst.msk [vmem:[%s190] sm:$0xff] %vm386, %v354
      %388 = vst.msk [vmem:[%s190 + $0x8] sm:$0xff] %vm386, %v355
      %389 = vst.msk [vmem:[%s190 + $0x10] sm:$0xff] %vm386, %v356
      %390 = vst.msk [vmem:[%s190 + $0x18] sm:$0xff] %vm386, %v357
      %391 = vst.msk [vmem:[%s190 + $0x20] sm:$0xff] %vm386, %v358
      %392 = vst.msk [vmem:[%s190 + $0x28] sm:$0xff] %vm386, %v359
      %393 = vst.msk [vmem:[%s190 + $0x30] sm:$0xff] %vm386, %v360
      %394 = vst.msk [vmem:[%s190 + $0x38] sm:$0xff] %vm386, %v361
      %395 = vst.msk [vmem:[%s190 + $0x40] sm:$0xff] %vm386, %v362
      %396 = vst.msk [vmem:[%s190 + $0x48] sm:$0xff] %vm386, %v363
      %397 = vst.msk [vmem:[%s190 + $0x50] sm:$0xff] %vm386, %v364
      %398 = vst.msk [vmem:[%s190 + $0x58] sm:$0xff] %vm386, %v365
      %399 = vst.msk [vmem:[%s190 + $0x60] sm:$0xff] %vm386, %v366
      %400 = vst.msk [vmem:[%s190 + $0x68] sm:$0xff] %vm386, %v367
      %401 = vst.msk [vmem:[%s190 + $0x70] sm:$0xff] %vm386, %v368
      %402 = vst.msk [vmem:[%s190 + $0x78] sm:$0xff] %vm386, %v369
      %403 = vst.msk [vmem:[%s190 + $0x80] sm:$0xff] %vm386, %v370
      %404 = vst.msk [vmem:[%s190 + $0x88] sm:$0xff] %vm386, %v371
      %405 = vst.msk [vmem:[%s190 + $0x90] sm:$0xff] %vm386, %v372
      %406 = vst.msk [vmem:[%s190 + $0x98] sm:$0xff] %vm386, %v373
      %407 = vst.msk [vmem:[%s190 + $0xa0] sm:$0xff] %vm386, %v374
      %408 = vst.msk [vmem:[%s190 + $0xa8] sm:$0xff] %vm386, %v375
      %409 = vst.msk [vmem:[%s190 + $0xb0] sm:$0xff] %vm386, %v376
      %410 = vst.msk [vmem:[%s190 + $0xb8] sm:$0xff] %vm386, %v377
      %411 = vst.msk [vmem:[%s190 + $0xc0] sm:$0xff] %vm386, %v378
      %412 = vst.msk [vmem:[%s190 + $0xc8] sm:$0xff] %vm386, %v379
      %413 = vst.msk [vmem:[%s190 + $0xd0] sm:$0xff] %vm386, %v380
      %414 = vst.msk [vmem:[%s190 + $0xd8] sm:$0xff] %vm386, %v381
      %415 = vst.msk [vmem:[%s190 + $0xe0] sm:$0xff] %vm386, %v382
      %416 = vst.msk [vmem:[%s190 + $0xe8] sm:$0xff] %vm386, %v383
      %417 = vst.msk [vmem:[%s190 + $0xf0] sm:$0xff] %vm386, %v384
      %418 = vst.msk [vmem:[%s190 + $0xf8] sm:$0xff] %vm386, %v385
      %p419 = scmp.lt.s32.totalorder %s14, 1
      %s420 = scalar_select %p419, %s14, 1
      %s421 = smul.addr %s420, 32
      %s422 = smul.addr %s421, 8
      %s423 = scalar_lea.vmem %s3, %s422
      // Predicated region
      $region33: #{basic_block.5} parent=31 // pred_check
        %p424 = pneg %p105
      $region34: #{basic_block.5} parent=31 // pred_check_branch
        %426 = sbr.rel (%p424) target = $region36
      $region35: #{basic_block.5} parent=31 // pred_region
        _
      $region36: #{basic_block.5} parent=31 // pred_fallthru
        _
    $region32: #{basic_block.5} parent=5 // pred_fallthru
      _
    %p427 = scmp.le.s32.totalorder 2, %s9
    // Predicated region
    $region37: #{basic_block.5} parent=5 // pred_check
      %p428 = pneg %p427
    $region38: #{basic_block.5} parent=5 // pred_check_branch
      %430 = sbr.rel (%p428) target = $region40
    $region39: #{basic_block.5} parent=5 // pred_region
      %s431 = ssub.s32 %s9, 2
      // Predicated region
      $region41: #{basic_block.5} parent=39 // pred_check
        %p432 = pneg %p111
      $region42: #{basic_block.5} parent=39 // pred_check_branch
        %434 = sbr.rel (%p432) target = $region44
      $region43: #{basic_block.5} parent=39 // pred_region
        %p435 = scmp.lt.s32.totalorder %s15, 1
        %s436 = scalar_select %p435, %s15, 1
        %s437 = smul.addr %s436, 32
        %s438 = smul.addr %s437, 8
        %s439 = scalar_lea.vmem %s3, %s438
      $region44: #{basic_block.5} parent=39 // pred_fallthru
        _
    $region40: #{basic_block.5} parent=5 // pred_fallthru
      _
  $region6: #{basic_block.5} parent=0 // loop_footer
    %s13 = sadd.s32 1, %s9
  $region7: #{basic_block.5} parent=0 // loop_footer_branch
    %8 = sbr.rel target = $region3
  $region8: #{basic_block.5} parent=0 // loop_exit
    _

// kernel: basic_block.3
$region0: #{basic_block.3}
  #allocation0 [shape = 'u32[]', space=smem, size = 0x4, offset = 0x4, fixed_abs, tag = 'smem constant byte address 0x4 - core index']
  #allocation1 [shape = 'u32[72,128]{1,0:T(1,128)}', space=vmem, size = 0x9000, scoped, tag = 'internal scratch']
  #allocation2 [shape = 'f32[18,24,128]{2,1,0:T(8,128)}', space=vmem, size = 0x36000, scoped, tag = 'scratch operand']
  %s0 = inlined_call_operand.vmem [shape: f32[2,16,16,4], index: 0, kind: input, shape index: {}]
  %s1 = inlined_call_operand.vmem [shape: f32[9,128,128], index: 1, kind: input, shape index: {}]
  %s2 = inlined_call_operand.vmem [shape: f32[2,16,16,128], index: 2, kind: output, shape index: {0}]
  %s3 = inlined_call_operand.vmem [shape: f32[2,2,128], index: 3, kind: output, shape index: {1}]
  %4 = xla_tuple %s2, %s3
  %s5 = sld [smem:[#allocation0]]
  $region49: #{basic_block.3} parent=0
    _
  %s7 = ssub.s32 1, %s5
  %s8 = scalar_select 0, %s7, %s5
  loop: start=0, step=1, limit=4
  $region2: #{basic_block.3} parent=0 // loop_pre_header
    _
  $region3: #{basic_block.3} parent=0 // loop_header
    %s10 = sphi 0, %s14
    %p11 = scmp.ge.s32.totalorder %s10, 4
    %s20 = sphi 0, %s22
    %s23 = sphi 0, %s20
    %s24 = sphi 0, %s23
    %s40 = sphi 0, %s24
    %s44 = sphi 0, %s44
    %s46 = sphi 0, %s44
    %s47 = sphi 0, %s46
    %s61 = sphi 0, %s47
    %s67 = sphi 0, %s69
    %s70 = sphi 0, %s67
    %s71 = sphi 0, %s70
    %s87 = sphi 0, %s71
    %s93 = sphi 0, %s95
    %s96 = sphi 0, %s93
    %s97 = sphi 0, %s96
    %s113 = sphi 0, %s97
  $region4: #{basic_block.3} parent=0 // loop_header_branch
    %13 = sbr.rel (%p11) target = $region8
  $region5: #{basic_block.3} parent=0 // loop_body
    %s15 = ssub.s32 %s10, 1
    %s16 = ssub.s32 %s10, 2
    %s17 = sadd.s32 %s10, 1
    %s18 = ssub.s32 %s10, %s17
    %p19 = scmp.eq.s32.totalorder %s18, 0
    %s21 = sadd.s32 %s20, 1
    %s22 = scalar_select %p19, %s20, %s21
    %p25 = pneg %p19
    %p26 = scmp.eq.s32.totalorder %s10, 1
    %p27 = por %p25, %p26
    %p28 = scmp.ne.s32.totalorder %s20, %s23
    %p29 = scmp.eq.s32.totalorder %s10, 0
    %p30 = por %p28, %p29
    %p31 = scmp.ne.s32.totalorder %s20, %s23
    %p32 = scmp.eq.s32.totalorder %s15, 1
    %p33 = por %p31, %p32
    %p34 = scmp.ne.s32.totalorder %s23, %s24
    %p35 = scmp.eq.s32.totalorder %s15, 0
    %p36 = por %p34, %p35
    %p37 = scmp.ne.s32.totalorder %s23, %s24
    %p38 = scmp.eq.s32.totalorder %s16, 1
    %p39 = por %p37, %p38
    %p41 = scmp.ne.s32.totalorder %s24, %s40
    %p42 = scmp.eq.s32.totalorder %s16, 0
    %p43 = por %p41, %p42
    %s45 = sadd.s32 %s44, 1
    %p48 = scmp.eq.s32.totalorder %s10, 1
    %p49 = scmp.ne.s32.totalorder %s44, %s46
    %p50 = scmp.eq.s32.totalorder %s10, 0
    %p51 = por %p49, %p50
    %p52 = scmp.ne.s32.totalorder %s44, %s46
    %p53 = scmp.eq.s32.totalorder %s15, 1
    %p54 = por %p52, %p53
    %p55 = scmp.ne.s32.totalorder %s46, %s47
    %p56 = scmp.eq.s32.totalorder %s15, 0
    %p57 = por %p55, %p56
    %p58 = scmp.ne.s32.totalorder %s46, %s47
    %p59 = scmp.eq.s32.totalorder %s16, 1
    %p60 = por %p58, %p59
    %p62 = scmp.ne.s32.totalorder %s47, %s61
    %p63 = scmp.eq.s32.totalorder %s16, 0
    %p64 = por %p62, %p63
    %s65 = ssub.s32 %s10, %s17
    %p66 = scmp.eq.s32.totalorder %s65, 0
    %s68 = sadd.s32 %s67, 1
    %s69 = scalar_select %p66, %s67, %s68
    %p72 = pneg %p66
    %p73 = scmp.eq.s32.totalorder %s10, 1
    %p74 = por %p72, %p73
    %p75 = scmp.ne.s32.totalorder %s67, %s70
    %p76 = scmp.eq.s32.totalorder %s10, 0
    %p77 = por %p75, %p76
    %p78 = scmp.ne.s32.totalorder %s67, %s70
    %p79 = scmp.eq.s32.totalorder %s15, 1
    %p80 = por %p78, %p79
    %p81 = scmp.ne.s32.totalorder %s70, %s71
    %p82 = scmp.eq.s32.totalorder %s15, 0
    %p83 = por %p81, %p82
    %p84 = scmp.ne.s32.totalorder %s70, %s71
    %p85 = scmp.eq.s32.totalorder %s16, 1
    %p86 = por %p84, %p85
    %p88 = scmp.ne.s32.totalorder %s71, %s87
    %p89 = scmp.eq.s32.totalorder %s16, 0
    %p90 = por %p88, %p89
    %s91 = ssub.s32 %s10, %s17
    %p92 = scmp.eq.s32.totalorder %s91, 0
    %s94 = sadd.s32 %s93, 1
    %s95 = scalar_select %p92, %s93, %s94
    %p98 = pneg %p92
    %p99 = scmp.eq.s32.totalorder %s10, 1
    %p100 = por %p98, %p99
    %p101 = scmp.ne.s32.totalorder %s93, %s96
    %p102 = scmp.eq.s32.totalorder %s10, 0
    %p103 = por %p101, %p102
    %p104 = scmp.ne.s32.totalorder %s93, %s96
    %p105 = scmp.eq.s32.totalorder %s15, 1
    %p106 = por %p104, %p105
    %p107 = scmp.ne.s32.totalorder %s96, %s97
    %p108 = scmp.eq.s32.totalorder %s15, 0
    %p109 = por %p107, %p108
    %p110 = scmp.ne.s32.totalorder %s96, %s97
    %p111 = scmp.eq.s32.totalorder %s16, 1
    %p112 = por %p110, %p111
    %p114 = scmp.ne.s32.totalorder %s97, %s113
    %p115 = scmp.eq.s32.totalorder %s16, 0
    %p116 = por %p114, %p115
    %p117 = scmp.le.s32.totalorder 1, %s10
    %p118 = scmp.lt.s32.totalorder %s10, 3
    %p119 = pnand %p117, %p118
    %p120 = pneg %p119
    // Predicated region
    $region9: #{basic_block.3} parent=5 // pred_check
      _
    $region10: #{basic_block.3} parent=5 // pred_check_branch
      %122 = sbr.rel (%p119) target = $region12
    $region11: #{basic_block.3} parent=5 // pred_region
      %s123 = ssub.s32 %s10, 1
      // Predicated region
      $region13: #{basic_block.3} parent=11 // pred_check
        %p124 = pneg %p57
      $region14: #{basic_block.3} parent=11 // pred_check_branch
        %126 = sbr.rel (%p124) target = $region16
      $region15: #{basic_block.3} parent=11 // pred_region
        _
      $region16: #{basic_block.3} parent=11 // pred_fallthru
        _
    $region12: #{basic_block.3} parent=5 // pred_fallthru
      _
    %p127 = scmp.lt.s32.totalorder %s10, 2
    // Predicated region
    $region17: #{basic_block.3} parent=5 // pred_check
      %p128 = pneg %p127
    $region18: #{basic_block.3} parent=5 // pred_check_branch
      %130 = sbr.rel (%p128) target = $region20
    $region19: #{basic_block.3} parent=5 // pred_region
      // Predicated region
      $region21: #{basic_block.3} parent=19 // pred_check
        %p131 = pneg %p30
      $region22: #{basic_block.3} parent=19 // pred_check_branch
        %133 = sbr.rel (%p131) target = $region24
      $region23: #{basic_block.3} parent=19 // pred_region
        %p134 = scmp.lt.s32.totalorder %s10, 1
        %s135 = scalar_select %p134, %s10, 1
        %s136 = smul.addr %s135, 32
        %s137 = smul.addr %s136, 8
        %s138 = scalar_lea.vmem %s0, %s137
      $region24: #{basic_block.3} parent=19 // pred_fallthru
        _
    $region20: #{basic_block.3} parent=5 // pred_fallthru
      _
    %p139 = scmp.le.s32.totalorder 1, %s10
    %p140 = scmp.lt.s32.totalorder %s10, 3
    %p141 = pnand %p139, %p140
    %p142 = pneg %p141
    // Predicated region
    $region25: #{basic_block.3} parent=5 // pred_check
      _
    $region26: #{basic_block.3} parent=5 // pred_check_branch
      %144 = sbr.rel (%p141) target = $region28
    $region27: #{basic_block.3} parent=5 // pred_region
      %s145 = ssub.s32 %s10, 1
      %p146 = scmp.lt.s32.totalorder %s15, 1
      %s147 = scalar_select %p146, %s15, 1
      %s148 = smul.addr %s147, 32
      %s149 = smul.addr %s148, 8
      %s150 = scalar_lea.vmem %s0, %s149
      %p151 = pneg %p36
      %p152 = pneg %p33
      %p153 = pneg %p57
      %p154 = pneg %p54
      %p155 = pneg %p83
      %p156 = pneg %p80
      %p157 = scmp.lt.s32.totalorder %s15, 1
      %s158 = scalar_select %p157, %s15, 1
      %s159 = smul.addr %s158, 32
      %s160 = smul.addr %s159, 8
      %s161 = scalar_lea.vmem %s2, %s160
      %p162 = pneg %p109
      %p163 = pneg %p106
      %p164 = scmp.lt.s32.totalorder %s15, 1
      %s165 = scalar_select %p164, %s15, 1
      %s166 = smul.addr %s165, 2
      %s167 = scalar_lea.vmem %s3, %s166
      %p168 = scmp.lt.s32.totalorder %s15, 1
      %s169 = scalar_select %p168, %s15, 1
      %s170 = smul.addr %s169, 32
      %s171 = smul.addr %s170, 8
      %s172 = scalar_lea.vmem %s0, %s171
      %p173 = scmp.lt.s32.totalorder %s15, 1
      %s174 = scalar_select %p173, %s15, 1
      %s175 = smul.addr %s174, 32
      %s176 = smul.addr %s175, 8
      %s177 = scalar_lea.vmem %s2, %s176
      %p178 = scmp.lt.s32.totalorder %s15, 1
      %s179 = scalar_select %p178, %s15, 1
      %s180 = smul.addr %s179, 2
      %s181 = scalar_lea.vmem %s3, %s180
      %v182 = vld [vmem:[%s172] sm:$0xff]
      %v183 = vld [vmem:[%s172 + $0x8] sm:$0xff]
      %v184 = vld [vmem:[%s172 + $0x10] sm:$0xff]
      %v185 = vld [vmem:[%s172 + $0x18] sm:$0xff]
      %v186 = vld [vmem:[%s172 + $0x20] sm:$0xff]
      %v187 = vld [vmem:[%s172 + $0x28] sm:$0xff]
      %v188 = vld [vmem:[%s172 + $0x30] sm:$0xff]
      %v189 = vld [vmem:[%s172 + $0x38] sm:$0xff]
      %v190 = vld [vmem:[%s172 + $0x40] sm:$0xff]
      %v191 = vld [vmem:[%s172 + $0x48] sm:$0xff]
      %v192 = vld [vmem:[%s172 + $0x50] sm:$0xff]
      %v193 = vld [vmem:[%s172 + $0x58] sm:$0xff]
      %v194 = vld [vmem:[%s172 + $0x60] sm:$0xff]
      %v195 = vld [vmem:[%s172 + $0x68] sm:$0xff]
      %v196 = vld [vmem:[%s172 + $0x70] sm:$0xff]
      %v197 = vld [vmem:[%s172 + $0x78] sm:$0xff]
      %v198 = vld [vmem:[%s172 + $0x80] sm:$0xff]
      %v199 = vld [vmem:[%s172 + $0x88] sm:$0xff]
      %v200 = vld [vmem:[%s172 + $0x90] sm:$0xff]
      %v201 = vld [vmem:[%s172 + $0x98] sm:$0xff]
      %v202 = vld [vmem:[%s172 + $0xa0] sm:$0xff]
      %v203 = vld [vmem:[%s172 + $0xa8] sm:$0xff]
      %v204 = vld [vmem:[%s172 + $0xb0] sm:$0xff]
      %v205 = vld [vmem:[%s172 + $0xb8] sm:$0xff]
      %v206 = vld [vmem:[%s172 + $0xc0] sm:$0xff]
      %v207 = vld [vmem:[%s172 + $0xc8] sm:$0xff]
      %v208 = vld [vmem:[%s172 + $0xd0] sm:$0xff]
      %v209 = vld [vmem:[%s172 + $0xd8] sm:$0xff]
      %v210 = vld [vmem:[%s172 + $0xe0] sm:$0xff]
      %v211 = vld [vmem:[%s172 + $0xe8] sm:$0xff]
      %v212 = vld [vmem:[%s172 + $0xf0] sm:$0xff]
      %v213 = vld [vmem:[%s172 + $0xf8] sm:$0xff]
      %214 = vst [vmem:[#allocation2] sm:$0xff] 0.0
      %215 = vst [vmem:[#allocation2 + $0x8] sm:$0xff] 0.0
      %216 = vst [vmem:[#allocation2 + $0x10] sm:$0xff] 0.0
      %217 = vst [vmem:[#allocation2 + $0x18] sm:$0xff] 0.0
      %218 = vst [vmem:[#allocation2 + $0x20] sm:$0xff] 0.0
      %219 = vst [vmem:[#allocation2 + $0x28] sm:$0xff] 0.0
      %220 = vst [vmem:[#allocation2 + $0x30] sm:$0xff] 0.0
      %221 = vst [vmem:[#allocation2 + $0x38] sm:$0xff] 0.0
      %222 = vst [vmem:[#allocation2 + $0x40] sm:$0xff] 0.0
      %223 = vst [vmem:[#allocation2 + $0x48] sm:$0xff] 0.0
      %224 = vst [vmem:[#allocation2 + $0x50] sm:$0xff] 0.0
      %225 = vst [vmem:[#allocation2 + $0x58] sm:$0xff] 0.0
      %226 = vst [vmem:[#allocation2 + $0x60] sm:$0xff] 0.0
      %227 = vst [vmem:[#allocation2 + $0x68] sm:$0xff] 0.0
      %228 = vst [vmem:[#allocation2 + $0x70] sm:$0xff] 0.0
      %229 = vst [vmem:[#allocation2 + $0x78] sm:$0xff] 0.0
      %230 = vst [vmem:[#allocation2 + $0x80] sm:$0xff] 0.0
      %231 = vst [vmem:[#allocation2 + $0x88] sm:$0xff] 0.0
      %232 = vst [vmem:[#allocation2 + $0x90] sm:$0xff] 0.0
      %233 = vst [vmem:[#allocation2 + $0x98] sm:$0xff] 0.0
      %234 = vst [vmem:[#allocation2 + $0xa0] sm:$0xff] 0.0
      %235 = vst [vmem:[#allocation2 + $0xa8] sm:$0xff] 0.0
      %236 = vst [vmem:[#allocation2 + $0xb0] sm:$0xff] 0.0
      %237 = vst [vmem:[#allocation2 + $0xb8] sm:$0xff] 0.0
      %238 = vst [vmem:[#allocation2 + $0xc0] sm:$0xff] 0.0
      %239 = vst [vmem:[#allocation2 + $0xc8] sm:$0xff] 0.0
      %240 = vst [vmem:[#allocation2 + $0xd0] sm:$0xff] 0.0
      %241 = vst [vmem:[#allocation2 + $0xd8] sm:$0xff] 0.0
      %242 = vst [vmem:[#allocation2 + $0xe0] sm:$0xff] 0.0
      %243 = vst [vmem:[#allocation2 + $0xe8] sm:$0xff] 0.0
      %244 = vst [vmem:[#allocation2 + $0xf0] sm:$0xff] 0.0
      %245 = vst [vmem:[#allocation2 + $0xf8] sm:$0xff] 0.0
      %246 = vst [vmem:[#allocation2 + $0x100] sm:$0xff] 0.0
      %247 = vst [vmem:[#allocation2 + $0x108] sm:$0xff] 0.0
      %248 = vst [vmem:[#allocation2 + $0x110] sm:$0xff] 0.0
      %249 = vst [vmem:[#allocation2 + $0x118] sm:$0xff] 0.0
      %250 = vst [vmem:[#allocation2 + $0x120] sm:$0xff] 0.0
      %251 = vst [vmem:[#allocation2 + $0x128] sm:$0xff] 0.0
      %252 = vst [vmem:[#allocation2 + $0x130] sm:$0xff] 0.0
      %253 = vst [vmem:[#allocation2 + $0x138] sm:$0xff] 0.0
      %254 = vst [vmem:[#allocation2 + $0x140] sm:$0xff] 0.0
      %255 = vst [vmem:[#allocation2 + $0x148] sm:$0xff] 0.0
      %256 = vst [vmem:[#allocation2 + $0x150] sm:$0xff] 0.0
      %257 = vst [vmem:[#allocation2 + $0x158] sm:$0xff] 0.0
      %258 = vst [vmem:[#allocation2 + $0x160] sm:$0xff] 0.0
      %259 = vst [vmem:[#allocation2 + $0x168] sm:$0xff] 0.0
      %260 = vst [vmem:[#allocation2 + $0x170] sm:$0xff] 0.0
      %261 = vst [vmem:[#allocation2 + $0x178] sm:$0xff] 0.0
      %262 = vst [vmem:[#allocation2 + $0x180] sm:$0xff] 0.0
      %263 = vst [vmem:[#allocation2 + $0x188] sm:$0xff] 0.0
      %264 = vst [vmem:[#allocation2 + $0x190] sm:$0xff] 0.0
      %265 = vst [vmem:[#allocation2 + $0x198] sm:$0xff] 0.0
      %266 = vst [vmem:[#allocation2 + $0x1a0] sm:$0xff] 0.0
      %267 = vst [vmem:[#allocation2 + $0x1a8] sm:$0xff] 0.0
      %s268 = scalar_lea.vmem [#allocation2], 24
      %vm269 = vcmask 31744
      %270 = vst.msk [vmem:[%s268 + $0x1] sm:$0xff] %vm269, %v182
      %271 = vst.msk [vmem:[%s268 + $0x9] sm:$0xff] %vm269, %v183
      %272 = vst.msk [vmem:[%s268 + $0x19] sm:$0xff] %vm269, %v184
      %273 = vst.msk [vmem:[%s268 + $0x21] sm:$0xff] %vm269, %v185
      %274 = vst.msk [vmem:[%s268 + $0x31] sm:$0xff] %vm269, %v186
      %275 = vst.msk [vmem:[%s268 + $0x39] sm:$0xff] %vm269, %v187
      %276 = vst.msk [vmem:[%s268 + $0x49] sm:$0xff] %vm269, %v188
      %277 = vst.msk [vmem:[%s268 + $0x51] sm:$0xff] %vm269, %v189
      %278 = vst.msk [vmem:[%s268 + $0x61] sm:$0xff] %vm269, %v190
      %279 = vst.msk [vmem:[%s268 + $0x69] sm:$0xff] %vm269, %v191
      %280 = vst.msk [vmem:[%s268 + $0x79] sm:$0xff] %vm269, %v192
      %281 = vst.msk [vmem:[%s268 + $0x81] sm:$0xff] %vm269, %v193
      %282 = vst.msk [vmem:[%s268 + $0x91] sm:$0xff] %vm269, %v194
      %283 = vst.msk [vmem:[%s268 + $0x99] sm:$0xff] %vm269, %v195
      %284 = vst.msk [vmem:[%s268 + $0xa9] sm:$0xff] %vm269, %v196
      %285 = vst.msk [vmem:[%s268 + $0xb1] sm:$0xff] %vm269, %v197
      %286 = vst.msk [vmem:[%s268 + $0xc1] sm:$0xff] %vm269, %v198
      %287 = vst.msk [vmem:[%s268 + $0xc9] sm:$0xff] %vm269, %v199
      %288 = vst.msk [vmem:[%s268 + $0xd9] sm:$0xff] %vm269, %v200
      %289 = vst.msk [vmem:[%s268 + $0xe1] sm:$0xff] %vm269, %v201
      %290 = vst.msk [vmem:[%s268 + $0xf1] sm:$0xff] %vm269, %v202
      %291 = vst.msk [vmem:[%s268 + $0xf9] sm:$0xff] %vm269, %v203
      %292 = vst.msk [vmem:[%s268 + $0x109] sm:$0xff] %vm269, %v204
      %293 = vst.msk [vmem:[%s268 + $0x111] sm:$0xff] %vm269, %v205
      %294 = vst.msk [vmem:[%s268 + $0x121] sm:$0xff] %vm269, %v206
      %295 = vst.msk [vmem:[%s268 + $0x129] sm:$0xff] %vm269, %v207
      %296 = vst.msk [vmem:[%s268 + $0x139] sm:$0xff] %vm269, %v208
      %297 = vst.msk [vmem:[%s268 + $0x141] sm:$0xff] %vm269, %v209
      %298 = vst.msk [vmem:[%s268 + $0x151] sm:$0xff] %vm269, %v210
      %299 = vst.msk [vmem:[%s268 + $0x159] sm:$0xff] %vm269, %v211
      %300 = vst.msk [vmem:[%s268 + $0x169] sm:$0xff] %vm269, %v212
      %301 = vst.msk [vmem:[%s268 + $0x171] sm:$0xff] %vm269, %v213
      %v302 = vld [vmem:[#allocation2] sm:$0xff]
      %v303 = vld [vmem:[#allocation2 + $0x8] sm:$0xff]
      %v304 = vld [vmem:[#allocation2 + $0x18] sm:$0xff]
      %v305 = vld [vmem:[#allocation2 + $0x20] sm:$0xff]
      %v306 = vld [vmem:[#allocation2 + $0x30] sm:$0xff]
      %v307 = vld [vmem:[#allocation2 + $0x38] sm:$0xff]
      %v308 = vld [vmem:[#allocation2 + $0x48] sm:$0xff]
      %v309 = vld [vmem:[#allocation2 + $0x50] sm:$0xff]
      %v310 = vld [vmem:[#allocation2 + $0x60] sm:$0xff]
      %v311 = vld [vmem:[#allocation2 + $0x68] sm:$0xff]
      %v312 = vld [vmem:[#allocation2 + $0x78] sm:$0xff]
      %v313 = vld [vmem:[#allocation2 + $0x80] sm:$0xff]
      %v314 = vld [vmem:[#allocation2 + $0x90] sm:$0xff]
      %v315 = vld [vmem:[#allocation2 + $0x98] sm:$0xff]
      %v316 = vld [vmem:[#allocation2 + $0xa8] sm:$0xff]
      %v317 = vld [vmem:[#allocation2 + $0xb0] sm:$0xff]
      %v318 = vld [vmem:[#allocation2 + $0xc0] sm:$0xff]
      %v319 = vld [vmem:[#allocation2 + $0xc8] sm:$0xff]
      %v320 = vld [vmem:[#allocation2 + $0xd8] sm:$0xff]
      %v321 = vld [vmem:[#allocation2 + $0xe0] sm:$0xff]
      %v322 = vld [vmem:[#allocation2 + $0xf0] sm:$0xff]
      %v323 = vld [vmem:[#allocation2 + $0xf8] sm:$0xff]
      %v324 = vld [vmem:[#allocation2 + $0x108] sm:$0xff]
      %v325 = vld [vmem:[#allocation2 + $0x110] sm:$0xff]
      %v326 = vld [vmem:[#allocation2 + $0x120] sm:$0xff]
      %v327 = vld [vmem:[#allocation2 + $0x128] sm:$0xff]
      %v328 = vld [vmem:[#allocation2 + $0x138] sm:$0xff]
      %v329 = vld [vmem:[#allocation2 + $0x140] sm:$0xff]
      %v330 = vld [vmem:[#allocation2 + $0x150] sm:$0xff]
      %v331 = vld [vmem:[#allocation2 + $0x158] sm:$0xff]
      %v332 = vld [vmem:[#allocation2 + $0x168] sm:$0xff]
      %v333 = vld [vmem:[#allocation2 + $0x170] sm:$0xff]
      %v334 = vld [vmem:[%s1] sm:$0xff]
      %v335 = vld [vmem:[%s1 + $0x8] sm:$0xff]
      %v336 = vld [vmem:[%s1 + $0x10] sm:$0xff]
      %v337 = vld [vmem:[%s1 + $0x18] sm:$0xff]
      %v338 = vld [vmem:[%s1 + $0x20] sm:$0xff]
      %v339 = vld [vmem:[%s1 + $0x28] sm:$0xff]
      %v340 = vld [vmem:[%s1 + $0x30] sm:$0xff]
      %v341 = vld [vmem:[%s1 + $0x38] sm:$0xff]
      %v342 = vld [vmem:[%s1 + $0x40] sm:$0xff]
      %v343 = vld [vmem:[%s1 + $0x48] sm:$0xff]
      %v344 = vld [vmem:[%s1 + $0x50] sm:$0xff]
      %v345 = vld [vmem:[%s1 + $0x58] sm:$0xff]
      %v346 = vld [vmem:[%s1 + $0x60] sm:$0xff]
      %v347 = vld [vmem:[%s1 + $0x68] sm:$0xff]
      %v348 = vld [vmem:[%s1 + $0x70] sm:$0xff]
      %v349 = vld [vmem:[%s1 + $0x78] sm:$0xff]
      %v350 = vld [vmem:[#allocation2 + $0x1] sm:$0xff]
      %v351 = vld [vmem:[#allocation2 + $0x9] sm:$0xff]
      %v352 = vld [vmem:[#allocation2 + $0x19] sm:$0xff]
      %v353 = vld [vmem:[#allocation2 + $0x21] sm:$0xff]
      %v354 = vld [vmem:[#allocation2 + $0x31] sm:$0xff]
      %v355 = vld [vmem:[#allocation2 + $0x39] sm:$0xff]
      %v356 = vld [vmem:[#allocation2 + $0x49] sm:$0xff]
      %v357 = vld [vmem:[#allocation2 + $0x51] sm:$0xff]
      %v358 = vld [vmem:[#allocation2 + $0x61] sm:$0xff]
      %v359 = vld [vmem:[#allocation2 + $0x69] sm:$0xff]
      %v360 = vld [vmem:[#allocation2 + $0x79] sm:$0xff]
      %v361 = vld [vmem:[#allocation2 + $0x81] sm:$0xff]
      %v362 = vld [vmem:[#allocation2 + $0x91] sm:$0xff]
      %v363 = vld [vmem:[#allocation2 + $0x99] sm:$0xff]
      %v364 = vld [vmem:[#allocation2 + $0xa9] sm:$0xff]
      %v365 = vld [vmem:[#allocation2 + $0xb1] sm:$0xff]
      %v366 = vld [vmem:[#allocation2 + $0xc1] sm:$0xff]
      %v367 = vld [vmem:[#allocation2 + $0xc9] sm:$0xff]
      %v368 = vld [vmem:[#allocation2 + $0xd9] sm:$0xff]
      %v369 = vld [vmem:[#allocation2 + $0xe1] sm:$0xff]
      %v370 = vld [vmem:[#allocation2 + $0xf1] sm:$0xff]
      %v371 = vld [vmem:[#allocation2 + $0xf9] sm:$0xff]
      %v372 = vld [vmem:[#allocation2 + $0x109] sm:$0xff]
      %v373 = vld [vmem:[#allocation2 + $0x111] sm:$0xff]
      %v374 = vld [vmem:[#allocation2 + $0x121] sm:$0xff]
      %v375 = vld [vmem:[#allocation2 + $0x129] sm:$0xff]
      %v376 = vld [vmem:[#allocation2 + $0x139] sm:$0xff]
      %v377 = vld [vmem:[#allocation2 + $0x141] sm:$0xff]
      %v378 = vld [vmem:[#allocation2 + $0x151] sm:$0xff]
      %v379 = vld [vmem:[#allocation2 + $0x159] sm:$0xff]
      %v380 = vld [vmem:[#allocation2 + $0x169] sm:$0xff]
      %v381 = vld [vmem:[#allocation2 + $0x171] sm:$0xff]
      %s382 = scalar_lea.vmem %s1, 128
      %v383 = vld [vmem:[%s382] sm:$0xff]
      %v384 = vld [vmem:[%s382 + $0x8] sm:$0xff]
      %v385 = vld [vmem:[%s382 + $0x10] sm:$0xff]
      %v386 = vld [vmem:[%s382 + $0x18] sm:$0xff]
      %v387 = vld [vmem:[%s382 + $0x20] sm:$0xff]
      %v388 = vld [vmem:[%s382 + $0x28] sm:$0xff]
      %v389 = vld [vmem:[%s382 + $0x30] sm:$0xff]
      %v390 = vld [vmem:[%s382 + $0x38] sm:$0xff]
      %v391 = vld [vmem:[%s382 + $0x40] sm:$0xff]
      %v392 = vld [vmem:[%s382 + $0x48] sm:$0xff]
      %v393 = vld [vmem:[%s382 + $0x50] sm:$0xff]
      %v394 = vld [vmem:[%s382 + $0x58] sm:$0xff]
      %v395 = vld [vmem:[%s382 + $0x60] sm:$0xff]
      %v396 = vld [vmem:[%s382 + $0x68] sm:$0xff]
      %v397 = vld [vmem:[%s382 + $0x70] sm:$0xff]
      %v398 = vld [vmem:[%s382 + $0x78] sm:$0xff]
      %399 = vmatpush.msra.mxu0 %v398
      %400 = vmatpush.msra.mxu0 %v397
      %401 = vmatpush.msra.mxu0 %v396
      %402 = vmatpush.msra.mxu0 %v395
      %403 = vmatpush.msra.mxu0 %v394
      %404 = vmatpush.msra.mxu0 %v393
      %405 = vmatpush.msra.mxu0 %v392
      %406 = vmatpush.msra.mxu0 %v391
      %407 = vmatpush.msra.mxu0 %v390
      %408 = vmatpush.msra.mxu0 %v389
      %409 = vmatpush.msra.mxu0 %v388
      %410 = vmatpush.msra.mxu0 %v387
      %411 = vmatpush.msra.mxu0 %v386
      %412 = vmatpush.msra.mxu0 %v385
      %413 = vmatpush.msra.mxu0 %v384
      %414 = vmatpush.msra.mxu0 %v383
      %415 = vmatmul.f32.gmra.mxu0 %v350
      %v416 = vpop.f32.mrf.mxu0
      %v417 = vadd.f32 0.0, %v416
      %418 = vmatmul.f32.gmra.mxu0 %v351
      %v419 = vpop.f32.mrf.mxu0
      %v420 = vadd.f32 0.0, %v419
      %421 = vmatmul.f32.gmra.mxu0 %v352
      %v422 = vpop.f32.mrf.mxu0
      %v423 = vadd.f32 0.0, %v422
      %424 = vmatmul.f32.gmra.mxu0 %v353
      %v425 = vpop.f32.mrf.mxu0
      %v426 = vadd.f32 0.0, %v425
      %427 = vmatmul.f32.gmra.mxu0 %v354
      %v428 = vpop.f32.mrf.mxu0
      %v429 = vadd.f32 0.0, %v428
      %430 = vmatmul.f32.gmra.mxu0 %v355
      %v431 = vpop.f32.mrf.mxu0
      %v432 = vadd.f32 0.0, %v431
      %433 = vmatmul.f32.gmra.mxu0 %v356
      %v434 = vpop.f32.mrf.mxu0
      %v435 = vadd.f32 0.0, %v434
      %436 = vmatmul.f32.gmra.mxu0 %v357
      %v437 = vpop.f32.mrf.mxu0
      %v438 = vadd.f32 0.0, %v437
      %439 = vmatmul.f32.gmra.mxu0 %v358
      %v440 = vpop.f32.mrf.mxu0
      %v441 = vadd.f32 0.0, %v440
      %442 = vmatmul.f32.gmra.mxu0 %v359
      %v443 = vpop.f32.mrf.mxu0
      %v444 = vadd.f32 0.0, %v443
      %445 = vmatmul.f32.gmra.mxu0 %v360
      %v446 = vpop.f32.mrf.mxu0
      %v447 = vadd.f32 0.0, %v446
      %448 = vmatmul.f32.gmra.mxu0 %v361
      %v449 = vpop.f32.mrf.mxu0
      %v450 = vadd.f32 0.0, %v449
      %451 = vmatmul.f32.gmra.mxu0 %v362
      %v452 = vpop.f32.mrf.mxu0
      %v453 = vadd.f32 0.0, %v452
      %454 = vmatmul.f32.gmra.mxu0 %v363
      %v455 = vpop.f32.mrf.mxu0
      %v456 = vadd.f32 0.0, %v455
      %457 = vmatmul.f32.gmra.mxu0 %v364
      %v458 = vpop.f32.mrf.mxu0
      %v459 = vadd.f32 0.0, %v458
      %460 = vmatmul.f32.gmra.mxu0 %v365
      %v461 = vpop.f32.mrf.mxu0
      %v462 = vadd.f32 0.0, %v461
      %463 = vmatmul.f32.gmra.mxu0 %v366
      %v464 = vpop.f32.mrf.mxu0
      %v465 = vadd.f32 0.0, %v464
      %466 = vmatmul.f32.gmra.mxu0 %v367
      %v467 = vpop.f32.mrf.mxu0
      %v468 = vadd.f32 0.0, %v467
      %469 = vmatmul.f32.gmra.mxu0 %v368
      %v470 = vpop.f32.mrf.mxu0
      %v471 = vadd.f32 0.0, %v470
      %472 = vmatmul.f32.gmra.mxu0 %v369
      %v473 = vpop.f32.mrf.mxu0
      %v474 = vadd.f32 0.0, %v473
      %475 = vmatmul.f32.gmra.mxu0 %v370
      %v476 = vpop.f32.mrf.mxu0
      %v477 = vadd.f32 0.0, %v476
      %478 = vmatmul.f32.gmra.mxu0 %v371
      %v479 = vpop.f32.mrf.mxu0
      %v480 = vadd.f32 0.0, %v479
      %481 = vmatmul.f32.gmra.mxu0 %v372
      %v482 = vpop.f32.mrf.mxu0
      %v483 = vadd.f32 0.0, %v482
      %484 = vmatmul.f32.gmra.mxu0 %v373
      %v485 = vpop.f32.mrf.mxu0
      %v486 = vadd.f32 0.0, %v485
      %487 = vmatmul.f32.gmra.mxu0 %v374
      %v488 = vpop.f32.mrf.mxu0
      %v489 = vadd.f32 0.0, %v488
      %490 = vmatmul.f32.gmra.mxu0 %v375
      %v491 = vpop.f32.mrf.mxu0
      %v492 = vadd.f32 0.0, %v491
      %493 = vmatmul.f32.gmra.mxu0 %v376
      %v494 = vpop.f32.mrf.mxu0
      %v495 = vadd.f32 0.0, %v494
      %496 = vmatmul.f32.gmra.mxu0 %v377
      %v497 = vpop.f32.mrf.mxu0
      %v498 = vadd.f32 0.0, %v497
      %499 = vmatmul.f32.gmra.mxu0 %v378
      %v500 = vpop.f32.mrf.mxu0
      %v501 = vadd.f32 0.0, %v500
      %502 = vmatmul.f32.gmra.mxu0 %v379
      %v503 = vpop.f32.mrf.mxu0
      %v504 = vadd.f32 0.0, %v503
      %505 = vmatmul.f32.gmra.mxu0 %v380
      %v506 = vpop.f32.mrf.mxu0
      %v507 = vadd.f32 0.0, %v506
      %508 = vmatmul.f32.gmra.mxu0 %v381
      %v509 = vpop.f32.mrf.mxu0
      %v510 = vadd.f32 0.0, %v509
      %511 = vdwg.mxu0
      %512 = vmatpush.msra.mxu0 %v349
      %513 = vmatpush.msra.mxu0 %v348
      %514 = vmatpush.msra.mxu0 %v347
      %515 = vmatpush.msra.mxu0 %v346
      %516 = vmatpush.msra.mxu0 %v345
      %517 = vmatpush.msra.mxu0 %v344
      %518 = vmatpush.msra.mxu0 %v343
      %519 = vmatpush.msra.mxu0 %v342
      %520 = vmatpush.msra.mxu0 %v341
      %521 = vmatpush.msra.mxu0 %v340
      %522 = vmatpush.msra.mxu0 %v339
      %523 = vmatpush.msra.mxu0 %v338
      %524 = vmatpush.msra.mxu0 %v337
      %525 = vmatpush.msra.mxu0 %v336
      %526 = vmatpush.msra.mxu0 %v335
      %527 = vmatpush.msra.mxu0 %v334
      %528 = vmatmul.f32.gmra.mxu0 %v302
      %v529 = vpop.f32.mrf.mxu0
      %v530 = vadd.f32 %v417, %v529
      %531 = vmatmul.f32.gmra.mxu0 %v303
      %v532 = vpop.f32.mrf.mxu0
      %v533 = vadd.f32 %v420, %v532
      %534 = vmatmul.f32.gmra.mxu0 %v304
      %v535 = vpop.f32.mrf.mxu0
      %v536 = vadd.f32 %v423, %v535
      %537 = vmatmul.f32.gmra.mxu0 %v305
      %v538 = vpop.f32.mrf.mxu0
      %v539 = vadd.f32 %v426, %v538
      %540 = vmatmul.f32.gmra.mxu0 %v306
      %v541 = vpop.f32.mrf.mxu0
      %v542 = vadd.f32 %v429, %v541
      %543 = vmatmul.f32.gmra.mxu0 %v307
      %v544 = vpop.f32.mrf.mxu0
      %v545 = vadd.f32 %v432, %v544
      %546 = vmatmul.f32.gmra.mxu0 %v308
      %v547 = vpop.f32.mrf.mxu0
      %v548 = vadd.f32 %v435, %v547
      %549 = vmatmul.f32.gmra.mxu0 %v309
      %v550 = vpop.f32.mrf.mxu0
      %v551 = vadd.f32 %v438, %v550
      %552 = vmatmul.f32.gmra.mxu0 %v310
      %v553 = vpop.f32.mrf.mxu0
      %v554 = vadd.f32 %v441, %v553
      %555 = vmatmul.f32.gmra.mxu0 %v311
      %v556 = vpop.f32.mrf.mxu0
      %v557 = vadd.f32 %v444, %v556
      %558 = vmatmul.f32.gmra.mxu0 %v312
      %v559 = vpop.f32.mrf.mxu0
      %v560 = vadd.f32 %v447, %v559
      %561 = vmatmul.f32.gmra.mxu0 %v313
      %v562 = vpop.f32.mrf.mxu0
      %v563 = vadd.f32 %v450, %v562
      %564 = vmatmul.f32.gmra.mxu0 %v314
      %v565 = vpop.f32.mrf.mxu0
      %v566 = vadd.f32 %v453, %v565
      %567 = vmatmul.f32.gmra.mxu0 %v315
      %v568 = vpop.f32.mrf.mxu0
      %v569 = vadd.f32 %v456, %v568
      %570 = vmatmul.f32.gmra.mxu0 %v316
      %v571 = vpop.f32.mrf.mxu0
      %v572 = vadd.f32 %v459, %v571
      %573 = vmatmul.f32.gmra.mxu0 %v317
      %v574 = vpop.f32.mrf.mxu0
      %v575 = vadd.f32 %v462, %v574
      %576 = vmatmul.f32.gmra.mxu0 %v318
      %v577 = vpop.f32.mrf.mxu0
      %v578 = vadd.f32 %v465, %v577
      %579 = vmatmul.f32.gmra.mxu0 %v319
      %v580 = vpop.f32.mrf.mxu0
      %v581 = vadd.f32 %v468, %v580
      %582 = vmatmul.f32.gmra.mxu0 %v320
      %v583 = vpop.f32.mrf.mxu0
      %v584 = vadd.f32 %v471, %v583
      %585 = vmatmul.f32.gmra.mxu0 %v321
      %v586 = vpop.f32.mrf.mxu0
      %v587 = vadd.f32 %v474, %v586
      %588 = vmatmul.f32.gmra.mxu0 %v322
      %v589 = vpop.f32.mrf.mxu0
      %v590 = vadd.f32 %v477, %v589
      %591 = vmatmul.f32.gmra.mxu0 %v323
      %v592 = vpop.f32.mrf.mxu0
      %v593 = vadd.f32 %v480, %v592
      %594 = vmatmul.f32.gmra.mxu0 %v324
      %v595 = vpop.f32.mrf.mxu0
      %v596 = vadd.f32 %v483, %v595
      %597 = vmatmul.f32.gmra.mxu0 %v325
      %v598 = vpop.f32.mrf.mxu0
      %v599 = vadd.f32 %v486, %v598
      %600 = vmatmul.f32.gmra.mxu0 %v326
      %v601 = vpop.f32.mrf.mxu0
      %v602 = vadd.f32 %v489, %v601
      %603 = vmatmul.f32.gmra.mxu0 %v327
      %v604 = vpop.f32.mrf.mxu0
      %v605 = vadd.f32 %v492, %v604
      %606 = vmatmul.f32.gmra.mxu0 %v328
      %v607 = vpop.f32.mrf.mxu0
      %v608 = vadd.f32 %v495, %v607
      %609 = vmatmul.f32.gmra.mxu0 %v329
      %v610 = vpop.f32.mrf.mxu0
      %v611 = vadd.f32 %v498, %v610
      %612 = vmatmul.f32.gmra.mxu0 %v330
      %v613 = vpop.f32.mrf.mxu0
      %v614 = vadd.f32 %v501, %v613
      %615 = vmatmul.f32.gmra.mxu0 %v331
      %v616 = vpop.f32.mrf.mxu0
      %v617 = vadd.f32 %v504, %v616
      %618 = vmatmul.f32.gmra.mxu0 %v332
      %v619 = vpop.f32.mrf.mxu0
      %v620 = vadd.f32 %v507, %v619
      %621 = vmatmul.f32.gmra.mxu0 %v333
      %v622 = vpop.f32.mrf.mxu0
      %v623 = vadd.f32 %v510, %v622
      %624 = vdwg.mxu0
      %v625 = vld [vmem:[#allocation2 + $0x2] sm:$0xff]
      %v626 = vld [vmem:[#allocation2 + $0xa] sm:$0xff]
      %v627 = vld [vmem:[#allocation2 + $0x1a] sm:$0xff]
      %v628 = vld [vmem:[#allocation2 + $0x22] sm:$0xff]
      %v629 = vld [vmem:[#allocation2 + $0x32] sm:$0xff]
      %v630 = vld [vmem:[#allocation2 + $0x3a] sm:$0xff]
      %v631 = vld [vmem:[#allocation2 + $0x4a] sm:$0xff]
      %v632 = vld [vmem:[#allocation2 + $0x52] sm:$0xff]
      %v633 = vld [vmem:[#allocation2 + $0x62] sm:$0xff]
      %v634 = vld [vmem:[#allocation2 + $0x6a] sm:$0xff]
      %v635 = vld [vmem:[#allocation2 + $0x7a] sm:$0xff]
      %v636 = vld [vmem:[#allocation2 + $0x82] sm:$0xff]
      %v637 = vld [vmem:[#allocation2 + $0x92] sm:$0xff]
      %v638 = vld [vmem:[#allocation2 + $0x9a] sm:$0xff]
      %v639 = vld [vmem:[#allocation2 + $0xaa] sm:$0xff]
      %v640 = vld [vmem:[#allocation2 + $0xb2] sm:$0xff]
      %v641 = vld [vmem:[#allocation2 + $0xc2] sm:$0xff]
      %v642 = vld [vmem:[#allocation2 + $0xca] sm:$0xff]
      %v643 = vld [vmem:[#allocation2 + $0xda] sm:$0xff]
      %v644 = vld [vmem:[#allocation2 + $0xe2] sm:$0xff]
      %v645 = vld [vmem:[#allocation2 + $0xf2] sm:$0xff]
      %v646 = vld [vmem:[#allocation2 + $0xfa] sm:$0xff]
      %v647 = vld [vmem:[#allocation2 + $0x10a] sm:$0xff]
      %v648 = vld [vmem:[#allocation2 + $0x112] sm:$0xff]
      %v649 = vld [vmem:[#allocation2 + $0x122] sm:$0xff]
      %v650 = vld [vmem:[#allocation2 + $0x12a] sm:$0xff]
      %v651 = vld [vmem:[#allocation2 + $0x13a] sm:$0xff]
      %v652 = vld [vmem:[#allocation2 + $0x142] sm:$0xff]
      %v653 = vld [vmem:[#allocation2 + $0x152] sm:$0xff]
      %v654 = vld [vmem:[#allocation2 + $0x15a] sm:$0xff]
      %v655 = vld [vmem:[#allocation2 + $0x16a] sm:$0xff]
      %v656 = vld [vmem:[#allocation2 + $0x172] sm:$0xff]
      %s657 = scalar_lea.vmem %s1, 256
      %v658 = vld [vmem:[%s657] sm:$0xff]
      %v659 = vld [vmem:[%s657 + $0x8] sm:$0xff]
      %v660 = vld [vmem:[%s657 + $0x10] sm:$0xff]
      %v661 = vld [vmem:[%s657 + $0x18] sm:$0xff]
      %v662 = vld [vmem:[%s657 + $0x20] sm:$0xff]
      %v663 = vld [vmem:[%s657 + $0x28] sm:$0xff]
      %v664 = vld [vmem:[%s657 + $0x30] sm:$0xff]
      %v665 = vld [vmem:[%s657 + $0x38] sm:$0xff]
      %v666 = vld [vmem:[%s657 + $0x40] sm:$0xff]
      %v667 = vld [vmem:[%s657 + $0x48] sm:$0xff]
      %v668 = vld [vmem:[%s657 + $0x50] sm:$0xff]
      %v669 = vld [vmem:[%s657 + $0x58] sm:$0xff]
      %v670 = vld [vmem:[%s657 + $0x60] sm:$0xff]
      %v671 = vld [vmem:[%s657 + $0x68] sm:$0xff]
      %v672 = vld [vmem:[%s657 + $0x70] sm:$0xff]
      %v673 = vld [vmem:[%s657 + $0x78] sm:$0xff]
      %674 = vmatpush.msra.mxu0 %v673
      %675 = vmatpush.msra.mxu0 %v672
      %676 = vmatpush.msra.mxu0 %v671
      %677 = vmatpush.msra.mxu0 %v670
      %678 = vmatpush.msra.mxu0 %v669
      %679 = vmatpush.msra.mxu0 %v668
      %680 = vmatpush.msra.mxu0 %v667
      %681 = vmatpush.msra.mxu0 %v666
      %682 = vmatpush.msra.mxu0 %v665
      %683 = vmatpush.msra.mxu0 %v664
      %684 = vmatpush.msra.mxu0 %v663
      %685 = vmatpush.msra.mxu0 %v662
      %686 = vmatpush.msra.mxu0 %v661
      %687 = vmatpush.msra.mxu0 %v660
      %688 = vmatpush.msra.mxu0 %v659
      %689 = vmatpush.msra.mxu0 %v658
      %690 = vmatmul.f32.gmra.mxu0 %v625
      %v691 = vpop.f32.mrf.mxu0
      %v692 = vadd.f32 0.0, %v691
      %693 = vmatmul.f32.gmra.mxu0 %v626
      %v694 = vpop.f32.mrf.mxu0
      %v695 = vadd.f32 0.0, %v694
      %696 = vmatmul.f32.gmra.mxu0 %v627
      %v697 = vpop.f32.mrf.mxu0
      %v698 = vadd.f32 0.0, %v697
      %699 = vmatmul.f32.gmra.mxu0 %v628
      %v700 = vpop.f32.mrf.mxu0
      %v701 = vadd.f32 0.0, %v700
      %702 = vmatmul.f32.gmra.mxu0 %v629
      %v703 = vpop.f32.mrf.mxu0
      %v704 = vadd.f32 0.0, %v703
      %705 = vmatmul.f32.gmra.mxu0 %v630
      %v706 = vpop.f32.mrf.mxu0
      %v707 = vadd.f32 0.0, %v706
      %708 = vmatmul.f32.gmra.mxu0 %v631
      %v709 = vpop.f32.mrf.mxu0
      %v710 = vadd.f32 0.0, %v709
      %711 = vmatmul.f32.gmra.mxu0 %v632
      %v712 = vpop.f32.mrf.mxu0
      %v713 = vadd.f32 0.0, %v712
      %714 = vmatmul.f32.gmra.mxu0 %v633
      %v715 = vpop.f32.mrf.mxu0
      %v716 = vadd.f32 0.0, %v715
      %717 = vmatmul.f32.gmra.mxu0 %v634
      %v718 = vpop.f32.mrf.mxu0
      %v719 = vadd.f32 0.0, %v718
      %720 = vmatmul.f32.gmra.mxu0 %v635
      %v721 = vpop.f32.mrf.mxu0
      %v722 = vadd.f32 0.0, %v721
      %723 = vmatmul.f32.gmra.mxu0 %v636
      %v724 = vpop.f32.mrf.mxu0
      %v725 = vadd.f32 0.0, %v724
      %726 = vmatmul.f32.gmra.mxu0 %v637
      %v727 = vpop.f32.mrf.mxu0
      %v728 = vadd.f32 0.0, %v727
      %729 = vmatmul.f32.gmra.mxu0 %v638
      %v730 = vpop.f32.mrf.mxu0
      %v731 = vadd.f32 0.0, %v730
      %732 = vmatmul.f32.gmra.mxu0 %v639
      %v733 = vpop.f32.mrf.mxu0
      %v734 = vadd.f32 0.0, %v733
      %735 = vmatmul.f32.gmra.mxu0 %v640
      %v736 = vpop.f32.mrf.mxu0
      %v737 = vadd.f32 0.0, %v736
      %738 = vmatmul.f32.gmra.mxu0 %v641
      %v739 = vpop.f32.mrf.mxu0
      %v740 = vadd.f32 0.0, %v739
      %741 = vmatmul.f32.gmra.mxu0 %v642
      %v742 = vpop.f32.mrf.mxu0
      %v743 = vadd.f32 0.0, %v742
      %744 = vmatmul.f32.gmra.mxu0 %v643
      %v745 = vpop.f32.mrf.mxu0
      %v746 = vadd.f32 0.0, %v745
      %747 = vmatmul.f32.gmra.mxu0 %v644
      %v748 = vpop.f32.mrf.mxu0
      %v749 = vadd.f32 0.0, %v748
      %750 = vmatmul.f32.gmra.mxu0 %v645
      %v751 = vpop.f32.mrf.mxu0
      %v752 = vadd.f32 0.0, %v751
      %753 = vmatmul.f32.gmra.mxu0 %v646
      %v754 = vpop.f32.mrf.mxu0
      %v755 = vadd.f32 0.0, %v754
      %756 = vmatmul.f32.gmra.mxu0 %v647
      %v757 = vpop.f32.mrf.mxu0
      %v758 = vadd.f32 0.0, %v757
      %759 = vmatmul.f32.gmra.mxu0 %v648
      %v760 = vpop.f32.mrf.mxu0
      %v761 = vadd.f32 0.0, %v760
      %762 = vmatmul.f32.gmra.mxu0 %v649
      %v763 = vpop.f32.mrf.mxu0
      %v764 = vadd.f32 0.0, %v763
      %765 = vmatmul.f32.gmra.mxu0 %v650
      %v766 = vpop.f32.mrf.mxu0
      %v767 = vadd.f32 0.0, %v766
      %768 = vmatmul.f32.gmra.mxu0 %v651
      %v769 = vpop.f32.mrf.mxu0
      %v770 = vadd.f32 0.0, %v769
      %771 = vmatmul.f32.gmra.mxu0 %v652
      %v772 = vpop.f32.mrf.mxu0
      %v773 = vadd.f32 0.0, %v772
      %774 = vmatmul.f32.gmra.mxu0 %v653
      %v775 = vpop.f32.mrf.mxu0
      %v776 = vadd.f32 0.0, %v775
      %777 = vmatmul.f32.gmra.mxu0 %v654
      %v778 = vpop.f32.mrf.mxu0
      %v779 = vadd.f32 0.0, %v778
      %780 = vmatmul.f32.gmra.mxu0 %v655
      %v781 = vpop.f32.mrf.mxu0
      %v782 = vadd.f32 0.0, %v781
      %783 = vmatmul.f32.gmra.mxu0 %v656
      %v784 = vpop.f32.mrf.mxu0
      %v785 = vadd.f32 0.0, %v784
      %786 = vdwg.mxu0
      %v787 = vadd.f32 %v530, %v692
      %v788 = vadd.f32 %v533, %v695
      %v789 = vadd.f32 %v536, %v698
      %v790 = vadd.f32 %v539, %v701
      %v791 = vadd.f32 %v542, %v704
      %v792 = vadd.f32 %v545, %v707
      %v793 = vadd.f32 %v548, %v710
      %v794 = vadd.f32 %v551, %v713
      %v795 = vadd.f32 %v554, %v716
      %v796 = vadd.f32 %v557, %v719
      %v797 = vadd.f32 %v560, %v722
      %v798 = vadd.f32 %v563, %v725
      %v799 = vadd.f32 %v566, %v728
      %v800 = vadd.f32 %v569, %v731
      %v801 = vadd.f32 %v572, %v734
      %v802 = vadd.f32 %v575, %v737
      %v803 = vadd.f32 %v578, %v740
      %v804 = vadd.f32 %v581, %v743
      %v805 = vadd.f32 %v584, %v746
      %v806 = vadd.f32 %v587, %v749
      %v807 = vadd.f32 %v590, %v752
      %v808 = vadd.f32 %v593, %v755
      %v809 = vadd.f32 %v596, %v758
      %v810 = vadd.f32 %v599, %v761
      %v811 = vadd.f32 %v602, %v764
      %v812 = vadd.f32 %v605, %v767
      %v813 = vadd.f32 %v608, %v770
      %v814 = vadd.f32 %v611, %v773
      %v815 = vadd.f32 %v614, %v776
      %v816 = vadd.f32 %v617, %v779
      %v817 = vadd.f32 %v620, %v782
      %v818 = vadd.f32 %v623, %v785
      %v819 = vld [vmem:[%s268] sm:$0xff]
      %v820 = vld [vmem:[%s268 + $0x8] sm:$0xff]
      %v821 = vld [vmem:[%s268 + $0x18] sm:$0xff]
      %v822 = vld [vmem:[%s268 + $0x20] sm:$0xff]
      %v823 = vld [vmem:[%s268 + $0x30] sm:$0xff]
      %v824 = vld [vmem:[%s268 + $0x38] sm:$0xff]
      %v825 = vld [vmem:[%s268 + $0x48] sm:$0xff]
      %v826 = vld [vmem:[%s268 + $0x50] sm:$0xff]
      %v827 = vld [vmem:[%s268 + $0x60] sm:$0xff]
      %v828 = vld [vmem:[%s268 + $0x68] sm:$0xff]
      %v829 = vld [vmem:[%s268 + $0x78] sm:$0xff]
      %v830 = vld [vmem:[%s268 + $0x80] sm:$0xff]
      %v831 = vld [vmem:[%s268 + $0x90] sm:$0xff]
      %v832 = vld [vmem:[%s268 + $0x98] sm:$0xff]
      %v833 = vld [vmem:[%s268 + $0xa8] sm:$0xff]
      %v834 = vld [vmem:[%s268 + $0xb0] sm:$0xff]
      %v835 = vld [vmem:[%s268 + $0xc0] sm:$0xff]
      %v836 = vld [vmem:[%s268 + $0xc8] sm:$0xff]
      %v837 = vld [vmem:[%s268 + $0xd8] sm:$0xff]
      %v838 = vld [vmem:[%s268 + $0xe0] sm:$0xff]
      %v839 = vld [vmem:[%s268 + $0xf0] sm:$0xff]
      %v840 = vld [vmem:[%s268 + $0xf8] sm:$0xff]
      %v841 = vld [vmem:[%s268 + $0x108] sm:$0xff]
      %v842 = vld [vmem:[%s268 + $0x110] sm:$0xff]
      %v843 = vld [vmem:[%s268 + $0x120] sm:$0xff]
      %v844 = vld [vmem:[%s268 + $0x128] sm:$0xff]
      %v845 = vld [vmem:[%s268 + $0x138] sm:$0xff]
      %v846 = vld [vmem:[%s268 + $0x140] sm:$0xff]
      %v847 = vld [vmem:[%s268 + $0x150] sm:$0xff]
      %v848 = vld [vmem:[%s268 + $0x158] sm:$0xff]
      %v849 = vld [vmem:[%s268 + $0x168] sm:$0xff]
      %v850 = vld [vmem:[%s268 + $0x170] sm:$0xff]
      %s851 = scalar_lea.vmem %s1, 384
      %v852 = vld [vmem:[%s851] sm:$0xff]
      %v853 = vld [vmem:[%s851 + $0x8] sm:$0xff]
      %v854 = vld [vmem:[%s851 + $0x10] sm:$0xff]
      %v855 = vld [vmem:[%s851 + $0x18] sm:$0xff]
      %v856 = vld [vmem:[%s851 + $0x20] sm:$0xff]
      %v857 = vld [vmem:[%s851 + $0x28] sm:$0xff]
      %v858 = vld [vmem:[%s851 + $0x30] sm:$0xff]
      %v859 = vld [vmem:[%s851 + $0x38] sm:$0xff]
      %v860 = vld [vmem:[%s851 + $0x40] sm:$0xff]
      %v861 = vld [vmem:[%s851 + $0x48] sm:$0xff]
      %v862 = vld [vmem:[%s851 + $0x50] sm:$0xff]
      %v863 = vld [vmem:[%s851 + $0x58] sm:$0xff]
      %v864 = vld [vmem:[%s851 + $0x60] sm:$0xff]
      %v865 = vld [vmem:[%s851 + $0x68] sm:$0xff]
      %v866 = vld [vmem:[%s851 + $0x70] sm:$0xff]
      %v867 = vld [vmem:[%s851 + $0x78] sm:$0xff]
      %868 = vmatpush.msra.mxu0 %v867
      %869 = vmatpush.msra.mxu0 %v866
      %870 = vmatpush.msra.mxu0 %v865
      %871 = vmatpush.msra.mxu0 %v864
      %872 = vmatpush.msra.mxu0 %v863
      %873 = vmatpush.msra.mxu0 %v862
      %874 = vmatpush.msra.mxu0 %v861
      %875 = vmatpush.msra.mxu0 %v860
      %876 = vmatpush.msra.mxu0 %v859
      %877 = vmatpush.msra.mxu0 %v858
      %878 = vmatpush.msra.mxu0 %v857
      %879 = vmatpush.msra.mxu0 %v856
      %880 = vmatpush.msra.mxu0 %v855
      %881 = vmatpush.msra.mxu0 %v854
      %882 = vmatpush.msra.mxu0 %v853
      %883 = vmatpush.msra.mxu0 %v852
      %884 = vmatmul.f32.gmra.mxu0 %v819
      %v885 = vpop.f32.mrf.mxu0
      %v886 = vadd.f32 0.0, %v885
      %887 = vmatmul.f32.gmra.mxu0 %v820
      %v888 = vpop.f32.mrf.mxu0
      %v889 = vadd.f32 0.0, %v888
      %890 = vmatmul.f32.gmra.mxu0 %v821
      %v891 = vpop.f32.mrf.mxu0
      %v892 = vadd.f32 0.0, %v891
      %893 = vmatmul.f32.gmra.mxu0 %v822
      %v894 = vpop.f32.mrf.mxu0
      %v895 = vadd.f32 0.0, %v894
      %896 = vmatmul.f32.gmra.mxu0 %v823
      %v897 = vpop.f32.mrf.mxu0
      %v898 = vadd.f32 0.0, %v897
      %899 = vmatmul.f32.gmra.mxu0 %v824
      %v900 = vpop.f32.mrf.mxu0
      %v901 = vadd.f32 0.0, %v900
      %902 = vmatmul.f32.gmra.mxu0 %v825
      %v903 = vpop.f32.mrf.mxu0
      %v904 = vadd.f32 0.0, %v903
      %905 = vmatmul.f32.gmra.mxu0 %v826
      %v906 = vpop.f32.mrf.mxu0
      %v907 = vadd.f32 0.0, %v906
      %908 = vmatmul.f32.gmra.mxu0 %v827
      %v909 = vpop.f32.mrf.mxu0
      %v910 = vadd.f32 0.0, %v909
      %911 = vmatmul.f32.gmra.mxu0 %v828
      %v912 = vpop.f32.mrf.mxu0
      %v913 = vadd.f32 0.0, %v912
      %914 = vmatmul.f32.gmra.mxu0 %v829
      %v915 = vpop.f32.mrf.mxu0
      %v916 = vadd.f32 0.0, %v915
      %917 = vmatmul.f32.gmra.mxu0 %v830
      %v918 = vpop.f32.mrf.mxu0
      %v919 = vadd.f32 0.0, %v918
      %920 = vmatmul.f32.gmra.mxu0 %v831
      %v921 = vpop.f32.mrf.mxu0
      %v922 = vadd.f32 0.0, %v921
      %923 = vmatmul.f32.gmra.mxu0 %v832
      %v924 = vpop.f32.mrf.mxu0
      %v925 = vadd.f32 0.0, %v924
      %926 = vmatmul.f32.gmra.mxu0 %v833
      %v927 = vpop.f32.mrf.mxu0
      %v928 = vadd.f32 0.0, %v927
      %929 = vmatmul.f32.gmra.mxu0 %v834
      %v930 = vpop.f32.mrf.mxu0
      %v931 = vadd.f32 0.0, %v930
      %932 = vmatmul.f32.gmra.mxu0 %v835
      %v933 = vpop.f32.mrf.mxu0
      %v934 = vadd.f32 0.0, %v933
      %935 = vmatmul.f32.gmra.mxu0 %v836
      %v936 = vpop.f32.mrf.mxu0
      %v937 = vadd.f32 0.0, %v936
      %938 = vmatmul.f32.gmra.mxu0 %v837
      %v939 = vpop.f32.mrf.mxu0
      %v940 = vadd.f32 0.0, %v939
      %941 = vmatmul.f32.gmra.mxu0 %v838
      %v942 = vpop.f32.mrf.mxu0
      %v943 = vadd.f32 0.0, %v942
      %944 = vmatmul.f32.gmra.mxu0 %v839
      %v945 = vpop.f32.mrf.mxu0
      %v946 = vadd.f32 0.0, %v945
      %947 = vmatmul.f32.gmra.mxu0 %v840
      %v948 = vpop.f32.mrf.mxu0
      %v949 = vadd.f32 0.0, %v948
      %950 = vmatmul.f32.gmra.mxu0 %v841
      %v951 = vpop.f32.mrf.mxu0
      %v952 = vadd.f32 0.0, %v951
      %953 = vmatmul.f32.gmra.mxu0 %v842
      %v954 = vpop.f32.mrf.mxu0
      %v955 = vadd.f32 0.0, %v954
      %956 = vmatmul.f32.gmra.mxu0 %v843
      %v957 = vpop.f32.mrf.mxu0
      %v958 = vadd.f32 0.0, %v957
      %959 = vmatmul.f32.gmra.mxu0 %v844
      %v960 = vpop.f32.mrf.mxu0
      %v961 = vadd.f32 0.0, %v960
      %962 = vmatmul.f32.gmra.mxu0 %v845
      %v963 = vpop.f32.mrf.mxu0
      %v964 = vadd.f32 0.0, %v963
      %965 = vmatmul.f32.gmra.mxu0 %v846
      %v966 = vpop.f32.mrf.mxu0
      %v967 = vadd.f32 0.0, %v966
      %968 = vmatmul.f32.gmra.mxu0 %v847
      %v969 = vpop.f32.mrf.mxu0
      %v970 = vadd.f32 0.0, %v969
      %971 = vmatmul.f32.gmra.mxu0 %v848
      %v972 = vpop.f32.mrf.mxu0
      %v973 = vadd.f32 0.0, %v972
      %974 = vmatmul.f32.gmra.mxu0 %v849
      %v975 = vpop.f32.mrf.mxu0
      %v976 = vadd.f32 0.0, %v975
      %977 = vmatmul.f32.gmra.mxu0 %v850
      %v978 = vpop.f32.mrf.mxu0
      %v979 = vadd.f32 0.0, %v978
      %980 = vdwg.mxu0
      %v981 = vadd.f32 %v787, %v886
      %v982 = vadd.f32 %v788, %v889
      %v983 = vadd.f32 %v789, %v892
      %v984 = vadd.f32 %v790, %v895
      %v985 = vadd.f32 %v791, %v898
      %v986 = vadd.f32 %v792, %v901
      %v987 = vadd.f32 %v793, %v904
      %v988 = vadd.f32 %v794, %v907
      %v989 = vadd.f32 %v795, %v910
      %v990 = vadd.f32 %v796, %v913
      %v991 = vadd.f32 %v797, %v916
      %v992 = vadd.f32 %v798, %v919
      %v993 = vadd.f32 %v799, %v922
      %v994 = vadd.f32 %v800, %v925
      %v995 = vadd.f32 %v801, %v928
      %v996 = vadd.f32 %v802, %v931
      %v997 = vadd.f32 %v803, %v934
      %v998 = vadd.f32 %v804, %v937
      %v999 = vadd.f32 %v805, %v940
      %v1000 = vadd.f32 %v806, %v943
      %v1001 = vadd.f32 %v807, %v946
      %v1002 = vadd.f32 %v808, %v949
      %v1003 = vadd.f32 %v809, %v952
      %v1004 = vadd.f32 %v810, %v955
      %v1005 = vadd.f32 %v811, %v958
      %v1006 = vadd.f32 %v812, %v961
      %v1007 = vadd.f32 %v813, %v964
      %v1008 = vadd.f32 %v814, %v967
      %v1009 = vadd.f32 %v815, %v970
      %v1010 = vadd.f32 %v816, %v973
      %v1011 = vadd.f32 %v817, %v976
      %v1012 = vadd.f32 %v818, %v979
      %v1013 = vld [vmem:[%s268 + $0x1] sm:$0xff]
      %v1014 = vld [vmem:[%s268 + $0x9] sm:$0xff]
      %v1015 = vld [vmem:[%s268 + $0x19] sm:$0xff]
      %v1016 = vld [vmem:[%s268 + $0x21] sm:$0xff]
      %v1017 = vld [vmem:[%s268 + $0x31] sm:$0xff]
      %v1018 = vld [vmem:[%s268 + $0x39] sm:$0xff]
      %v1019 = vld [vmem:[%s268 + $0x49] sm:$0xff]
      %v1020 = vld [vmem:[%s268 + $0x51] sm:$0xff]
      %v1021 = vld [vmem:[%s268 + $0x61] sm:$0xff]
      %v1022 = vld [vmem:[%s268 + $0x69] sm:$0xff]
      %v1023 = vld [vmem:[%s268 + $0x79] sm:$0xff]
      %v1024 = vld [vmem:[%s268 + $0x81] sm:$0xff]
      %v1025 = vld [vmem:[%s268 + $0x91] sm:$0xff]
      %v1026 = vld [vmem:[%s268 + $0x99] sm:$0xff]
      %v1027 = vld [vmem:[%s268 + $0xa9] sm:$0xff]
      %v1028 = vld [vmem:[%s268 + $0xb1] sm:$0xff]
      %v1029 = vld [vmem:[%s268 + $0xc1] sm:$0xff]
      %v1030 = vld [vmem:[%s268 + $0xc9] sm:$0xff]
      %v1031 = vld [vmem:[%s268 + $0xd9] sm:$0xff]
      %v1032 = vld [vmem:[%s268 + $0xe1] sm:$0xff]
      %v1033 = vld [vmem:[%s268 + $0xf1] sm:$0xff]
      %v1034 = vld [vmem:[%s268 + $0xf9] sm:$0xff]
      %v1035 = vld [vmem:[%s268 + $0x109] sm:$0xff]
      %v1036 = vld [vmem:[%s268 + $0x111] sm:$0xff]
      %v1037 = vld [vmem:[%s268 + $0x121] sm:$0xff]
      %v1038 = vld [vmem:[%s268 + $0x129] sm:$0xff]
      %v1039 = vld [vmem:[%s268 + $0x139] sm:$0xff]
      %v1040 = vld [vmem:[%s268 + $0x141] sm:$0xff]
      %v1041 = vld [vmem:[%s268 + $0x151] sm:$0xff]
      %v1042 = vld [vmem:[%s268 + $0x159] sm:$0xff]
      %v1043 = vld [vmem:[%s268 + $0x169] sm:$0xff]
      %v1044 = vld [vmem:[%s268 + $0x171] sm:$0xff]
      %s1045 = scalar_lea.vmem %s1, 512
      %v1046 = vld [vmem:[%s1045] sm:$0xff]
      %v1047 = vld [vmem:[%s1045 + $0x8] sm:$0xff]
      %v1048 = vld [vmem:[%s1045 + $0x10] sm:$0xff]
      %v1049 = vld [vmem:[%s1045 + $0x18] sm:$0xff]
      %v1050 = vld [vmem:[%s1045 + $0x20] sm:$0xff]
      %v1051 = vld [vmem:[%s1045 + $0x28] sm:$0xff]
      %v1052 = vld [vmem:[%s1045 + $0x30] sm:$0xff]
      %v1053 = vld [vmem:[%s1045 + $0x38] sm:$0xff]
      %v1054 = vld [vmem:[%s1045 + $0x40] sm:$0xff]
      %v1055 = vld [vmem:[%s1045 + $0x48] sm:$0xff]
      %v1056 = vld [vmem:[%s1045 + $0x50] sm:$0xff]
      %v1057 = vld [vmem:[%s1045 + $0x58] sm:$0xff]
      %v1058 = vld [vmem:[%s1045 + $0x60] sm:$0xff]
      %v1059 = vld [vmem:[%s1045 + $0x68] sm:$0xff]
      %v1060 = vld [vmem:[%s1045 + $0x70] sm:$0xff]
      %v1061 = vld [vmem:[%s1045 + $0x78] sm:$0xff]
      %1062 = vmatpush.msra.mxu0 %v1061
      %1063 = vmatpush.msra.mxu0 %v1060
      %1064 = vmatpush.msra.mxu0 %v1059
      %1065 = vmatpush.msra.mxu0 %v1058
      %1066 = vmatpush.msra.mxu0 %v1057
      %1067 = vmatpush.msra.mxu0 %v1056
      %1068 = vmatpush.msra.mxu0 %v1055
      %1069 = vmatpush.msra.mxu0 %v1054
      %1070 = vmatpush.msra.mxu0 %v1053
      %1071 = vmatpush.msra.mxu0 %v1052
      %1072 = vmatpush.msra.mxu0 %v1051
      %1073 = vmatpush.msra.mxu0 %v1050
      %1074 = vmatpush.msra.mxu0 %v1049
      %1075 = vmatpush.msra.mxu0 %v1048
      %1076 = vmatpush.msra.mxu0 %v1047
      %1077 = vmatpush.msra.mxu0 %v1046
      %1078 = vmatmul.f32.gmra.mxu0 %v1013
      %v1079 = vpop.f32.mrf.mxu0
      %v1080 = vadd.f32 0.0, %v1079
      %1081 = vmatmul.f32.gmra.mxu0 %v1014
      %v1082 = vpop.f32.mrf.mxu0
      %v1083 = vadd.f32 0.0, %v1082
      %1084 = vmatmul.f32.gmra.mxu0 %v1015
      %v1085 = vpop.f32.mrf.mxu0
      %v1086 = vadd.f32 0.0, %v1085
      %1087 = vmatmul.f32.gmra.mxu0 %v1016
      %v1088 = vpop.f32.mrf.mxu0
      %v1089 = vadd.f32 0.0, %v1088
      %1090 = vmatmul.f32.gmra.mxu0 %v1017
      %v1091 = vpop.f32.mrf.mxu0
      %v1092 = vadd.f32 0.0, %v1091
      %1093 = vmatmul.f32.gmra.mxu0 %v1018
      %v1094 = vpop.f32.mrf.mxu0
      %v1095 = vadd.f32 0.0, %v1094
      %1096 = vmatmul.f32.gmra.mxu0 %v1019
      %v1097 = vpop.f32.mrf.mxu0
      %v1098 = vadd.f32 0.0, %v1097
      %1099 = vmatmul.f32.gmra.mxu0 %v1020
      %v1100 = vpop.f32.mrf.mxu0
      %v1101 = vadd.f32 0.0, %v1100
      %1102 = vmatmul.f32.gmra.mxu0 %v1021
      %v1103 = vpop.f32.mrf.mxu0
      %v1104 = vadd.f32 0.0, %v1103
      %1105 = vmatmul.f32.gmra.mxu0 %v1022
      %v1106 = vpop.f32.mrf.mxu0
      %v1107 = vadd.f32 0.0, %v1106
      %1108 = vmatmul.f32.gmra.mxu0 %v1023
      %v1109 = vpop.f32.mrf.mxu0
      %v1110 = vadd.f32 0.0, %v1109
      %1111 = vmatmul.f32.gmra.mxu0 %v1024
      %v1112 = vpop.f32.mrf.mxu0
      %v1113 = vadd.f32 0.0, %v1112
      %1114 = vmatmul.f32.gmra.mxu0 %v1025
      %v1115 = vpop.f32.mrf.mxu0
      %v1116 = vadd.f32 0.0, %v1115
      %1117 = vmatmul.f32.gmra.mxu0 %v1026
      %v1118 = vpop.f32.mrf.mxu0
      %v1119 = vadd.f32 0.0, %v1118
      %1120 = vmatmul.f32.gmra.mxu0 %v1027
      %v1121 = vpop.f32.mrf.mxu0
      %v1122 = vadd.f32 0.0, %v1121
      %1123 = vmatmul.f32.gmra.mxu0 %v1028
      %v1124 = vpop.f32.mrf.mxu0
      %v1125 = vadd.f32 0.0, %v1124
      %1126 = vmatmul.f32.gmra.mxu0 %v1029
      %v1127 = vpop.f32.mrf.mxu0
      %v1128 = vadd.f32 0.0, %v1127
      %1129 = vmatmul.f32.gmra.mxu0 %v1030
      %v1130 = vpop.f32.mrf.mxu0
      %v1131 = vadd.f32 0.0, %v1130
      %1132 = vmatmul.f32.gmra.mxu0 %v1031
      %v1133 = vpop.f32.mrf.mxu0
      %v1134 = vadd.f32 0.0, %v1133
      %1135 = vmatmul.f32.gmra.mxu0 %v1032
      %v1136 = vpop.f32.mrf.mxu0
      %v1137 = vadd.f32 0.0, %v1136
      %1138 = vmatmul.f32.gmra.mxu0 %v1033
      %v1139 = vpop.f32.mrf.mxu0
      %v1140 = vadd.f32 0.0, %v1139
      %1141 = vmatmul.f32.gmra.mxu0 %v1034
      %v1142 = vpop.f32.mrf.mxu0
      %v1143 = vadd.f32 0.0, %v1142
      %1144 = vmatmul.f32.gmra.mxu0 %v1035
      %v1145 = vpop.f32.mrf.mxu0
      %v1146 = vadd.f32 0.0, %v1145
      %1147 = vmatmul.f32.gmra.mxu0 %v1036
      %v1148 = vpop.f32.mrf.mxu0
      %v1149 = vadd.f32 0.0, %v1148
      %1150 = vmatmul.f32.gmra.mxu0 %v1037
      %v1151 = vpop.f32.mrf.mxu0
      %v1152 = vadd.f32 0.0, %v1151
      %1153 = vmatmul.f32.gmra.mxu0 %v1038
      %v1154 = vpop.f32.mrf.mxu0
      %v1155 = vadd.f32 0.0, %v1154
      %1156 = vmatmul.f32.gmra.mxu0 %v1039
      %v1157 = vpop.f32.mrf.mxu0
      %v1158 = vadd.f32 0.0, %v1157
      %1159 = vmatmul.f32.gmra.mxu0 %v1040
      %v1160 = vpop.f32.mrf.mxu0
      %v1161 = vadd.f32 0.0, %v1160
      %1162 = vmatmul.f32.gmra.mxu0 %v1041
      %v1163 = vpop.f32.mrf.mxu0
      %v1164 = vadd.f32 0.0, %v1163
      %1165 = vmatmul.f32.gmra.mxu0 %v1042
      %v1166 = vpop.f32.mrf.mxu0
      %v1167 = vadd.f32 0.0, %v1166
      %1168 = vmatmul.f32.gmra.mxu0 %v1043
      %v1169 = vpop.f32.mrf.mxu0
      %v1170 = vadd.f32 0.0, %v1169
      %1171 = vmatmul.f32.gmra.mxu0 %v1044
      %v1172 = vpop.f32.mrf.mxu0
      %v1173 = vadd.f32 0.0, %v1172
      %1174 = vdwg.mxu0
      %v1175 = vadd.f32 %v981, %v1080
      %v1176 = vadd.f32 %v982, %v1083
      %v1177 = vadd.f32 %v983, %v1086
      %v1178 = vadd.f32 %v984, %v1089
      %v1179 = vadd.f32 %v985, %v1092
      %v1180 = vadd.f32 %v986, %v1095
      %v1181 = vadd.f32 %v987, %v1098
      %v1182 = vadd.f32 %v988, %v1101
      %v1183 = vadd.f32 %v989, %v1104
      %v1184 = vadd.f32 %v990, %v1107
      %v1185 = vadd.f32 %v991, %v1110
      %v1186 = vadd.f32 %v992, %v1113
      %v1187 = vadd.f32 %v993, %v1116
      %v1188 = vadd.f32 %v994, %v1119
      %v1189 = vadd.f32 %v995, %v1122
      %v1190 = vadd.f32 %v996, %v1125
      %v1191 = vadd.f32 %v997, %v1128
      %v1192 = vadd.f32 %v998, %v1131
      %v1193 = vadd.f32 %v999, %v1134
      %v1194 = vadd.f32 %v1000, %v1137
      %v1195 = vadd.f32 %v1001, %v1140
      %v1196 = vadd.f32 %v1002, %v1143
      %v1197 = vadd.f32 %v1003, %v1146
      %v1198 = vadd.f32 %v1004, %v1149
      %v1199 = vadd.f32 %v1005, %v1152
      %v1200 = vadd.f32 %v1006, %v1155
      %v1201 = vadd.f32 %v1007, %v1158
      %v1202 = vadd.f32 %v1008, %v1161
      %v1203 = vadd.f32 %v1009, %v1164
      %v1204 = vadd.f32 %v1010, %v1167
      %v1205 = vadd.f32 %v1011, %v1170
      %v1206 = vadd.f32 %v1012, %v1173
      %v1207 = vld [vmem:[%s268 + $0x2] sm:$0xff]
      %v1208 = vld [vmem:[%s268 + $0xa] sm:$0xff]
      %v1209 = vld [vmem:[%s268 + $0x1a] sm:$0xff]
      %v1210 = vld [vmem:[%s268 + $0x22] sm:$0xff]
      %v1211 = vld [vmem:[%s268 + $0x32] sm:$0xff]
      %v1212 = vld [vmem:[%s268 + $0x3a] sm:$0xff]
      %v1213 = vld [vmem:[%s268 + $0x4a] sm:$0xff]
      %v1214 = vld [vmem:[%s268 + $0x52] sm:$0xff]
      %v1215 = vld [vmem:[%s268 + $0x62] sm:$0xff]
      %v1216 = vld [vmem:[%s268 + $0x6a] sm:$0xff]
      %v1217 = vld [vmem:[%s268 + $0x7a] sm:$0xff]
      %v1218 = vld [vmem:[%s268 + $0x82] sm:$0xff]
      %v1219 = vld [vmem:[%s268 + $0x92] sm:$0xff]
      %v1220 = vld [vmem:[%s268 + $0x9a] sm:$0xff]
      %v1221 = vld [vmem:[%s268 + $0xaa] sm:$0xff]
      %v1222 = vld [vmem:[%s268 + $0xb2] sm:$0xff]
      %v1223 = vld [vmem:[%s268 + $0xc2] sm:$0xff]
      %v1224 = vld [vmem:[%s268 + $0xca] sm:$0xff]
      %v1225 = vld [vmem:[%s268 + $0xda] sm:$0xff]
      %v1226 = vld [vmem:[%s268 + $0xe2] sm:$0xff]
      %v1227 = vld [vmem:[%s268 + $0xf2] sm:$0xff]
      %v1228 = vld [vmem:[%s268 + $0xfa] sm:$0xff]
      %v1229 = vld [vmem:[%s268 + $0x10a] sm:$0xff]
      %v1230 = vld [vmem:[%s268 + $0x112] sm:$0xff]
      %v1231 = vld [vmem:[%s268 + $0x122] sm:$0xff]
      %v1232 = vld [vmem:[%s268 + $0x12a] sm:$0xff]
      %v1233 = vld [vmem:[%s268 + $0x13a] sm:$0xff]
      %v1234 = vld [vmem:[%s268 + $0x142] sm:$0xff]
      %v1235 = vld [vmem:[%s268 + $0x152] sm:$0xff]
      %v1236 = vld [vmem:[%s268 + $0x15a] sm:$0xff]
      %v1237 = vld [vmem:[%s268 + $0x16a] sm:$0xff]
      %v1238 = vld [vmem:[%s268 + $0x172] sm:$0xff]
      %s1239 = scalar_lea.vmem %s1, 640
      %v1240 = vld [vmem:[%s1239] sm:$0xff]
      %v1241 = vld [vmem:[%s1239 + $0x8] sm:$0xff]
      %v1242 = vld [vmem:[%s1239 + $0x10] sm:$0xff]
      %v1243 = vld [vmem:[%s1239 + $0x18] sm:$0xff]
      %v1244 = vld [vmem:[%s1239 + $0x20] sm:$0xff]
      %v1245 = vld [vmem:[%s1239 + $0x28] sm:$0xff]
      %v1246 = vld [vmem:[%s1239 + $0x30] sm:$0xff]
      %v1247 = vld [vmem:[%s1239 + $0x38] sm:$0xff]
      %v1248 = vld [vmem:[%s1239 + $0x40] sm:$0xff]
      %v1249 = vld [vmem:[%s1239 + $0x48] sm:$0xff]
      %v1250 = vld [vmem:[%s1239 + $0x50] sm:$0xff]
      %v1251 = vld [vmem:[%s1239 + $0x58] sm:$0xff]
      %v1252 = vld [vmem:[%s1239 + $0x60] sm:$0xff]
      %v1253 = vld [vmem:[%s1239 + $0x68] sm:$0xff]
      %v1254 = vld [vmem:[%s1239 + $0x70] sm:$0xff]
      %v1255 = vld [vmem:[%s1239 + $0x78] sm:$0xff]
      %1256 = vmatpush.msra.mxu0 %v1255
      %1257 = vmatpush.msra.mxu0 %v1254
      %1258 = vmatpush.msra.mxu0 %v1253
      %1259 = vmatpush.msra.mxu0 %v1252
      %1260 = vmatpush.msra.mxu0 %v1251
      %1261 = vmatpush.msra.mxu0 %v1250
      %1262 = vmatpush.msra.mxu0 %v1249
      %1263 = vmatpush.msra.mxu0 %v1248
      %1264 = vmatpush.msra.mxu0 %v1247
      %1265 = vmatpush.msra.mxu0 %v1246
      %1266 = vmatpush.msra.mxu0 %v1245
      %1267 = vmatpush.msra.mxu0 %v1244
      %1268 = vmatpush.msra.mxu0 %v1243
      %1269 = vmatpush.msra.mxu0 %v1242
      %1270 = vmatpush.msra.mxu0 %v1241
      %1271 = vmatpush.msra.mxu0 %v1240
      %1272 = vmatmul.f32.gmra.mxu0 %v1207
      %v1273 = vpop.f32.mrf.mxu0
      %v1274 = vadd.f32 0.0, %v1273
      %1275 = vmatmul.f32.gmra.mxu0 %v1208
      %v1276 = vpop.f32.mrf.mxu0
      %v1277 = vadd.f32 0.0, %v1276
      %1278 = vmatmul.f32.gmra.mxu0 %v1209
      %v1279 = vpop.f32.mrf.mxu0
      %v1280 = vadd.f32 0.0, %v1279
      %1281 = vmatmul.f32.gmra.mxu0 %v1210
      %v1282 = vpop.f32.mrf.mxu0
      %v1283 = vadd.f32 0.0, %v1282
      %1284 = vmatmul.f32.gmra.mxu0 %v1211
      %v1285 = vpop.f32.mrf.mxu0
      %v1286 = vadd.f32 0.0, %v1285
      %1287 = vmatmul.f32.gmra.mxu0 %v1212
      %v1288 = vpop.f32.mrf.mxu0
      %v1289 = vadd.f32 0.0, %v1288
      %1290 = vmatmul.f32.gmra.mxu0 %v1213
      %v1291 = vpop.f32.mrf.mxu0
      %v1292 = vadd.f32 0.0, %v1291
      %1293 = vmatmul.f32.gmra.mxu0 %v1214
      %v1294 = vpop.f32.mrf.mxu0
      %v1295 = vadd.f32 0.0, %v1294
      %1296 = vmatmul.f32.gmra.mxu0 %v1215
      %v1297 = vpop.f32.mrf.mxu0
      %v1298 = vadd.f32 0.0, %v1297
      %1299 = vmatmul.f32.gmra.mxu0 %v1216
      %v1300 = vpop.f32.mrf.mxu0
      %v1301 = vadd.f32 0.0, %v1300
      %1302 = vmatmul.f32.gmra.mxu0 %v1217
      %v1303 = vpop.f32.mrf.mxu0
      %v1304 = vadd.f32 0.0, %v1303
      %1305 = vmatmul.f32.gmra.mxu0 %v1218
      %v1306 = vpop.f32.mrf.mxu0
      %v1307 = vadd.f32 0.0, %v1306
      %1308 = vmatmul.f32.gmra.mxu0 %v1219
      %v1309 = vpop.f32.mrf.mxu0
      %v1310 = vadd.f32 0.0, %v1309
      %1311 = vmatmul.f32.gmra.mxu0 %v1220
      %v1312 = vpop.f32.mrf.mxu0
      %v1313 = vadd.f32 0.0, %v1312
      %1314 = vmatmul.f32.gmra.mxu0 %v1221
      %v1315 = vpop.f32.mrf.mxu0
      %v1316 = vadd.f32 0.0, %v1315
      %1317 = vmatmul.f32.gmra.mxu0 %v1222
      %v1318 = vpop.f32.mrf.mxu0
      %v1319 = vadd.f32 0.0, %v1318
      %1320 = vmatmul.f32.gmra.mxu0 %v1223
      %v1321 = vpop.f32.mrf.mxu0
      %v1322 = vadd.f32 0.0, %v1321
      %1323 = vmatmul.f32.gmra.mxu0 %v1224
      %v1324 = vpop.f32.mrf.mxu0
      %v1325 = vadd.f32 0.0, %v1324
      %1326 = vmatmul.f32.gmra.mxu0 %v1225
      %v1327 = vpop.f32.mrf.mxu0
      %v1328 = vadd.f32 0.0, %v1327
      %1329 = vmatmul.f32.gmra.mxu0 %v1226
      %v1330 = vpop.f32.mrf.mxu0
      %v1331 = vadd.f32 0.0, %v1330
      %1332 = vmatmul.f32.gmra.mxu0 %v1227
      %v1333 = vpop.f32.mrf.mxu0
      %v1334 = vadd.f32 0.0, %v1333
      %1335 = vmatmul.f32.gmra.mxu0 %v1228
      %v1336 = vpop.f32.mrf.mxu0
      %v1337 = vadd.f32 0.0, %v1336
      %1338 = vmatmul.f32.gmra.mxu0 %v1229
      %v1339 = vpop.f32.mrf.mxu0
      %v1340 = vadd.f32 0.0, %v1339
      %1341 = vmatmul.f32.gmra.mxu0 %v1230
      %v1342 = vpop.f32.mrf.mxu0
      %v1343 = vadd.f32 0.0, %v1342
      %1344 = vmatmul.f32.gmra.mxu0 %v1231
      %v1345 = vpop.f32.mrf.mxu0
      %v1346 = vadd.f32 0.0, %v1345
      %1347 = vmatmul.f32.gmra.mxu0 %v1232
      %v1348 = vpop.f32.mrf.mxu0
      %v1349 = vadd.f32 0.0, %v1348
      %1350 = vmatmul.f32.gmra.mxu0 %v1233
      %v1351 = vpop.f32.mrf.mxu0
      %v1352 = vadd.f32 0.0, %v1351
      %1353 = vmatmul.f32.gmra.mxu0 %v1234
      %v1354 = vpop.f32.mrf.mxu0
      %v1355 = vadd.f32 0.0, %v1354
      %1356 = vmatmul.f32.gmra.mxu0 %v1235
      %v1357 = vpop.f32.mrf.mxu0
      %v1358 = vadd.f32 0.0, %v1357
      %1359 = vmatmul.f32.gmra.mxu0 %v1236
      %v1360 = vpop.f32.mrf.mxu0
      %v1361 = vadd.f32 0.0, %v1360
      %1362 = vmatmul.f32.gmra.mxu0 %v1237
      %v1363 = vpop.f32.mrf.mxu0
      %v1364 = vadd.f32 0.0, %v1363
      %1365 = vmatmul.f32.gmra.mxu0 %v1238
      %v1366 = vpop.f32.mrf.mxu0
      %v1367 = vadd.f32 0.0, %v1366
      %1368 = vdwg.mxu0
      %v1369 = vadd.f32 %v1175, %v1274
      %v1370 = vadd.f32 %v1176, %v1277
      %v1371 = vadd.f32 %v1177, %v1280
      %v1372 = vadd.f32 %v1178, %v1283
      %v1373 = vadd.f32 %v1179, %v1286
      %v1374 = vadd.f32 %v1180, %v1289
      %v1375 = vadd.f32 %v1181, %v1292
      %v1376 = vadd.f32 %v1182, %v1295
      %v1377 = vadd.f32 %v1183, %v1298
      %v1378 = vadd.f32 %v1184, %v1301
      %v1379 = vadd.f32 %v1185, %v1304
      %v1380 = vadd.f32 %v1186, %v1307
      %v1381 = vadd.f32 %v1187, %v1310
      %v1382 = vadd.f32 %v1188, %v1313
      %v1383 = vadd.f32 %v1189, %v1316
      %v1384 = vadd.f32 %v1190, %v1319
      %v1385 = vadd.f32 %v1191, %v1322
      %v1386 = vadd.f32 %v1192, %v1325
      %v1387 = vadd.f32 %v1193, %v1328
      %v1388 = vadd.f32 %v1194, %v1331
      %v1389 = vadd.f32 %v1195, %v1334
      %v1390 = vadd.f32 %v1196, %v1337
      %v1391 = vadd.f32 %v1197, %v1340
      %v1392 = vadd.f32 %v1198, %v1343
      %v1393 = vadd.f32 %v1199, %v1346
      %v1394 = vadd.f32 %v1200, %v1349
      %v1395 = vadd.f32 %v1201, %v1352
      %v1396 = vadd.f32 %v1202, %v1355
      %v1397 = vadd.f32 %v1203, %v1358
      %v1398 = vadd.f32 %v1204, %v1361
      %v1399 = vadd.f32 %v1205, %v1364
      %v1400 = vadd.f32 %v1206, %v1367
      %s1401 = scalar_lea.vmem [#allocation2], 48
      %v1402 = vld [vmem:[%s1401] sm:$0xff]
      %v1403 = vld [vmem:[%s1401 + $0x8] sm:$0xff]
      %v1404 = vld [vmem:[%s1401 + $0x18] sm:$0xff]
      %v1405 = vld [vmem:[%s1401 + $0x20] sm:$0xff]
      %v1406 = vld [vmem:[%s1401 + $0x30] sm:$0xff]
      %v1407 = vld [vmem:[%s1401 + $0x38] sm:$0xff]
      %v1408 = vld [vmem:[%s1401 + $0x48] sm:$0xff]
      %v1409 = vld [vmem:[%s1401 + $0x50] sm:$0xff]
      %v1410 = vld [vmem:[%s1401 + $0x60] sm:$0xff]
      %v1411 = vld [vmem:[%s1401 + $0x68] sm:$0xff]
      %v1412 = vld [vmem:[%s1401 + $0x78] sm:$0xff]
      %v1413 = vld [vmem:[%s1401 + $0x80] sm:$0xff]
      %v1414 = vld [vmem:[%s1401 + $0x90] sm:$0xff]
      %v1415 = vld [vmem:[%s1401 + $0x98] sm:$0xff]
      %v1416 = vld [vmem:[%s1401 + $0xa8] sm:$0xff]
      %v1417 = vld [vmem:[%s1401 + $0xb0] sm:$0xff]
      %v1418 = vld [vmem:[%s1401 + $0xc0] sm:$0xff]
      %v1419 = vld [vmem:[%s1401 + $0xc8] sm:$0xff]
      %v1420 = vld [vmem:[%s1401 + $0xd8] sm:$0xff]
      %v1421 = vld [vmem:[%s1401 + $0xe0] sm:$0xff]
      %v1422 = vld [vmem:[%s1401 + $0xf0] sm:$0xff]
      %v1423 = vld [vmem:[%s1401 + $0xf8] sm:$0xff]
      %v1424 = vld [vmem:[%s1401 + $0x108] sm:$0xff]
      %v1425 = vld [vmem:[%s1401 + $0x110] sm:$0xff]
      %v1426 = vld [vmem:[%s1401 + $0x120] sm:$0xff]
      %v1427 = vld [vmem:[%s1401 + $0x128] sm:$0xff]
      %v1428 = vld [vmem:[%s1401 + $0x138] sm:$0xff]
      %v1429 = vld [vmem:[%s1401 + $0x140] sm:$0xff]
      %v1430 = vld [vmem:[%s1401 + $0x150] sm:$0xff]
      %v1431 = vld [vmem:[%s1401 + $0x158] sm:$0xff]
      %v1432 = vld [vmem:[%s1401 + $0x168] sm:$0xff]
      %v1433 = vld [vmem:[%s1401 + $0x170] sm:$0xff]
      %s1434 = scalar_lea.vmem %s1, 768
      %v1435 = vld [vmem:[%s1434] sm:$0xff]
      %v1436 = vld [vmem:[%s1434 + $0x8] sm:$0xff]
      %v1437 = vld [vmem:[%s1434 + $0x10] sm:$0xff]
      %v1438 = vld [vmem:[%s1434 + $0x18] sm:$0xff]
      %v1439 = vld [vmem:[%s1434 + $0x20] sm:$0xff]
      %v1440 = vld [vmem:[%s1434 + $0x28] sm:$0xff]
      %v1441 = vld [vmem:[%s1434 + $0x30] sm:$0xff]
      %v1442 = vld [vmem:[%s1434 + $0x38] sm:$0xff]
      %v1443 = vld [vmem:[%s1434 + $0x40] sm:$0xff]
      %v1444 = vld [vmem:[%s1434 + $0x48] sm:$0xff]
      %v1445 = vld [vmem:[%s1434 + $0x50] sm:$0xff]
      %v1446 = vld [vmem:[%s1434 + $0x58] sm:$0xff]
      %v1447 = vld [vmem:[%s1434 + $0x60] sm:$0xff]
      %v1448 = vld [vmem:[%s1434 + $0x68] sm:$0xff]
      %v1449 = vld [vmem:[%s1434 + $0x70] sm:$0xff]
      %v1450 = vld [vmem:[%s1434 + $0x78] sm:$0xff]
      %1451 = vmatpush.msra.mxu0 %v1450
      %1452 = vmatpush.msra.mxu0 %v1449
      %1453 = vmatpush.msra.mxu0 %v1448
      %1454 = vmatpush.msra.mxu0 %v1447
      %1455 = vmatpush.msra.mxu0 %v1446
      %1456 = vmatpush.msra.mxu0 %v1445
      %1457 = vmatpush.msra.mxu0 %v1444
      %1458 = vmatpush.msra.mxu0 %v1443
      %1459 = vmatpush.msra.mxu0 %v1442
      %1460 = vmatpush.msra.mxu0 %v1441
      %1461 = vmatpush.msra.mxu0 %v1440
      %1462 = vmatpush.msra.mxu0 %v1439
      %1463 = vmatpush.msra.mxu0 %v1438
      %1464 = vmatpush.msra.mxu0 %v1437
      %1465 = vmatpush.msra.mxu0 %v1436
      %1466 = vmatpush.msra.mxu0 %v1435
      %1467 = vmatmul.f32.gmra.mxu0 %v1402
      %v1468 = vpop.f32.mrf.mxu0
      %v1469 = vadd.f32 0.0, %v1468
      %1470 = vmatmul.f32.gmra.mxu0 %v1403
      %v1471 = vpop.f32.mrf.mxu0
      %v1472 = vadd.f32 0.0, %v1471
      %1473 = vmatmul.f32.gmra.mxu0 %v1404
      %v1474 = vpop.f32.mrf.mxu0
      %v1475 = vadd.f32 0.0, %v1474
      %1476 = vmatmul.f32.gmra.mxu0 %v1405
      %v1477 = vpop.f32.mrf.mxu0
      %v1478 = vadd.f32 0.0, %v1477
      %1479 = vmatmul.f32.gmra.mxu0 %v1406
      %v1480 = vpop.f32.mrf.mxu0
      %v1481 = vadd.f32 0.0, %v1480
      %1482 = vmatmul.f32.gmra.mxu0 %v1407
      %v1483 = vpop.f32.mrf.mxu0
      %v1484 = vadd.f32 0.0, %v1483
      %1485 = vmatmul.f32.gmra.mxu0 %v1408
      %v1486 = vpop.f32.mrf.mxu0
      %v1487 = vadd.f32 0.0, %v1486
      %1488 = vmatmul.f32.gmra.mxu0 %v1409
      %v1489 = vpop.f32.mrf.mxu0
      %v1490 = vadd.f32 0.0, %v1489
      %1491 = vmatmul.f32.gmra.mxu0 %v1410
      %v1492 = vpop.f32.mrf.mxu0
      %v1493 = vadd.f32 0.0, %v1492
      %1494 = vmatmul.f32.gmra.mxu0 %v1411
      %v1495 = vpop.f32.mrf.mxu0
      %v1496 = vadd.f32 0.0, %v1495
      %1497 = vmatmul.f32.gmra.mxu0 %v1412
      %v1498 = vpop.f32.mrf.mxu0
      %v1499 = vadd.f32 0.0, %v1498
      %1500 = vmatmul.f32.gmra.mxu0 %v1413
      %v1501 = vpop.f32.mrf.mxu0
      %v1502 = vadd.f32 0.0, %v1501
      %1503 = vmatmul.f32.gmra.mxu0 %v1414
      %v1504 = vpop.f32.mrf.mxu0
      %v1505 = vadd.f32 0.0, %v1504
      %1506 = vmatmul.f32.gmra.mxu0 %v1415
      %v1507 = vpop.f32.mrf.mxu0
      %v1508 = vadd.f32 0.0, %v1507
      %1509 = vmatmul.f32.gmra.mxu0 %v1416
      %v1510 = vpop.f32.mrf.mxu0
      %v1511 = vadd.f32 0.0, %v1510
      %1512 = vmatmul.f32.gmra.mxu0 %v1417
      %v1513 = vpop.f32.mrf.mxu0
      %v1514 = vadd.f32 0.0, %v1513
      %1515 = vmatmul.f32.gmra.mxu0 %v1418
      %v1516 = vpop.f32.mrf.mxu0
      %v1517 = vadd.f32 0.0, %v1516
      %1518 = vmatmul.f32.gmra.mxu0 %v1419
      %v1519 = vpop.f32.mrf.mxu0
      %v1520 = vadd.f32 0.0, %v1519
      %1521 = vmatmul.f32.gmra.mxu0 %v1420
      %v1522 = vpop.f32.mrf.mxu0
      %v1523 = vadd.f32 0.0, %v1522
      %1524 = vmatmul.f32.gmra.mxu0 %v1421
      %v1525 = vpop.f32.mrf.mxu0
      %v1526 = vadd.f32 0.0, %v1525
      %1527 = vmatmul.f32.gmra.mxu0 %v1422
      %v1528 = vpop.f32.mrf.mxu0
      %v1529 = vadd.f32 0.0, %v1528
      %1530 = vmatmul.f32.gmra.mxu0 %v1423
      %v1531 = vpop.f32.mrf.mxu0
      %v1532 = vadd.f32 0.0, %v1531
      %1533 = vmatmul.f32.gmra.mxu0 %v1424
      %v1534 = vpop.f32.mrf.mxu0
      %v1535 = vadd.f32 0.0, %v1534
      %1536 = vmatmul.f32.gmra.mxu0 %v1425
      %v1537 = vpop.f32.mrf.mxu0
      %v1538 = vadd.f32 0.0, %v1537
      %1539 = vmatmul.f32.gmra.mxu0 %v1426
      %v1540 = vpop.f32.mrf.mxu0
      %v1541 = vadd.f32 0.0, %v1540
      %1542 = vmatmul.f32.gmra.mxu0 %v1427
      %v1543 = vpop.f32.mrf.mxu0
      %v1544 = vadd.f32 0.0, %v1543
      %1545 = vmatmul.f32.gmra.mxu0 %v1428
      %v1546 = vpop.f32.mrf.mxu0
      %v1547 = vadd.f32 0.0, %v1546
      %1548 = vmatmul.f32.gmra.mxu0 %v1429
      %v1549 = vpop.f32.mrf.mxu0
      %v1550 = vadd.f32 0.0, %v1549
      %1551 = vmatmul.f32.gmra.mxu0 %v1430
      %v1552 = vpop.f32.mrf.mxu0
      %v1553 = vadd.f32 0.0, %v1552
      %1554 = vmatmul.f32.gmra.mxu0 %v1431
      %v1555 = vpop.f32.mrf.mxu0
      %v1556 = vadd.f32 0.0, %v1555
      %1557 = vmatmul.f32.gmra.mxu0 %v1432
      %v1558 = vpop.f32.mrf.mxu0
      %v1559 = vadd.f32 0.0, %v1558
      %1560 = vmatmul.f32.gmra.mxu0 %v1433
      %v1561 = vpop.f32.mrf.mxu0
      %v1562 = vadd.f32 0.0, %v1561
      %1563 = vdwg.mxu0
      %v1564 = vadd.f32 %v1369, %v1469
      %v1565 = vadd.f32 %v1370, %v1472
      %v1566 = vadd.f32 %v1371, %v1475
      %v1567 = vadd.f32 %v1372, %v1478
      %v1568 = vadd.f32 %v1373, %v1481
      %v1569 = vadd.f32 %v1374, %v1484
      %v1570 = vadd.f32 %v1375, %v1487
      %v1571 = vadd.f32 %v1376, %v1490
      %v1572 = vadd.f32 %v1377, %v1493
      %v1573 = vadd.f32 %v1378, %v1496
      %v1574 = vadd.f32 %v1379, %v1499
      %v1575 = vadd.f32 %v1380, %v1502
      %v1576 = vadd.f32 %v1381, %v1505
      %v1577 = vadd.f32 %v1382, %v1508
      %v1578 = vadd.f32 %v1383, %v1511
      %v1579 = vadd.f32 %v1384, %v1514
      %v1580 = vadd.f32 %v1385, %v1517
      %v1581 = vadd.f32 %v1386, %v1520
      %v1582 = vadd.f32 %v1387, %v1523
      %v1583 = vadd.f32 %v1388, %v1526
      %v1584 = vadd.f32 %v1389, %v1529
      %v1585 = vadd.f32 %v1390, %v1532
      %v1586 = vadd.f32 %v1391, %v1535
      %v1587 = vadd.f32 %v1392, %v1538
      %v1588 = vadd.f32 %v1393, %v1541
      %v1589 = vadd.f32 %v1394, %v1544
      %v1590 = vadd.f32 %v1395, %v1547
      %v1591 = vadd.f32 %v1396, %v1550
      %v1592 = vadd.f32 %v1397, %v1553
      %v1593 = vadd.f32 %v1398, %v1556
      %v1594 = vadd.f32 %v1399, %v1559
      %v1595 = vadd.f32 %v1400, %v1562
      %v1596 = vld [vmem:[%s1401 + $0x1] sm:$0xff]
      %v1597 = vld [vmem:[%s1401 + $0x9] sm:$0xff]
      %v1598 = vld [vmem:[%s1401 + $0x19] sm:$0xff]
      %v1599 = vld [vmem:[%s1401 + $0x21] sm:$0xff]
      %v1600 = vld [vmem:[%s1401 + $0x31] sm:$0xff]
      %v1601 = vld [vmem:[%s1401 + $0x39] sm:$0xff]
      %v1602 = vld [vmem:[%s1401 + $0x49] sm:$0xff]
      %v1603 = vld [vmem:[%s1401 + $0x51] sm:$0xff]
      %v1604 = vld [vmem:[%s1401 + $0x61] sm:$0xff]
      %v1605 = vld [vmem:[%s1401 + $0x69] sm:$0xff]
      %v1606 = vld [vmem:[%s1401 + $0x79] sm:$0xff]
      %v1607 = vld [vmem:[%s1401 + $0x81] sm:$0xff]
      %v1608 = vld [vmem:[%s1401 + $0x91] sm:$0xff]
      %v1609 = vld [vmem:[%s1401 + $0x99] sm:$0xff]
      %v1610 = vld [vmem:[%s1401 + $0xa9] sm:$0xff]
      %v1611 = vld [vmem:[%s1401 + $0xb1] sm:$0xff]
      %v1612 = vld [vmem:[%s1401 + $0xc1] sm:$0xff]
      %v1613 = vld [vmem:[%s1401 + $0xc9] sm:$0xff]
      %v1614 = vld [vmem:[%s1401 + $0xd9] sm:$0xff]
      %v1615 = vld [vmem:[%s1401 + $0xe1] sm:$0xff]
      %v1616 = vld [vmem:[%s1401 + $0xf1] sm:$0xff]
      %v1617 = vld [vmem:[%s1401 + $0xf9] sm:$0xff]
      %v1618 = vld [vmem:[%s1401 + $0x109] sm:$0xff]
      %v1619 = vld [vmem:[%s1401 + $0x111] sm:$0xff]
      %v1620 = vld [vmem:[%s1401 + $0x121] sm:$0xff]
      %v1621 = vld [vmem:[%s1401 + $0x129] sm:$0xff]
      %v1622 = vld [vmem:[%s1401 + $0x139] sm:$0xff]
      %v1623 = vld [vmem:[%s1401 + $0x141] sm:$0xff]
      %v1624 = vld [vmem:[%s1401 + $0x151] sm:$0xff]
      %v1625 = vld [vmem:[%s1401 + $0x159] sm:$0xff]
      %v1626 = vld [vmem:[%s1401 + $0x169] sm:$0xff]
      %v1627 = vld [vmem:[%s1401 + $0x171] sm:$0xff]
      %s1628 = scalar_lea.vmem %s1, 896
      %v1629 = vld [vmem:[%s1628] sm:$0xff]
      %v1630 = vld [vmem:[%s1628 + $0x8] sm:$0xff]
      %v1631 = vld [vmem:[%s1628 + $0x10] sm:$0xff]
      %v1632 = vld [vmem:[%s1628 + $0x18] sm:$0xff]
      %v1633 = vld [vmem:[%s1628 + $0x20] sm:$0xff]
      %v1634 = vld [vmem:[%s1628 + $0x28] sm:$0xff]
      %v1635 = vld [vmem:[%s1628 + $0x30] sm:$0xff]
      %v1636 = vld [vmem:[%s1628 + $0x38] sm:$0xff]
      %v1637 = vld [vmem:[%s1628 + $0x40] sm:$0xff]
      %v1638 = vld [vmem:[%s1628 + $0x48] sm:$0xff]
      %v1639 = vld [vmem:[%s1628 + $0x50] sm:$0xff]
      %v1640 = vld [vmem:[%s1628 + $0x58] sm:$0xff]
      %v1641 = vld [vmem:[%s1628 + $0x60] sm:$0xff]
      %v1642 = vld [vmem:[%s1628 + $0x68] sm:$0xff]
      %v1643 = vld [vmem:[%s1628 + $0x70] sm:$0xff]
      %v1644 = vld [vmem:[%s1628 + $0x78] sm:$0xff]
      %1645 = vmatpush.msra.mxu0 %v1644
      %1646 = vmatpush.msra.mxu0 %v1643
      %1647 = vmatpush.msra.mxu0 %v1642
      %1648 = vmatpush.msra.mxu0 %v1641
      %1649 = vmatpush.msra.mxu0 %v1640
      %1650 = vmatpush.msra.mxu0 %v1639
      %1651 = vmatpush.msra.mxu0 %v1638
      %1652 = vmatpush.msra.mxu0 %v1637
      %1653 = vmatpush.msra.mxu0 %v1636
      %1654 = vmatpush.msra.mxu0 %v1635
      %1655 = vmatpush.msra.mxu0 %v1634
      %1656 = vmatpush.msra.mxu0 %v1633
      %1657 = vmatpush.msra.mxu0 %v1632
      %1658 = vmatpush.msra.mxu0 %v1631
      %1659 = vmatpush.msra.mxu0 %v1630
      %1660 = vmatpush.msra.mxu0 %v1629
      %1661 = vmatmul.f32.gmra.mxu0 %v1596
      %v1662 = vpop.f32.mrf.mxu0
      %v1663 = vadd.f32 0.0, %v1662
      %1664 = vmatmul.f32.gmra.mxu0 %v1597
      %v1665 = vpop.f32.mrf.mxu0
      %v1666 = vadd.f32 0.0, %v1665
      %1667 = vmatmul.f32.gmra.mxu0 %v1598
      %v1668 = vpop.f32.mrf.mxu0
      %v1669 = vadd.f32 0.0, %v1668
      %1670 = vmatmul.f32.gmra.mxu0 %v1599
      %v1671 = vpop.f32.mrf.mxu0
      %v1672 = vadd.f32 0.0, %v1671
      %1673 = vmatmul.f32.gmra.mxu0 %v1600
      %v1674 = vpop.f32.mrf.mxu0
      %v1675 = vadd.f32 0.0, %v1674
      %1676 = vmatmul.f32.gmra.mxu0 %v1601
      %v1677 = vpop.f32.mrf.mxu0
      %v1678 = vadd.f32 0.0, %v1677
      %1679 = vmatmul.f32.gmra.mxu0 %v1602
      %v1680 = vpop.f32.mrf.mxu0
      %v1681 = vadd.f32 0.0, %v1680
      %1682 = vmatmul.f32.gmra.mxu0 %v1603
      %v1683 = vpop.f32.mrf.mxu0
      %v1684 = vadd.f32 0.0, %v1683
      %1685 = vmatmul.f32.gmra.mxu0 %v1604
      %v1686 = vpop.f32.mrf.mxu0
      %v1687 = vadd.f32 0.0, %v1686
      %1688 = vmatmul.f32.gmra.mxu0 %v1605
      %v1689 = vpop.f32.mrf.mxu0
      %v1690 = vadd.f32 0.0, %v1689
      %1691 = vmatmul.f32.gmra.mxu0 %v1606
      %v1692 = vpop.f32.mrf.mxu0
      %v1693 = vadd.f32 0.0, %v1692
      %1694 = vmatmul.f32.gmra.mxu0 %v1607
      %v1695 = vpop.f32.mrf.mxu0
      %v1696 = vadd.f32 0.0, %v1695
      %1697 = vmatmul.f32.gmra.mxu0 %v1608
      %v1698 = vpop.f32.mrf.mxu0
      %v1699 = vadd.f32 0.0, %v1698
      %1700 = vmatmul.f32.gmra.mxu0 %v1609
      %v1701 = vpop.f32.mrf.mxu0
      %v1702 = vadd.f32 0.0, %v1701
      %1703 = vmatmul.f32.gmra.mxu0 %v1610
      %v1704 = vpop.f32.mrf.mxu0
      %v1705 = vadd.f32 0.0, %v1704
      %1706 = vmatmul.f32.gmra.mxu0 %v1611
      %v1707 = vpop.f32.mrf.mxu0
      %v1708 = vadd.f32 0.0, %v1707
      %1709 = vmatmul.f32.gmra.mxu0 %v1612
      %v1710 = vpop.f32.mrf.mxu0
      %v1711 = vadd.f32 0.0, %v1710
      %1712 = vmatmul.f32.gmra.mxu0 %v1613
      %v1713 = vpop.f32.mrf.mxu0
      %v1714 = vadd.f32 0.0, %v1713
      %1715 = vmatmul.f32.gmra.mxu0 %v1614
      %v1716 = vpop.f32.mrf.mxu0
      %v1717 = vadd.f32 0.0, %v1716
      %1718 = vmatmul.f32.gmra.mxu0 %v1615
      %v1719 = vpop.f32.mrf.mxu0
      %v1720 = vadd.f32 0.0, %v1719
      %1721 = vmatmul.f32.gmra.mxu0 %v1616
      %v1722 = vpop.f32.mrf.mxu0
      %v1723 = vadd.f32 0.0, %v1722
      %1724 = vmatmul.f32.gmra.mxu0 %v1617
      %v1725 = vpop.f32.mrf.mxu0
      %v1726 = vadd.f32 0.0, %v1725
      %1727 = vmatmul.f32.gmra.mxu0 %v1618
      %v1728 = vpop.f32.mrf.mxu0
      %v1729 = vadd.f32 0.0, %v1728
      %1730 = vmatmul.f32.gmra.mxu0 %v1619
      %v1731 = vpop.f32.mrf.mxu0
      %v1732 = vadd.f32 0.0, %v1731
      %1733 = vmatmul.f32.gmra.mxu0 %v1620
      %v1734 = vpop.f32.mrf.mxu0
      %v1735 = vadd.f32 0.0, %v1734
      %1736 = vmatmul.f32.gmra.mxu0 %v1621
      %v1737 = vpop.f32.mrf.mxu0
      %v1738 = vadd.f32 0.0, %v1737
      %1739 = vmatmul.f32.gmra.mxu0 %v1622
      %v1740 = vpop.f32.mrf.mxu0
      %v1741 = vadd.f32 0.0, %v1740
      %1742 = vmatmul.f32.gmra.mxu0 %v1623
      %v1743 = vpop.f32.mrf.mxu0
      %v1744 = vadd.f32 0.0, %v1743
      %1745 = vmatmul.f32.gmra.mxu0 %v1624
      %v1746 = vpop.f32.mrf.mxu0
      %v1747 = vadd.f32 0.0, %v1746
      %1748 = vmatmul.f32.gmra.mxu0 %v1625
      %v1749 = vpop.f32.mrf.mxu0
      %v1750 = vadd.f32 0.0, %v1749
      %1751 = vmatmul.f32.gmra.mxu0 %v1626
      %v1752 = vpop.f32.mrf.mxu0
      %v1753 = vadd.f32 0.0, %v1752
      %1754 = vmatmul.f32.gmra.mxu0 %v1627
      %v1755 = vpop.f32.mrf.mxu0
      %v1756 = vadd.f32 0.0, %v1755
      %1757 = vdwg.mxu0
      %v1758 = vadd.f32 %v1564, %v1663
      %v1759 = vadd.f32 %v1565, %v1666
      %v1760 = vadd.f32 %v1566, %v1669
      %v1761 = vadd.f32 %v1567, %v1672
      %v1762 = vadd.f32 %v1568, %v1675
      %v1763 = vadd.f32 %v1569, %v1678
      %v1764 = vadd.f32 %v1570, %v1681
      %v1765 = vadd.f32 %v1571, %v1684
      %v1766 = vadd.f32 %v1572, %v1687
      %v1767 = vadd.f32 %v1573, %v1690
      %v1768 = vadd.f32 %v1574, %v1693
      %v1769 = vadd.f32 %v1575, %v1696
      %v1770 = vadd.f32 %v1576, %v1699
      %v1771 = vadd.f32 %v1577, %v1702
      %v1772 = vadd.f32 %v1578, %v1705
      %v1773 = vadd.f32 %v1579, %v1708
      %v1774 = vadd.f32 %v1580, %v1711
      %v1775 = vadd.f32 %v1581, %v1714
      %v1776 = vadd.f32 %v1582, %v1717
      %v1777 = vadd.f32 %v1583, %v1720
      %v1778 = vadd.f32 %v1584, %v1723
      %v1779 = vadd.f32 %v1585, %v1726
      %v1780 = vadd.f32 %v1586, %v1729
      %v1781 = vadd.f32 %v1587, %v1732
      %v1782 = vadd.f32 %v1588, %v1735
      %v1783 = vadd.f32 %v1589, %v1738
      %v1784 = vadd.f32 %v1590, %v1741
      %v1785 = vadd.f32 %v1591, %v1744
      %v1786 = vadd.f32 %v1592, %v1747
      %v1787 = vadd.f32 %v1593, %v1750
      %v1788 = vadd.f32 %v1594, %v1753
      %v1789 = vadd.f32 %v1595, %v1756
      %v1790 = vld [vmem:[%s1401 + $0x2] sm:$0xff]
      %v1791 = vld [vmem:[%s1401 + $0xa] sm:$0xff]
      %v1792 = vld [vmem:[%s1401 + $0x1a] sm:$0xff]
      %v1793 = vld [vmem:[%s1401 + $0x22] sm:$0xff]
      %v1794 = vld [vmem:[%s1401 + $0x32] sm:$0xff]
      %v1795 = vld [vmem:[%s1401 + $0x3a] sm:$0xff]
      %v1796 = vld [vmem:[%s1401 + $0x4a] sm:$0xff]
      %v1797 = vld [vmem:[%s1401 + $0x52] sm:$0xff]
      %v1798 = vld [vmem:[%s1401 + $0x62] sm:$0xff]
      %v1799 = vld [vmem:[%s1401 + $0x6a] sm:$0xff]
      %v1800 = vld [vmem:[%s1401 + $0x7a] sm:$0xff]
      %v1801 = vld [vmem:[%s1401 + $0x82] sm:$0xff]
      %v1802 = vld [vmem:[%s1401 + $0x92] sm:$0xff]
      %v1803 = vld [vmem:[%s1401 + $0x9a] sm:$0xff]
      %v1804 = vld [vmem:[%s1401 + $0xaa] sm:$0xff]
      %v1805 = vld [vmem:[%s1401 + $0xb2] sm:$0xff]
      %v1806 = vld [vmem:[%s1401 + $0xc2] sm:$0xff]
      %v1807 = vld [vmem:[%s1401 + $0xca] sm:$0xff]
      %v1808 = vld [vmem:[%s1401 + $0xda] sm:$0xff]
      %v1809 = vld [vmem:[%s1401 + $0xe2] sm:$0xff]
      %v1810 = vld [vmem:[%s1401 + $0xf2] sm:$0xff]
      %v1811 = vld [vmem:[%s1401 + $0xfa] sm:$0xff]
      %v1812 = vld [vmem:[%s1401 + $0x10a] sm:$0xff]
      %v1813 = vld [vmem:[%s1401 + $0x112] sm:$0xff]
      %v1814 = vld [vmem:[%s1401 + $0x122] sm:$0xff]
      %v1815 = vld [vmem:[%s1401 + $0x12a] sm:$0xff]
      %v1816 = vld [vmem:[%s1401 + $0x13a] sm:$0xff]
      %v1817 = vld [vmem:[%s1401 + $0x142] sm:$0xff]
      %v1818 = vld [vmem:[%s1401 + $0x152] sm:$0xff]
      %v1819 = vld [vmem:[%s1401 + $0x15a] sm:$0xff]
      %v1820 = vld [vmem:[%s1401 + $0x16a] sm:$0xff]
      %v1821 = vld [vmem:[%s1401 + $0x172] sm:$0xff]
      %s1822 = scalar_lea.vmem %s1, 1024
      %v1823 = vld [vmem:[%s1822] sm:$0xff]
      %v1824 = vld [vmem:[%s1822 + $0x8] sm:$0xff]
      %v1825 = vld [vmem:[%s1822 + $0x10] sm:$0xff]
      %v1826 = vld [vmem:[%s1822 + $0x18] sm:$0xff]
      %v1827 = vld [vmem:[%s1822 + $0x20] sm:$0xff]
      %v1828 = vld [vmem:[%s1822 + $0x28] sm:$0xff]
      %v1829 = vld [vmem:[%s1822 + $0x30] sm:$0xff]
      %v1830 = vld [vmem:[%s1822 + $0x38] sm:$0xff]
      %v1831 = vld [vmem:[%s1822 + $0x40] sm:$0xff]
      %v1832 = vld [vmem:[%s1822 + $0x48] sm:$0xff]
      %v1833 = vld [vmem:[%s1822 + $0x50] sm:$0xff]
      %v1834 = vld [vmem:[%s1822 + $0x58] sm:$0xff]
      %v1835 = vld [vmem:[%s1822 + $0x60] sm:$0xff]
      %v1836 = vld [vmem:[%s1822 + $0x68] sm:$0xff]
      %v1837 = vld [vmem:[%s1822 + $0x70] sm:$0xff]
      %v1838 = vld [vmem:[%s1822 + $0x78] sm:$0xff]
      %1839 = vmatpush.msra.mxu0 %v1838
      %1840 = vmatpush.msra.mxu0 %v1837
      %1841 = vmatpush.msra.mxu0 %v1836
      %1842 = vmatpush.msra.mxu0 %v1835
      %1843 = vmatpush.msra.mxu0 %v1834
      %1844 = vmatpush.msra.mxu0 %v1833
      %1845 = vmatpush.msra.mxu0 %v1832
      %1846 = vmatpush.msra.mxu0 %v1831
      %1847 = vmatpush.msra.mxu0 %v1830
      %1848 = vmatpush.msra.mxu0 %v1829
      %1849 = vmatpush.msra.mxu0 %v1828
      %1850 = vmatpush.msra.mxu0 %v1827
      %1851 = vmatpush.msra.mxu0 %v1826
      %1852 = vmatpush.msra.mxu0 %v1825
      %1853 = vmatpush.msra.mxu0 %v1824
      %1854 = vmatpush.msra.mxu0 %v1823
      %1855 = vmatmul.f32.gmra.mxu0 %v1790
      %v1856 = vpop.f32.mrf.mxu0
      %v1857 = vadd.f32 0.0, %v1856
      %1858 = vmatmul.f32.gmra.mxu0 %v1791
      %v1859 = vpop.f32.mrf.mxu0
      %v1860 = vadd.f32 0.0, %v1859
      %1861 = vmatmul.f32.gmra.mxu0 %v1792
      %v1862 = vpop.f32.mrf.mxu0
      %v1863 = vadd.f32 0.0, %v1862
      %1864 = vmatmul.f32.gmra.mxu0 %v1793
      %v1865 = vpop.f32.mrf.mxu0
      %v1866 = vadd.f32 0.0, %v1865
      %1867 = vmatmul.f32.gmra.mxu0 %v1794
      %v1868 = vpop.f32.mrf.mxu0
      %v1869 = vadd.f32 0.0, %v1868
      %1870 = vmatmul.f32.gmra.mxu0 %v1795
      %v1871 = vpop.f32.mrf.mxu0
      %v1872 = vadd.f32 0.0, %v1871
      %1873 = vmatmul.f32.gmra.mxu0 %v1796
      %v1874 = vpop.f32.mrf.mxu0
      %v1875 = vadd.f32 0.0, %v1874
      %1876 = vmatmul.f32.gmra.mxu0 %v1797
      %v1877 = vpop.f32.mrf.mxu0
      %v1878 = vadd.f32 0.0, %v1877
      %1879 = vmatmul.f32.gmra.mxu0 %v1798
      %v1880 = vpop.f32.mrf.mxu0
      %v1881 = vadd.f32 0.0, %v1880
      %1882 = vmatmul.f32.gmra.mxu0 %v1799
      %v1883 = vpop.f32.mrf.mxu0
      %v1884 = vadd.f32 0.0, %v1883
      %1885 = vmatmul.f32.gmra.mxu0 %v1800
      %v1886 = vpop.f32.mrf.mxu0
      %v1887 = vadd.f32 0.0, %v1886
      %1888 = vmatmul.f32.gmra.mxu0 %v1801
      %v1889 = vpop.f32.mrf.mxu0
      %v1890 = vadd.f32 0.0, %v1889
      %1891 = vmatmul.f32.gmra.mxu0 %v1802
      %v1892 = vpop.f32.mrf.mxu0
      %v1893 = vadd.f32 0.0, %v1892
      %1894 = vmatmul.f32.gmra.mxu0 %v1803
      %v1895 = vpop.f32.mrf.mxu0
      %v1896 = vadd.f32 0.0, %v1895
      %1897 = vmatmul.f32.gmra.mxu0 %v1804
      %v1898 = vpop.f32.mrf.mxu0
      %v1899 = vadd.f32 0.0, %v1898
      %1900 = vmatmul.f32.gmra.mxu0 %v1805
      %v1901 = vpop.f32.mrf.mxu0
      %v1902 = vadd.f32 0.0, %v1901
      %1903 = vmatmul.f32.gmra.mxu0 %v1806
      %v1904 = vpop.f32.mrf.mxu0
      %v1905 = vadd.f32 0.0, %v1904
      %1906 = vmatmul.f32.gmra.mxu0 %v1807
      %v1907 = vpop.f32.mrf.mxu0
      %v1908 = vadd.f32 0.0, %v1907
      %1909 = vmatmul.f32.gmra.mxu0 %v1808
      %v1910 = vpop.f32.mrf.mxu0
      %v1911 = vadd.f32 0.0, %v1910
      %1912 = vmatmul.f32.gmra.mxu0 %v1809
      %v1913 = vpop.f32.mrf.mxu0
      %v1914 = vadd.f32 0.0, %v1913
      %1915 = vmatmul.f32.gmra.mxu0 %v1810
      %v1916 = vpop.f32.mrf.mxu0
      %v1917 = vadd.f32 0.0, %v1916
      %1918 = vmatmul.f32.gmra.mxu0 %v1811
      %v1919 = vpop.f32.mrf.mxu0
      %v1920 = vadd.f32 0.0, %v1919
      %1921 = vmatmul.f32.gmra.mxu0 %v1812
      %v1922 = vpop.f32.mrf.mxu0
      %v1923 = vadd.f32 0.0, %v1922
      %1924 = vmatmul.f32.gmra.mxu0 %v1813
      %v1925 = vpop.f32.mrf.mxu0
      %v1926 = vadd.f32 0.0, %v1925
      %1927 = vmatmul.f32.gmra.mxu0 %v1814
      %v1928 = vpop.f32.mrf.mxu0
      %v1929 = vadd.f32 0.0, %v1928
      %1930 = vmatmul.f32.gmra.mxu0 %v1815
      %v1931 = vpop.f32.mrf.mxu0
      %v1932 = vadd.f32 0.0, %v1931
      %1933 = vmatmul.f32.gmra.mxu0 %v1816
      %v1934 = vpop.f32.mrf.mxu0
      %v1935 = vadd.f32 0.0, %v1934
      %1936 = vmatmul.f32.gmra.mxu0 %v1817
      %v1937 = vpop.f32.mrf.mxu0
      %v1938 = vadd.f32 0.0, %v1937
      %1939 = vmatmul.f32.gmra.mxu0 %v1818
      %v1940 = vpop.f32.mrf.mxu0
      %v1941 = vadd.f32 0.0, %v1940
      %1942 = vmatmul.f32.gmra.mxu0 %v1819
      %v1943 = vpop.f32.mrf.mxu0
      %v1944 = vadd.f32 0.0, %v1943
      %1945 = vmatmul.f32.gmra.mxu0 %v1820
      %v1946 = vpop.f32.mrf.mxu0
      %v1947 = vadd.f32 0.0, %v1946
      %1948 = vmatmul.f32.gmra.mxu0 %v1821
      %v1949 = vpop.f32.mrf.mxu0
      %v1950 = vadd.f32 0.0, %v1949
      %1951 = vdwg.mxu0
      %v1952 = vadd.f32 %v1758, %v1857
      %v1953 = vadd.f32 %v1759, %v1860
      %v1954 = vadd.f32 %v1760, %v1863
      %v1955 = vadd.f32 %v1761, %v1866
      %v1956 = vadd.f32 %v1762, %v1869
      %v1957 = vadd.f32 %v1763, %v1872
      %v1958 = vadd.f32 %v1764, %v1875
      %v1959 = vadd.f32 %v1765, %v1878
      %v1960 = vadd.f32 %v1766, %v1881
      %v1961 = vadd.f32 %v1767, %v1884
      %v1962 = vadd.f32 %v1768, %v1887
      %v1963 = vadd.f32 %v1769, %v1890
      %v1964 = vadd.f32 %v1770, %v1893
      %v1965 = vadd.f32 %v1771, %v1896
      %v1966 = vadd.f32 %v1772, %v1899
      %v1967 = vadd.f32 %v1773, %v1902
      %v1968 = vadd.f32 %v1774, %v1905
      %v1969 = vadd.f32 %v1775, %v1908
      %v1970 = vadd.f32 %v1776, %v1911
      %v1971 = vadd.f32 %v1777, %v1914
      %v1972 = vadd.f32 %v1778, %v1917
      %v1973 = vadd.f32 %v1779, %v1920
      %v1974 = vadd.f32 %v1780, %v1923
      %v1975 = vadd.f32 %v1781, %v1926
      %v1976 = vadd.f32 %v1782, %v1929
      %v1977 = vadd.f32 %v1783, %v1932
      %v1978 = vadd.f32 %v1784, %v1935
      %v1979 = vadd.f32 %v1785, %v1938
      %v1980 = vadd.f32 %v1786, %v1941
      %v1981 = vadd.f32 %v1787, %v1944
      %v1982 = vadd.f32 %v1788, %v1947
      %v1983 = vadd.f32 %v1789, %v1950
      %v1984 = vadd.f32 %v1952, %v1953
      %v1985 = vadd.f32 %v1984, %v1954
      %v1986 = vadd.f32 %v1985, %v1955
      %v1987 = vadd.f32 %v1986, %v1956
      %v1988 = vadd.f32 %v1987, %v1957
      %v1989 = vadd.f32 %v1988, %v1958
      %v1990 = vadd.f32 %v1989, %v1959
      %v1991 = vadd.f32 %v1990, %v1960
      %v1992 = vadd.f32 %v1991, %v1961
      %v1993 = vadd.f32 %v1992, %v1962
      %v1994 = vadd.f32 %v1993, %v1963
      %v1995 = vadd.f32 %v1994, %v1964
      %v1996 = vadd.f32 %v1995, %v1965
      %v1997 = vadd.f32 %v1996, %v1966
      %v1998 = vadd.f32 %v1997, %v1967
      %v1999 = vadd.f32 %v1998, %v1968
      %v2000 = vadd.f32 %v1999, %v1969
      %v2001 = vadd.f32 %v2000, %v1970
      %v2002 = vadd.f32 %v2001, %v1971
      %v2003 = vadd.f32 %v2002, %v1972
      %v2004 = vadd.f32 %v2003, %v1973
      %v2005 = vadd.f32 %v2004, %v1974
      %v2006 = vadd.f32 %v2005, %v1975
      %v2007 = vadd.f32 %v2006, %v1976
      %v2008 = vadd.f32 %v2007, %v1977
      %v2009 = vadd.f32 %v2008, %v1978
      %v2010 = vadd.f32 %v2009, %v1979
      %v2011 = vadd.f32 %v2010, %v1980
      %v2012 = vadd.f32 %v2011, %v1981
      %v2013 = vadd.f32 %v2012, %v1982
      %v2014 = vadd.f32 %v2013, %v1983
      %v2015 = vrot.slane %v2014, 4
      %v2016 = vadd.f32 %v2014, %v2015
      %v2017 = vrot.slane %v2016, 2
      %v2018 = vadd.f32 %v2016, %v2017
      %v2019 = vrot.slane %v2018, 1
      %v2020 = vadd.f32 %v2018, %v2019
      %2021 = vst [vmem:[%s181] sm:$0x1] %v2020
      %v2022 = vmul.f32 %v1952, %v1952
      %v2023 = vmul.f32 %v1953, %v1953
      %v2024 = vmul.f32 %v1954, %v1954
      %v2025 = vmul.f32 %v1955, %v1955
      %v2026 = vmul.f32 %v1956, %v1956
      %v2027 = vmul.f32 %v1957, %v1957
      %v2028 = vmul.f32 %v1958, %v1958
      %v2029 = vmul.f32 %v1959, %v1959
      %v2030 = vmul.f32 %v1960, %v1960
      %v2031 = vmul.f32 %v1961, %v1961
      %v2032 = vmul.f32 %v1962, %v1962
      %v2033 = vmul.f32 %v1963, %v1963
      %v2034 = vmul.f32 %v1964, %v1964
      %v2035 = vmul.f32 %v1965, %v1965
      %v2036 = vmul.f32 %v1966, %v1966
      %v2037 = vmul.f32 %v1967, %v1967
      %v2038 = vmul.f32 %v1968, %v1968
      %v2039 = vmul.f32 %v1969, %v1969
      %v2040 = vmul.f32 %v1970, %v1970
      %v2041 = vmul.f32 %v1971, %v1971
      %v2042 = vmul.f32 %v1972, %v1972
      %v2043 = vmul.f32 %v1973, %v1973
      %v2044 = vmul.f32 %v1974, %v1974
      %v2045 = vmul.f32 %v1975, %v1975
      %v2046 = vmul.f32 %v1976, %v1976
      %v2047 = vmul.f32 %v1977, %v1977
      %v2048 = vmul.f32 %v1978, %v1978
      %v2049 = vmul.f32 %v1979, %v1979
      %v2050 = vmul.f32 %v1980, %v1980
      %v2051 = vmul.f32 %v1981, %v1981
      %v2052 = vmul.f32 %v1982, %v1982
      %v2053 = vmul.f32 %v1983, %v1983
      %v2054 = vadd.f32 %v2022, %v2023
      %v2055 = vadd.f32 %v2054, %v2024
      %v2056 = vadd.f32 %v2055, %v2025
      %v2057 = vadd.f32 %v2056, %v2026
      %v2058 = vadd.f32 %v2057, %v2027
      %v2059 = vadd.f32 %v2058, %v2028
      %v2060 = vadd.f32 %v2059, %v2029
      %v2061 = vadd.f32 %v2060, %v2030
      %v2062 = vadd.f32 %v2061, %v2031
      %v2063 = vadd.f32 %v2062, %v2032
      %v2064 = vadd.f32 %v2063, %v2033
      %v2065 = vadd.f32 %v2064, %v2034
      %v2066 = vadd.f32 %v2065, %v2035
      %v2067 = vadd.f32 %v2066, %v2036
      %v2068 = vadd.f32 %v2067, %v2037
      %v2069 = vadd.f32 %v2068, %v2038
      %v2070 = vadd.f32 %v2069, %v2039
      %v2071 = vadd.f32 %v2070, %v2040
      %v2072 = vadd.f32 %v2071, %v2041
      %v2073 = vadd.f32 %v2072, %v2042
      %v2074 = vadd.f32 %v2073, %v2043
      %v2075 = vadd.f32 %v2074, %v2044
      %v2076 = vadd.f32 %v2075, %v2045
      %v2077 = vadd.f32 %v2076, %v2046
      %v2078 = vadd.f32 %v2077, %v2047
      %v2079 = vadd.f32 %v2078, %v2048
      %v2080 = vadd.f32 %v2079, %v2049
      %v2081 = vadd.f32 %v2080, %v2050
      %v2082 = vadd.f32 %v2081, %v2051
      %v2083 = vadd.f32 %v2082, %v2052
      %v2084 = vadd.f32 %v2083, %v2053
      %v2085 = vrot.slane %v2084, 4
      %v2086 = vadd.f32 %v2084, %v2085
      %v2087 = vrot.slane %v2086, 2
      %v2088 = vadd.f32 %v2086, %v2087
      %v2089 = vrot.slane %v2088, 1
      %v2090 = vadd.f32 %v2088, %v2089
      %2091 = vst [vmem:[%s181 + $0x1] sm:$0x1] %v2090
      %2092 = vst [vmem:[%s177] sm:$0xff] %v1952
      %2093 = vst [vmem:[%s177 + $0x8] sm:$0xff] %v1953
      %2094 = vst [vmem:[%s177 + $0x10] sm:$0xff] %v1954
      %2095 = vst [vmem:[%s177 + $0x18] sm:$0xff] %v1955
      %2096 = vst [vmem:[%s177 + $0x20] sm:$0xff] %v1956
      %2097 = vst [vmem:[%s177 + $0x28] sm:$0xff] %v1957
      %2098 = vst [vmem:[%s177 + $0x30] sm:$0xff] %v1958
      %2099 = vst [vmem:[%s177 + $0x38] sm:$0xff] %v1959
      %2100 = vst [vmem:[%s177 + $0x40] sm:$0xff] %v1960
      %2101 = vst [vmem:[%s177 + $0x48] sm:$0xff] %v1961
      %2102 = vst [vmem:[%s177 + $0x50] sm:$0xff] %v1962
      %2103 = vst [vmem:[%s177 + $0x58] sm:$0xff] %v1963
      %2104 = vst [vmem:[%s177 + $0x60] sm:$0xff] %v1964
      %2105 = vst [vmem:[%s177 + $0x68] sm:$0xff] %v1965
      %2106 = vst [vmem:[%s177 + $0x70] sm:$0xff] %v1966
      %2107 = vst [vmem:[%s177 + $0x78] sm:$0xff] %v1967
      %2108 = vst [vmem:[%s177 + $0x80] sm:$0xff] %v1968
      %2109 = vst [vmem:[%s177 + $0x88] sm:$0xff] %v1969
      %2110 = vst [vmem:[%s177 + $0x90] sm:$0xff] %v1970
      %2111 = vst [vmem:[%s177 + $0x98] sm:$0xff] %v1971
      %2112 = vst [vmem:[%s177 + $0xa0] sm:$0xff] %v1972
      %2113 = vst [vmem:[%s177 + $0xa8] sm:$0xff] %v1973
      %2114 = vst [vmem:[%s177 + $0xb0] sm:$0xff] %v1974
      %2115 = vst [vmem:[%s177 + $0xb8] sm:$0xff] %v1975
      %2116 = vst [vmem:[%s177 + $0xc0] sm:$0xff] %v1976
      %2117 = vst [vmem:[%s177 + $0xc8] sm:$0xff] %v1977
      %2118 = vst [vmem:[%s177 + $0xd0] sm:$0xff] %v1978
      %2119 = vst [vmem:[%s177 + $0xd8] sm:$0xff] %v1979
      %2120 = vst [vmem:[%s177 + $0xe0] sm:$0xff] %v1980
      %2121 = vst [vmem:[%s177 + $0xe8] sm:$0xff] %v1981
      %2122 = vst [vmem:[%s177 + $0xf0] sm:$0xff] %v1982
      %2123 = vst [vmem:[%s177 + $0xf8] sm:$0xff] %v1983
      %p2124 = scmp.lt.s32.totalorder %s15, 1
      %s2125 = scalar_select %p2124, %s15, 1
      %s2126 = smul.addr %s2125, 32
      %s2127 = smul.addr %s2126, 8
      %s2128 = scalar_lea.vmem %s2, %s2127
      %p2129 = scmp.lt.s32.totalorder %s15, 1
      %s2130 = scalar_select %p2129, %s15, 1
      %s2131 = smul.addr %s2130, 2
      %s2132 = scalar_lea.vmem %s3, %s2131
      // Predicated region
      $region29: #{basic_block.3} parent=27 // pred_check
        %p2133 = pneg %p80
      $region30: #{basic_block.3} parent=27 // pred_check_branch
        %2135 = sbr.rel (%p2133) target = $region32
      $region31: #{basic_block.3} parent=27 // pred_region
        _
      $region32: #{basic_block.3} parent=27 // pred_fallthru
        _
      // Predicated region
      $region33: #{basic_block.3} parent=27 // pred_check
        %p2136 = pneg %p106
      $region34: #{basic_block.3} parent=27 // pred_check_branch
        %2138 = sbr.rel (%p2136) target = $region36
      $region35: #{basic_block.3} parent=27 // pred_region
        _
      $region36: #{basic_block.3} parent=27 // pred_fallthru
        _
    $region28: #{basic_block.3} parent=5 // pred_fallthru
      _
    %p2139 = scmp.le.s32.totalorder 2, %s10
    // Predicated region
    $region37: #{basic_block.3} parent=5 // pred_check
      %p2140 = pneg %p2139
    $region38: #{basic_block.3} parent=5 // pred_check_branch
      %2142 = sbr.rel (%p2140) target = $region40
    $region39: #{basic_block.3} parent=5 // pred_region
      %s2143 = ssub.s32 %s10, 2
      // Predicated region
      $region41: #{basic_block.3} parent=39 // pred_check
        %p2144 = pneg %p86
      $region42: #{basic_block.3} parent=39 // pred_check_branch
        %2146 = sbr.rel (%p2144) target = $region44
      $region43: #{basic_block.3} parent=39 // pred_region
        %p2147 = scmp.lt.s32.totalorder %s16, 1
        %s2148 = scalar_select %p2147, %s16, 1
        %s2149 = smul.addr %s2148, 32
        %s2150 = smul.addr %s2149, 8
        %s2151 = scalar_lea.vmem %s2, %s2150
      $region44: #{basic_block.3} parent=39 // pred_fallthru
        _
      // Predicated region
      $region45: #{basic_block.3} parent=39 // pred_check
        %p2152 = pneg %p112
      $region46: #{basic_block.3} parent=39 // pred_check_branch
        %2154 = sbr.rel (%p2152) target = $region48
      $region47: #{basic_block.3} parent=39 // pred_region
        %p2155 = scmp.lt.s32.totalorder %s16, 1
        %s2156 = scalar_select %p2155, %s16, 1
        %s2157 = smul.addr %s2156, 2
        %s2158 = scalar_lea.vmem %s3, %s2157
      $region48: #{basic_block.3} parent=39 // pred_fallthru
        _
    $region40: #{basic_block.3} parent=5 // pred_fallthru
      _
  $region6: #{basic_block.3} parent=0 // loop_footer
    %s14 = sadd.s32 1, %s10
  $region7: #{basic_block.3} parent=0 // loop_footer_branch
    %9 = sbr.rel target = $region3
  $region8: #{basic_block.3} parent=0 // loop_exit
    _

// kernel: basic_block.4
$region0: #{basic_block.4}
  #allocation0 [shape = 'u32[]', space=smem, size = 0x4, offset = 0x4, fixed_abs, tag = 'smem constant byte address 0x4 - core index']
  #allocation1 [shape = 'u32[72,128]{1,0:T(1,128)}', space=vmem, size = 0x9000, scoped, tag = 'internal scratch']
  #allocation2 [shape = 'f32[18,24,128]{2,1,0:T(8,128)}', space=vmem, size = 0x36000, scoped, tag = 'scratch operand']
  %s0 = inlined_call_operand.vmem [shape: f32[2,16,16,128], index: 0, kind: input, shape index: {}]
  %s1 = inlined_call_operand.vmem [shape: f32[2,128], index: 1, kind: input, shape index: {}]
  %s2 = inlined_call_operand.vmem [shape: f32[9,128,128], index: 2, kind: input, shape index: {}]
  %s3 = inlined_call_operand.vmem [shape: f32[2,16,16,128], index: 3, kind: output, shape index: {0}]
  %s4 = inlined_call_operand.vmem [shape: f32[2,2,128], index: 4, kind: output, shape index: {1}]
  %5 = xla_tuple %s3, %s4
  %s6 = sld [smem:[#allocation0]]
  $region53: #{basic_block.4} parent=0
    _
  %s8 = ssub.s32 1, %s6
  %s9 = scalar_select 0, %s8, %s6
  loop: start=0, step=1, limit=4
  $region2: #{basic_block.4} parent=0 // loop_pre_header
    _
  $region3: #{basic_block.4} parent=0 // loop_header
    %s11 = sphi 0, %s15
    %p12 = scmp.ge.s32.totalorder %s11, 4
    %s21 = sphi 0, %s23
    %s24 = sphi 0, %s21
    %s25 = sphi 0, %s24
    %s41 = sphi 0, %s25
    %s45 = sphi 0, %s45
    %s47 = sphi 0, %s45
    %s48 = sphi 0, %s47
    %s62 = sphi 0, %s48
    %s66 = sphi 0, %s66
    %s68 = sphi 0, %s66
    %s69 = sphi 0, %s68
    %s83 = sphi 0, %s69
    %s89 = sphi 0, %s91
    %s92 = sphi 0, %s89
    %s93 = sphi 0, %s92
    %s109 = sphi 0, %s93
    %s115 = sphi 0, %s117
    %s118 = sphi 0, %s115
    %s119 = sphi 0, %s118
    %s135 = sphi 0, %s119
  $region4: #{basic_block.4} parent=0 // loop_header_branch
    %14 = sbr.rel (%p12) target = $region8
  $region5: #{basic_block.4} parent=0 // loop_body
    %s16 = ssub.s32 %s11, 1
    %s17 = ssub.s32 %s11, 2
    %s18 = sadd.s32 %s11, 1
    %s19 = ssub.s32 %s11, %s18
    %p20 = scmp.eq.s32.totalorder %s19, 0
    %s22 = sadd.s32 %s21, 1
    %s23 = scalar_select %p20, %s21, %s22
    %p26 = pneg %p20
    %p27 = scmp.eq.s32.totalorder %s11, 1
    %p28 = por %p26, %p27
    %p29 = scmp.ne.s32.totalorder %s21, %s24
    %p30 = scmp.eq.s32.totalorder %s11, 0
    %p31 = por %p29, %p30
    %p32 = scmp.ne.s32.totalorder %s21, %s24
    %p33 = scmp.eq.s32.totalorder %s16, 1
    %p34 = por %p32, %p33
    %p35 = scmp.ne.s32.totalorder %s24, %s25
    %p36 = scmp.eq.s32.totalorder %s16, 0
    %p37 = por %p35, %p36
    %p38 = scmp.ne.s32.totalorder %s24, %s25
    %p39 = scmp.eq.s32.totalorder %s17, 1
    %p40 = por %p38, %p39
    %p42 = scmp.ne.s32.totalorder %s25, %s41
    %p43 = scmp.eq.s32.totalorder %s17, 0
    %p44 = por %p42, %p43
    %s46 = sadd.s32 %s45, 1
    %p49 = scmp.eq.s32.totalorder %s11, 1
    %p50 = scmp.ne.s32.totalorder %s45, %s47
    %p51 = scmp.eq.s32.totalorder %s11, 0
    %p52 = por %p50, %p51
    %p53 = scmp.ne.s32.totalorder %s45, %s47
    %p54 = scmp.eq.s32.totalorder %s16, 1
    %p55 = por %p53, %p54
    %p56 = scmp.ne.s32.totalorder %s47, %s48
    %p57 = scmp.eq.s32.totalorder %s16, 0
    %p58 = por %p56, %p57
    %p59 = scmp.ne.s32.totalorder %s47, %s48
    %p60 = scmp.eq.s32.totalorder %s17, 1
    %p61 = por %p59, %p60
    %p63 = scmp.ne.s32.totalorder %s48, %s62
    %p64 = scmp.eq.s32.totalorder %s17, 0
    %p65 = por %p63, %p64
    %s67 = sadd.s32 %s66, 1
    %p70 = scmp.eq.s32.totalorder %s11, 1
    %p71 = scmp.ne.s32.totalorder %s66, %s68
    %p72 = scmp.eq.s32.totalorder %s11, 0
    %p73 = por %p71, %p72
    %p74 = scmp.ne.s32.totalorder %s66, %s68
    %p75 = scmp.eq.s32.totalorder %s16, 1
    %p76 = por %p74, %p75
    %p77 = scmp.ne.s32.totalorder %s68, %s69
    %p78 = scmp.eq.s32.totalorder %s16, 0
    %p79 = por %p77, %p78
    %p80 = scmp.ne.s32.totalorder %s68, %s69
    %p81 = scmp.eq.s32.totalorder %s17, 1
    %p82 = por %p80, %p81
    %p84 = scmp.ne.s32.totalorder %s69, %s83
    %p85 = scmp.eq.s32.totalorder %s17, 0
    %p86 = por %p84, %p85
    %s87 = ssub.s32 %s11, %s18
    %p88 = scmp.eq.s32.totalorder %s87, 0
    %s90 = sadd.s32 %s89, 1
    %s91 = scalar_select %p88, %s89, %s90
    %p94 = pneg %p88
    %p95 = scmp.eq.s32.totalorder %s11, 1
    %p96 = por %p94, %p95
    %p97 = scmp.ne.s32.totalorder %s89, %s92
    %p98 = scmp.eq.s32.totalorder %s11, 0
    %p99 = por %p97, %p98
    %p100 = scmp.ne.s32.totalorder %s89, %s92
    %p101 = scmp.eq.s32.totalorder %s16, 1
    %p102 = por %p100, %p101
    %p103 = scmp.ne.s32.totalorder %s92, %s93
    %p104 = scmp.eq.s32.totalorder %s16, 0
    %p105 = por %p103, %p104
    %p106 = scmp.ne.s32.totalorder %s92, %s93
    %p107 = scmp.eq.s32.totalorder %s17, 1
    %p108 = por %p106, %p107
    %p110 = scmp.ne.s32.totalorder %s93, %s109
    %p111 = scmp.eq.s32.totalorder %s17, 0
    %p112 = por %p110, %p111
    %s113 = ssub.s32 %s11, %s18
    %p114 = scmp.eq.s32.totalorder %s113, 0
    %s116 = sadd.s32 %s115, 1
    %s117 = scalar_select %p114, %s115, %s116
    %p120 = pneg %p114
    %p121 = scmp.eq.s32.totalorder %s11, 1
    %p122 = por %p120, %p121
    %p123 = scmp.ne.s32.totalorder %s115, %s118
    %p124 = scmp.eq.s32.totalorder %s11, 0
    %p125 = por %p123, %p124
    %p126 = scmp.ne.s32.totalorder %s115, %s118
    %p127 = scmp.eq.s32.totalorder %s16, 1
    %p128 = por %p126, %p127
    %p129 = scmp.ne.s32.totalorder %s118, %s119
    %p130 = scmp.eq.s32.totalorder %s16, 0
    %p131 = por %p129, %p130
    %p132 = scmp.ne.s32.totalorder %s118, %s119
    %p133 = scmp.eq.s32.totalorder %s17, 1
    %p134 = por %p132, %p133
    %p136 = scmp.ne.s32.totalorder %s119, %s135
    %p137 = scmp.eq.s32.totalorder %s17, 0
    %p138 = por %p136, %p137
    %p139 = scmp.le.s32.totalorder 1, %s11
    %p140 = scmp.lt.s32.totalorder %s11, 3
    %p141 = pnand %p139, %p140
    %p142 = pneg %p141
    // Predicated region
    $region9: #{basic_block.4} parent=5 // pred_check
      _
    $region10: #{basic_block.4} parent=5 // pred_check_branch
      %144 = sbr.rel (%p141) target = $region12
    $region11: #{basic_block.4} parent=5 // pred_region
      %s145 = ssub.s32 %s11, 1
      // Predicated region
      $region13: #{basic_block.4} parent=11 // pred_check
        %p146 = pneg %p58
      $region14: #{basic_block.4} parent=11 // pred_check_branch
        %148 = sbr.rel (%p146) target = $region16
      $region15: #{basic_block.4} parent=11 // pred_region
        _
      $region16: #{basic_block.4} parent=11 // pred_fallthru
        _
      // Predicated region
      $region17: #{basic_block.4} parent=11 // pred_check
        %p149 = pneg %p79
      $region18: #{basic_block.4} parent=11 // pred_check_branch
        %151 = sbr.rel (%p149) target = $region20
      $region19: #{basic_block.4} parent=11 // pred_region
        _
      $region20: #{basic_block.4} parent=11 // pred_fallthru
        _
    $region12: #{basic_block.4} parent=5 // pred_fallthru
      _
    %p152 = scmp.lt.s32.totalorder %s11, 2
    // Predicated region
    $region21: #{basic_block.4} parent=5 // pred_check
      %p153 = pneg %p152
    $region22: #{basic_block.4} parent=5 // pred_check_branch
      %155 = sbr.rel (%p153) target = $region24
    $region23: #{basic_block.4} parent=5 // pred_region
      // Predicated region
      $region25: #{basic_block.4} parent=23 // pred_check
        %p156 = pneg %p31
      $region26: #{basic_block.4} parent=23 // pred_check_branch
        %158 = sbr.rel (%p156) target = $region28
      $region27: #{basic_block.4} parent=23 // pred_region
        %p159 = scmp.lt.s32.totalorder %s11, 1
        %s160 = scalar_select %p159, %s11, 1
        %s161 = smul.addr %s160, 32
        %s162 = smul.addr %s161, 8
        %s163 = scalar_lea.vmem %s0, %s162
      $region28: #{basic_block.4} parent=23 // pred_fallthru
        _
    $region24: #{basic_block.4} parent=5 // pred_fallthru
      _
    %p164 = scmp.le.s32.totalorder 1, %s11
    %p165 = scmp.lt.s32.totalorder %s11, 3
    %p166 = pnand %p164, %p165
    %p167 = pneg %p166
    // Predicated region
    $region29: #{basic_block.4} parent=5 // pred_check
      _
    $region30: #{basic_block.4} parent=5 // pred_check_branch
      %169 = sbr.rel (%p166) target = $region32
    $region31: #{basic_block.4} parent=5 // pred_region
      %s170 = ssub.s32 %s11, 1
      %p171 = scmp.lt.s32.totalorder %s16, 1
      %s172 = scalar_select %p171, %s16, 1
      %s173 = smul.addr %s172, 32
      %s174 = smul.addr %s173, 8
      %s175 = scalar_lea.vmem %s0, %s174
      %p176 = pneg %p37
      %p177 = pneg %p34
      %p178 = pneg %p58
      %p179 = pneg %p55
      %p180 = pneg %p79
      %p181 = pneg %p76
      %p182 = pneg %p105
      %p183 = pneg %p102
      %p184 = scmp.lt.s32.totalorder %s16, 1
      %s185 = scalar_select %p184, %s16, 1
      %s186 = smul.addr %s185, 32
      %s187 = smul.addr %s186, 8
      %s188 = scalar_lea.vmem %s3, %s187
      %p189 = pneg %p131
      %p190 = pneg %p128
      %p191 = scmp.lt.s32.totalorder %s16, 1
      %s192 = scalar_select %p191, %s16, 1
      %s193 = smul.addr %s192, 2
      %s194 = scalar_lea.vmem %s4, %s193
      %p195 = scmp.lt.s32.totalorder %s16, 1
      %s196 = scalar_select %p195, %s16, 1
      %s197 = smul.addr %s196, 32
      %s198 = smul.addr %s197, 8
      %s199 = scalar_lea.vmem %s0, %s198
      %p200 = scmp.lt.s32.totalorder %s16, 1
      %s201 = scalar_select %p200, %s16, 1
      %s202 = smul.addr %s201, 32
      %s203 = smul.addr %s202, 8
      %s204 = scalar_lea.vmem %s3, %s203
      %p205 = scmp.lt.s32.totalorder %s16, 1
      %s206 = scalar_select %p205, %s16, 1
      %s207 = smul.addr %s206, 2
      %s208 = scalar_lea.vmem %s4, %s207
      %v209 = vld [vmem:[%s1] sm:$0x3]
      %v210 = vld [vmem:[%s199] sm:$0xff]
      %v211 = vld [vmem:[%s199 + $0x8] sm:$0xff]
      %v212 = vld [vmem:[%s199 + $0x10] sm:$0xff]
      %v213 = vld [vmem:[%s199 + $0x18] sm:$0xff]
      %v214 = vld [vmem:[%s199 + $0x20] sm:$0xff]
      %v215 = vld [vmem:[%s199 + $0x28] sm:$0xff]
      %v216 = vld [vmem:[%s199 + $0x30] sm:$0xff]
      %v217 = vld [vmem:[%s199 + $0x38] sm:$0xff]
      %v218 = vld [vmem:[%s199 + $0x40] sm:$0xff]
      %v219 = vld [vmem:[%s199 + $0x48] sm:$0xff]
      %v220 = vld [vmem:[%s199 + $0x50] sm:$0xff]
      %v221 = vld [vmem:[%s199 + $0x58] sm:$0xff]
      %v222 = vld [vmem:[%s199 + $0x60] sm:$0xff]
      %v223 = vld [vmem:[%s199 + $0x68] sm:$0xff]
      %v224 = vld [vmem:[%s199 + $0x70] sm:$0xff]
      %v225 = vld [vmem:[%s199 + $0x78] sm:$0xff]
      %v226 = vld [vmem:[%s199 + $0x80] sm:$0xff]
      %v227 = vld [vmem:[%s199 + $0x88] sm:$0xff]
      %v228 = vld [vmem:[%s199 + $0x90] sm:$0xff]
      %v229 = vld [vmem:[%s199 + $0x98] sm:$0xff]
      %v230 = vld [vmem:[%s199 + $0xa0] sm:$0xff]
      %v231 = vld [vmem:[%s199 + $0xa8] sm:$0xff]
      %v232 = vld [vmem:[%s199 + $0xb0] sm:$0xff]
      %v233 = vld [vmem:[%s199 + $0xb8] sm:$0xff]
      %v234 = vld [vmem:[%s199 + $0xc0] sm:$0xff]
      %v235 = vld [vmem:[%s199 + $0xc8] sm:$0xff]
      %v236 = vld [vmem:[%s199 + $0xd0] sm:$0xff]
      %v237 = vld [vmem:[%s199 + $0xd8] sm:$0xff]
      %v238 = vld [vmem:[%s199 + $0xe0] sm:$0xff]
      %v239 = vld [vmem:[%s199 + $0xe8] sm:$0xff]
      %v240 = vld [vmem:[%s199 + $0xf0] sm:$0xff]
      %v241 = vld [vmem:[%s199 + $0xf8] sm:$0xff]
      %v242 = vperm.slane %v209, 0
      %v243 = vmul.f32 %v210, %v242
      %v244 = vmul.f32 %v211, %v242
      %v245 = vmul.f32 %v212, %v242
      %v246 = vmul.f32 %v213, %v242
      %v247 = vmul.f32 %v214, %v242
      %v248 = vmul.f32 %v215, %v242
      %v249 = vmul.f32 %v216, %v242
      %v250 = vmul.f32 %v217, %v242
      %v251 = vmul.f32 %v218, %v242
      %v252 = vmul.f32 %v219, %v242
      %v253 = vmul.f32 %v220, %v242
      %v254 = vmul.f32 %v221, %v242
      %v255 = vmul.f32 %v222, %v242
      %v256 = vmul.f32 %v223, %v242
      %v257 = vmul.f32 %v224, %v242
      %v258 = vmul.f32 %v225, %v242
      %v259 = vmul.f32 %v226, %v242
      %v260 = vmul.f32 %v227, %v242
      %v261 = vmul.f32 %v228, %v242
      %v262 = vmul.f32 %v229, %v242
      %v263 = vmul.f32 %v230, %v242
      %v264 = vmul.f32 %v231, %v242
      %v265 = vmul.f32 %v232, %v242
      %v266 = vmul.f32 %v233, %v242
      %v267 = vmul.f32 %v234, %v242
      %v268 = vmul.f32 %v235, %v242
      %v269 = vmul.f32 %v236, %v242
      %v270 = vmul.f32 %v237, %v242
      %v271 = vmul.f32 %v238, %v242
      %v272 = vmul.f32 %v239, %v242
      %v273 = vmul.f32 %v240, %v242
      %v274 = vmul.f32 %v241, %v242
      %v275 = vperm.slane %v209, 1
      %v276 = vadd.f32 %v243, %v275
      %v277 = vadd.f32 %v244, %v275
      %v278 = vadd.f32 %v245, %v275
      %v279 = vadd.f32 %v246, %v275
      %v280 = vadd.f32 %v247, %v275
      %v281 = vadd.f32 %v248, %v275
      %v282 = vadd.f32 %v249, %v275
      %v283 = vadd.f32 %v250, %v275
      %v284 = vadd.f32 %v251, %v275
      %v285 = vadd.f32 %v252, %v275
      %v286 = vadd.f32 %v253, %v275
      %v287 = vadd.f32 %v254, %v275
      %v288 = vadd.f32 %v255, %v275
      %v289 = vadd.f32 %v256, %v275
      %v290 = vadd.f32 %v257, %v275
      %v291 = vadd.f32 %v258, %v275
      %v292 = vadd.f32 %v259, %v275
      %v293 = vadd.f32 %v260, %v275
      %v294 = vadd.f32 %v261, %v275
      %v295 = vadd.f32 %v262, %v275
      %v296 = vadd.f32 %v263, %v275
      %v297 = vadd.f32 %v264, %v275
      %v298 = vadd.f32 %v265, %v275
      %v299 = vadd.f32 %v266, %v275
      %v300 = vadd.f32 %v267, %v275
      %v301 = vadd.f32 %v268, %v275
      %v302 = vadd.f32 %v269, %v275
      %v303 = vadd.f32 %v270, %v275
      %v304 = vadd.f32 %v271, %v275
      %v305 = vadd.f32 %v272, %v275
      %v306 = vadd.f32 %v273, %v275
      %v307 = vadd.f32 %v274, %v275
      %v308 = vmax.f32 %v276, 0.0
      %v309 = vmax.f32 %v277, 0.0
      %v310 = vmax.f32 %v278, 0.0
      %v311 = vmax.f32 %v279, 0.0
      %v312 = vmax.f32 %v280, 0.0
      %v313 = vmax.f32 %v281, 0.0
      %v314 = vmax.f32 %v282, 0.0
      %v315 = vmax.f32 %v283, 0.0
      %v316 = vmax.f32 %v284, 0.0
      %v317 = vmax.f32 %v285, 0.0
      %v318 = vmax.f32 %v286, 0.0
      %v319 = vmax.f32 %v287, 0.0
      %v320 = vmax.f32 %v288, 0.0
      %v321 = vmax.f32 %v289, 0.0
      %v322 = vmax.f32 %v290, 0.0
      %v323 = vmax.f32 %v291, 0.0
      %v324 = vmax.f32 %v292, 0.0
      %v325 = vmax.f32 %v293, 0.0
      %v326 = vmax.f32 %v294, 0.0
      %v327 = vmax.f32 %v295, 0.0
      %v328 = vmax.f32 %v296, 0.0
      %v329 = vmax.f32 %v297, 0.0
      %v330 = vmax.f32 %v298, 0.0
      %v331 = vmax.f32 %v299, 0.0
      %v332 = vmax.f32 %v300, 0.0
      %v333 = vmax.f32 %v301, 0.0
      %v334 = vmax.f32 %v302, 0.0
      %v335 = vmax.f32 %v303, 0.0
      %v336 = vmax.f32 %v304, 0.0
      %v337 = vmax.f32 %v305, 0.0
      %v338 = vmax.f32 %v306, 0.0
      %v339 = vmax.f32 %v307, 0.0
      %340 = vst [vmem:[#allocation2] sm:$0xff] 0.0
      %341 = vst [vmem:[#allocation2 + $0x8] sm:$0xff] 0.0
      %342 = vst [vmem:[#allocation2 + $0x10] sm:$0xff] 0.0
      %s343 = scalar_lea.vmem [#allocation2], 408
      %344 = vst [vmem:[%s343] sm:$0xff] 0.0
      %345 = vst [vmem:[%s343 + $0x8] sm:$0xff] 0.0
      %346 = vst [vmem:[%s343 + $0x10] sm:$0xff] 0.0
      %347 = vst [vmem:[#allocation2] sm:$0x1] 0.0
      %348 = vst [vmem:[#allocation2 + $0x18] sm:$0x1] 0.0
      %349 = vst [vmem:[#allocation2 + $0x30] sm:$0x1] 0.0
      %350 = vst [vmem:[#allocation2 + $0x48] sm:$0x1] 0.0
      %351 = vst [vmem:[#allocation2 + $0x60] sm:$0x1] 0.0
      %352 = vst [vmem:[#allocation2 + $0x78] sm:$0x1] 0.0
      %353 = vst [vmem:[#allocation2 + $0x90] sm:$0x1] 0.0
      %354 = vst [vmem:[#allocation2 + $0xa8] sm:$0x1] 0.0
      %355 = vst [vmem:[#allocation2 + $0xc0] sm:$0x1] 0.0
      %356 = vst [vmem:[#allocation2 + $0xd8] sm:$0x1] 0.0
      %357 = vst [vmem:[#allocation2 + $0xf0] sm:$0x1] 0.0
      %358 = vst [vmem:[#allocation2 + $0x108] sm:$0x1] 0.0
      %359 = vst [vmem:[#allocation2 + $0x120] sm:$0x1] 0.0
      %360 = vst [vmem:[#allocation2 + $0x138] sm:$0x1] 0.0
      %361 = vst [vmem:[#allocation2 + $0x150] sm:$0x1] 0.0
      %362 = vst [vmem:[#allocation2 + $0x168] sm:$0x1] 0.0
      %363 = vst [vmem:[#allocation2 + $0x180] sm:$0x1] 0.0
      %364 = vst [vmem:[#allocation2 + $0x198] sm:$0x1] 0.0
      %365 = vst [vmem:[#allocation2 + $0x11] sm:$0x1] 0.0
      %366 = vst [vmem:[#allocation2 + $0x29] sm:$0x1] 0.0
      %367 = vst [vmem:[#allocation2 + $0x41] sm:$0x1] 0.0
      %368 = vst [vmem:[#allocation2 + $0x59] sm:$0x1] 0.0
      %369 = vst [vmem:[#allocation2 + $0x71] sm:$0x1] 0.0
      %370 = vst [vmem:[#allocation2 + $0x89] sm:$0x1] 0.0
      %371 = vst [vmem:[#allocation2 + $0xa1] sm:$0x1] 0.0
      %372 = vst [vmem:[#allocation2 + $0xb9] sm:$0x1] 0.0
      %373 = vst [vmem:[#allocation2 + $0xd1] sm:$0x1] 0.0
      %374 = vst [vmem:[#allocation2 + $0xe9] sm:$0x1] 0.0
      %375 = vst [vmem:[#allocation2 + $0x101] sm:$0x1] 0.0
      %376 = vst [vmem:[#allocation2 + $0x119] sm:$0x1] 0.0
      %377 = vst [vmem:[#allocation2 + $0x131] sm:$0x1] 0.0
      %378 = vst [vmem:[#allocation2 + $0x149] sm:$0x1] 0.0
      %379 = vst [vmem:[#allocation2 + $0x161] sm:$0x1] 0.0
      %380 = vst [vmem:[#allocation2 + $0x179] sm:$0x1] 0.0
      %381 = vst [vmem:[#allocation2 + $0x191] sm:$0x1] 0.0
      %382 = vst [vmem:[#allocation2 + $0x1a9] sm:$0x1] 0.0
      %s383 = scalar_lea.vmem [#allocation2], 24
      %384 = vst [vmem:[%s383 + $0x1] sm:$0xff] %v308
      %385 = vst [vmem:[%s383 + $0x9] sm:$0xff] %v309
      %386 = vst [vmem:[%s383 + $0x19] sm:$0xff] %v310
      %387 = vst [vmem:[%s383 + $0x21] sm:$0xff] %v311
      %388 = vst [vmem:[%s383 + $0x31] sm:$0xff] %v312
      %389 = vst [vmem:[%s383 + $0x39] sm:$0xff] %v313
      %390 = vst [vmem:[%s383 + $0x49] sm:$0xff] %v314
      %391 = vst [vmem:[%s383 + $0x51] sm:$0xff] %v315
      %392 = vst [vmem:[%s383 + $0x61] sm:$0xff] %v316
      %393 = vst [vmem:[%s383 + $0x69] sm:$0xff] %v317
      %394 = vst [vmem:[%s383 + $0x79] sm:$0xff] %v318
      %395 = vst [vmem:[%s383 + $0x81] sm:$0xff] %v319
      %396 = vst [vmem:[%s383 + $0x91] sm:$0xff] %v320
      %397 = vst [vmem:[%s383 + $0x99] sm:$0xff] %v321
      %398 = vst [vmem:[%s383 + $0xa9] sm:$0xff] %v322
      %399 = vst [vmem:[%s383 + $0xb1] sm:$0xff] %v323
      %400 = vst [vmem:[%s383 + $0xc1] sm:$0xff] %v324
      %401 = vst [vmem:[%s383 + $0xc9] sm:$0xff] %v325
      %402 = vst [vmem:[%s383 + $0xd9] sm:$0xff] %v326
      %403 = vst [vmem:[%s383 + $0xe1] sm:$0xff] %v327
      %404 = vst [vmem:[%s383 + $0xf1] sm:$0xff] %v328
      %405 = vst [vmem:[%s383 + $0xf9] sm:$0xff] %v329
      %406 = vst [vmem:[%s383 + $0x109] sm:$0xff] %v330
      %407 = vst [vmem:[%s383 + $0x111] sm:$0xff] %v331
      %408 = vst [vmem:[%s383 + $0x121] sm:$0xff] %v332
      %409 = vst [vmem:[%s383 + $0x129] sm:$0xff] %v333
      %410 = vst [vmem:[%s383 + $0x139] sm:$0xff] %v334
      %411 = vst [vmem:[%s383 + $0x141] sm:$0xff] %v335
      %412 = vst [vmem:[%s383 + $0x151] sm:$0xff] %v336
      %413 = vst [vmem:[%s383 + $0x159] sm:$0xff] %v337
      %414 = vst [vmem:[%s383 + $0x169] sm:$0xff] %v338
      %415 = vst [vmem:[%s383 + $0x171] sm:$0xff] %v339
      %v416 = vld [vmem:[#allocation2] sm:$0xff]
      %v417 = vld [vmem:[#allocation2 + $0x8] sm:$0xff]
      %v418 = vld [vmem:[#allocation2 + $0x18] sm:$0xff]
      %v419 = vld [vmem:[#allocation2 + $0x20] sm:$0xff]
      %v420 = vld [vmem:[#allocation2 + $0x30] sm:$0xff]
      %v421 = vld [vmem:[#allocation2 + $0x38] sm:$0xff]
      %v422 = vld [vmem:[#allocation2 + $0x48] sm:$0xff]
      %v423 = vld [vmem:[#allocation2 + $0x50] sm:$0xff]
      %v424 = vld [vmem:[#allocation2 + $0x60] sm:$0xff]
      %v425 = vld [vmem:[#allocation2 + $0x68] sm:$0xff]
      %v426 = vld [vmem:[#allocation2 + $0x78] sm:$0xff]
      %v427 = vld [vmem:[#allocation2 + $0x80] sm:$0xff]
      %v428 = vld [vmem:[#allocation2 + $0x90] sm:$0xff]
      %v429 = vld [vmem:[#allocation2 + $0x98] sm:$0xff]
      %v430 = vld [vmem:[#allocation2 + $0xa8] sm:$0xff]
      %v431 = vld [vmem:[#allocation2 + $0xb0] sm:$0xff]
      %v432 = vld [vmem:[#allocation2 + $0xc0] sm:$0xff]
      %v433 = vld [vmem:[#allocation2 + $0xc8] sm:$0xff]
      %v434 = vld [vmem:[#allocation2 + $0xd8] sm:$0xff]
      %v435 = vld [vmem:[#allocation2 + $0xe0] sm:$0xff]
      %v436 = vld [vmem:[#allocation2 + $0xf0] sm:$0xff]
      %v437 = vld [vmem:[#allocation2 + $0xf8] sm:$0xff]
      %v438 = vld [vmem:[#allocation2 + $0x108] sm:$0xff]
      %v439 = vld [vmem:[#allocation2 + $0x110] sm:$0xff]
      %v440 = vld [vmem:[#allocation2 + $0x120] sm:$0xff]
      %v441 = vld [vmem:[#allocation2 + $0x128] sm:$0xff]
      %v442 = vld [vmem:[#allocation2 + $0x138] sm:$0xff]
      %v443 = vld [vmem:[#allocation2 + $0x140] sm:$0xff]
      %v444 = vld [vmem:[#allocation2 + $0x150] sm:$0xff]
      %v445 = vld [vmem:[#allocation2 + $0x158] sm:$0xff]
      %v446 = vld [vmem:[#allocation2 + $0x168] sm:$0xff]
      %v447 = vld [vmem:[#allocation2 + $0x170] sm:$0xff]
      %v448 = vld [vmem:[%s2] sm:$0xff]
      %v449 = vld [vmem:[%s2 + $0x8] sm:$0xff]
      %v450 = vld [vmem:[%s2 + $0x10] sm:$0xff]
      %v451 = vld [vmem:[%s2 + $0x18] sm:$0xff]
      %v452 = vld [vmem:[%s2 + $0x20] sm:$0xff]
      %v453 = vld [vmem:[%s2 + $0x28] sm:$0xff]
      %v454 = vld [vmem:[%s2 + $0x30] sm:$0xff]
      %v455 = vld [vmem:[%s2 + $0x38] sm:$0xff]
      %v456 = vld [vmem:[%s2 + $0x40] sm:$0xff]
      %v457 = vld [vmem:[%s2 + $0x48] sm:$0xff]
      %v458 = vld [vmem:[%s2 + $0x50] sm:$0xff]
      %v459 = vld [vmem:[%s2 + $0x58] sm:$0xff]
      %v460 = vld [vmem:[%s2 + $0x60] sm:$0xff]
      %v461 = vld [vmem:[%s2 + $0x68] sm:$0xff]
      %v462 = vld [vmem:[%s2 + $0x70] sm:$0xff]
      %v463 = vld [vmem:[%s2 + $0x78] sm:$0xff]
      %v464 = vld [vmem:[#allocation2 + $0x1] sm:$0xff]
      %v465 = vld [vmem:[#allocation2 + $0x9] sm:$0xff]
      %v466 = vld [vmem:[#allocation2 + $0x19] sm:$0xff]
      %v467 = vld [vmem:[#allocation2 + $0x21] sm:$0xff]
      %v468 = vld [vmem:[#allocation2 + $0x31] sm:$0xff]
      %v469 = vld [vmem:[#allocation2 + $0x39] sm:$0xff]
      %v470 = vld [vmem:[#allocation2 + $0x49] sm:$0xff]
      %v471 = vld [vmem:[#allocation2 + $0x51] sm:$0xff]
      %v472 = vld [vmem:[#allocation2 + $0x61] sm:$0xff]
      %v473 = vld [vmem:[#allocation2 + $0x69] sm:$0xff]
      %v474 = vld [vmem:[#allocation2 + $0x79] sm:$0xff]
      %v475 = vld [vmem:[#allocation2 + $0x81] sm:$0xff]
      %v476 = vld [vmem:[#allocation2 + $0x91] sm:$0xff]
      %v477 = vld [vmem:[#allocation2 + $0x99] sm:$0xff]
      %v478 = vld [vmem:[#allocation2 + $0xa9] sm:$0xff]
      %v479 = vld [vmem:[#allocation2 + $0xb1] sm:$0xff]
      %v480 = vld [vmem:[#allocation2 + $0xc1] sm:$0xff]
      %v481 = vld [vmem:[#allocation2 + $0xc9] sm:$0xff]
      %v482 = vld [vmem:[#allocation2 + $0xd9] sm:$0xff]
      %v483 = vld [vmem:[#allocation2 + $0xe1] sm:$0xff]
      %v484 = vld [vmem:[#allocation2 + $0xf1] sm:$0xff]
      %v485 = vld [vmem:[#allocation2 + $0xf9] sm:$0xff]
      %v486 = vld [vmem:[#allocation2 + $0x109] sm:$0xff]
      %v487 = vld [vmem:[#allocation2 + $0x111] sm:$0xff]
      %v488 = vld [vmem:[#allocation2 + $0x121] sm:$0xff]
      %v489 = vld [vmem:[#allocation2 + $0x129] sm:$0xff]
      %v490 = vld [vmem:[#allocation2 + $0x139] sm:$0xff]
      %v491 = vld [vmem:[#allocation2 + $0x141] sm:$0xff]
      %v492 = vld [vmem:[#allocation2 + $0x151] sm:$0xff]
      %v493 = vld [vmem:[#allocation2 + $0x159] sm:$0xff]
      %v494 = vld [vmem:[#allocation2 + $0x169] sm:$0xff]
      %v495 = vld [vmem:[#allocation2 + $0x171] sm:$0xff]
      %s496 = scalar_lea.vmem %s2, 128
      %v497 = vld [vmem:[%s496] sm:$0xff]
      %v498 = vld [vmem:[%s496 + $0x8] sm:$0xff]
      %v499 = vld [vmem:[%s496 + $0x10] sm:$0xff]
      %v500 = vld [vmem:[%s496 + $0x18] sm:$0xff]
      %v501 = vld [vmem:[%s496 + $0x20] sm:$0xff]
      %v502 = vld [vmem:[%s496 + $0x28] sm:$0xff]
      %v503 = vld [vmem:[%s496 + $0x30] sm:$0xff]
      %v504 = vld [vmem:[%s496 + $0x38] sm:$0xff]
      %v505 = vld [vmem:[%s496 + $0x40] sm:$0xff]
      %v506 = vld [vmem:[%s496 + $0x48] sm:$0xff]
      %v507 = vld [vmem:[%s496 + $0x50] sm:$0xff]
      %v508 = vld [vmem:[%s496 + $0x58] sm:$0xff]
      %v509 = vld [vmem:[%s496 + $0x60] sm:$0xff]
      %v510 = vld [vmem:[%s496 + $0x68] sm:$0xff]
      %v511 = vld [vmem:[%s496 + $0x70] sm:$0xff]
      %v512 = vld [vmem:[%s496 + $0x78] sm:$0xff]
      %513 = vmatpush.msra.mxu0 %v512
      %514 = vmatpush.msra.mxu0 %v511
      %515 = vmatpush.msra.mxu0 %v510
      %516 = vmatpush.msra.mxu0 %v509
      %517 = vmatpush.msra.mxu0 %v508
      %518 = vmatpush.msra.mxu0 %v507
      %519 = vmatpush.msra.mxu0 %v506
      %520 = vmatpush.msra.mxu0 %v505
      %521 = vmatpush.msra.mxu0 %v504
      %522 = vmatpush.msra.mxu0 %v503
      %523 = vmatpush.msra.mxu0 %v502
      %524 = vmatpush.msra.mxu0 %v501
      %525 = vmatpush.msra.mxu0 %v500
      %526 = vmatpush.msra.mxu0 %v499
      %527 = vmatpush.msra.mxu0 %v498
      %528 = vmatpush.msra.mxu0 %v497
      %529 = vmatmul.f32.gmra.mxu0 %v464
      %v530 = vpop.f32.mrf.mxu0
      %v531 = vadd.f32 0.0, %v530
      %532 = vmatmul.f32.gmra.mxu0 %v465
      %v533 = vpop.f32.mrf.mxu0
      %v534 = vadd.f32 0.0, %v533
      %535 = vmatmul.f32.gmra.mxu0 %v466
      %v536 = vpop.f32.mrf.mxu0
      %v537 = vadd.f32 0.0, %v536
      %538 = vmatmul.f32.gmra.mxu0 %v467
      %v539 = vpop.f32.mrf.mxu0
      %v540 = vadd.f32 0.0, %v539
      %541 = vmatmul.f32.gmra.mxu0 %v468
      %v542 = vpop.f32.mrf.mxu0
      %v543 = vadd.f32 0.0, %v542
      %544 = vmatmul.f32.gmra.mxu0 %v469
      %v545 = vpop.f32.mrf.mxu0
      %v546 = vadd.f32 0.0, %v545
      %547 = vmatmul.f32.gmra.mxu0 %v470
      %v548 = vpop.f32.mrf.mxu0
      %v549 = vadd.f32 0.0, %v548
      %550 = vmatmul.f32.gmra.mxu0 %v471
      %v551 = vpop.f32.mrf.mxu0
      %v552 = vadd.f32 0.0, %v551
      %553 = vmatmul.f32.gmra.mxu0 %v472
      %v554 = vpop.f32.mrf.mxu0
      %v555 = vadd.f32 0.0, %v554
      %556 = vmatmul.f32.gmra.mxu0 %v473
      %v557 = vpop.f32.mrf.mxu0
      %v558 = vadd.f32 0.0, %v557
      %559 = vmatmul.f32.gmra.mxu0 %v474
      %v560 = vpop.f32.mrf.mxu0
      %v561 = vadd.f32 0.0, %v560
      %562 = vmatmul.f32.gmra.mxu0 %v475
      %v563 = vpop.f32.mrf.mxu0
      %v564 = vadd.f32 0.0, %v563
      %565 = vmatmul.f32.gmra.mxu0 %v476
      %v566 = vpop.f32.mrf.mxu0
      %v567 = vadd.f32 0.0, %v566
      %568 = vmatmul.f32.gmra.mxu0 %v477
      %v569 = vpop.f32.mrf.mxu0
      %v570 = vadd.f32 0.0, %v569
      %571 = vmatmul.f32.gmra.mxu0 %v478
      %v572 = vpop.f32.mrf.mxu0
      %v573 = vadd.f32 0.0, %v572
      %574 = vmatmul.f32.gmra.mxu0 %v479
      %v575 = vpop.f32.mrf.mxu0
      %v576 = vadd.f32 0.0, %v575
      %577 = vmatmul.f32.gmra.mxu0 %v480
      %v578 = vpop.f32.mrf.mxu0
      %v579 = vadd.f32 0.0, %v578
      %580 = vmatmul.f32.gmra.mxu0 %v481
      %v581 = vpop.f32.mrf.mxu0
      %v582 = vadd.f32 0.0, %v581
      %583 = vmatmul.f32.gmra.mxu0 %v482
      %v584 = vpop.f32.mrf.mxu0
      %v585 = vadd.f32 0.0, %v584
      %586 = vmatmul.f32.gmra.mxu0 %v483
      %v587 = vpop.f32.mrf.mxu0
      %v588 = vadd.f32 0.0, %v587
      %589 = vmatmul.f32.gmra.mxu0 %v484
      %v590 = vpop.f32.mrf.mxu0
      %v591 = vadd.f32 0.0, %v590
      %592 = vmatmul.f32.gmra.mxu0 %v485
      %v593 = vpop.f32.mrf.mxu0
      %v594 = vadd.f32 0.0, %v593
      %595 = vmatmul.f32.gmra.mxu0 %v486
      %v596 = vpop.f32.mrf.mxu0
      %v597 = vadd.f32 0.0, %v596
      %598 = vmatmul.f32.gmra.mxu0 %v487
      %v599 = vpop.f32.mrf.mxu0
      %v600 = vadd.f32 0.0, %v599
      %601 = vmatmul.f32.gmra.mxu0 %v488
      %v602 = vpop.f32.mrf.mxu0
      %v603 = vadd.f32 0.0, %v602
      %604 = vmatmul.f32.gmra.mxu0 %v489
      %v605 = vpop.f32.mrf.mxu0
      %v606 = vadd.f32 0.0, %v605
      %607 = vmatmul.f32.gmra.mxu0 %v490
      %v608 = vpop.f32.mrf.mxu0
      %v609 = vadd.f32 0.0, %v608
      %610 = vmatmul.f32.gmra.mxu0 %v491
      %v611 = vpop.f32.mrf.mxu0
      %v612 = vadd.f32 0.0, %v611
      %613 = vmatmul.f32.gmra.mxu0 %v492
      %v614 = vpop.f32.mrf.mxu0
      %v615 = vadd.f32 0.0, %v614
      %616 = vmatmul.f32.gmra.mxu0 %v493
      %v617 = vpop.f32.mrf.mxu0
      %v618 = vadd.f32 0.0, %v617
      %619 = vmatmul.f32.gmra.mxu0 %v494
      %v620 = vpop.f32.mrf.mxu0
      %v621 = vadd.f32 0.0, %v620
      %622 = vmatmul.f32.gmra.mxu0 %v495
      %v623 = vpop.f32.mrf.mxu0
      %v624 = vadd.f32 0.0, %v623
      %625 = vdwg.mxu0
      %626 = vmatpush.msra.mxu0 %v463
      %627 = vmatpush.msra.mxu0 %v462
      %628 = vmatpush.msra.mxu0 %v461
      %629 = vmatpush.msra.mxu0 %v460
      %630 = vmatpush.msra.mxu0 %v459
      %631 = vmatpush.msra.mxu0 %v458
      %632 = vmatpush.msra.mxu0 %v457
      %633 = vmatpush.msra.mxu0 %v456
      %634 = vmatpush.msra.mxu0 %v455
      %635 = vmatpush.msra.mxu0 %v454
      %636 = vmatpush.msra.mxu0 %v453
      %637 = vmatpush.msra.mxu0 %v452
      %638 = vmatpush.msra.mxu0 %v451
      %639 = vmatpush.msra.mxu0 %v450
      %640 = vmatpush.msra.mxu0 %v449
      %641 = vmatpush.msra.mxu0 %v448
      %642 = vmatmul.f32.gmra.mxu0 %v416
      %v643 = vpop.f32.mrf.mxu0
      %v644 = vadd.f32 %v531, %v643
      %645 = vmatmul.f32.gmra.mxu0 %v417
      %v646 = vpop.f32.mrf.mxu0
      %v647 = vadd.f32 %v534, %v646
      %648 = vmatmul.f32.gmra.mxu0 %v418
      %v649 = vpop.f32.mrf.mxu0
      %v650 = vadd.f32 %v537, %v649
      %651 = vmatmul.f32.gmra.mxu0 %v419
      %v652 = vpop.f32.mrf.mxu0
      %v653 = vadd.f32 %v540, %v652
      %654 = vmatmul.f32.gmra.mxu0 %v420
      %v655 = vpop.f32.mrf.mxu0
      %v656 = vadd.f32 %v543, %v655
      %657 = vmatmul.f32.gmra.mxu0 %v421
      %v658 = vpop.f32.mrf.mxu0
      %v659 = vadd.f32 %v546, %v658
      %660 = vmatmul.f32.gmra.mxu0 %v422
      %v661 = vpop.f32.mrf.mxu0
      %v662 = vadd.f32 %v549, %v661
      %663 = vmatmul.f32.gmra.mxu0 %v423
      %v664 = vpop.f32.mrf.mxu0
      %v665 = vadd.f32 %v552, %v664
      %666 = vmatmul.f32.gmra.mxu0 %v424
      %v667 = vpop.f32.mrf.mxu0
      %v668 = vadd.f32 %v555, %v667
      %669 = vmatmul.f32.gmra.mxu0 %v425
      %v670 = vpop.f32.mrf.mxu0
      %v671 = vadd.f32 %v558, %v670
      %672 = vmatmul.f32.gmra.mxu0 %v426
      %v673 = vpop.f32.mrf.mxu0
      %v674 = vadd.f32 %v561, %v673
      %675 = vmatmul.f32.gmra.mxu0 %v427
      %v676 = vpop.f32.mrf.mxu0
      %v677 = vadd.f32 %v564, %v676
      %678 = vmatmul.f32.gmra.mxu0 %v428
      %v679 = vpop.f32.mrf.mxu0
      %v680 = vadd.f32 %v567, %v679
      %681 = vmatmul.f32.gmra.mxu0 %v429
      %v682 = vpop.f32.mrf.mxu0
      %v683 = vadd.f32 %v570, %v682
      %684 = vmatmul.f32.gmra.mxu0 %v430
      %v685 = vpop.f32.mrf.mxu0
      %v686 = vadd.f32 %v573, %v685
      %687 = vmatmul.f32.gmra.mxu0 %v431
      %v688 = vpop.f32.mrf.mxu0
      %v689 = vadd.f32 %v576, %v688
      %690 = vmatmul.f32.gmra.mxu0 %v432
      %v691 = vpop.f32.mrf.mxu0
      %v692 = vadd.f32 %v579, %v691
      %693 = vmatmul.f32.gmra.mxu0 %v433
      %v694 = vpop.f32.mrf.mxu0
      %v695 = vadd.f32 %v582, %v694
      %696 = vmatmul.f32.gmra.mxu0 %v434
      %v697 = vpop.f32.mrf.mxu0
      %v698 = vadd.f32 %v585, %v697
      %699 = vmatmul.f32.gmra.mxu0 %v435
      %v700 = vpop.f32.mrf.mxu0
      %v701 = vadd.f32 %v588, %v700
      %702 = vmatmul.f32.gmra.mxu0 %v436
      %v703 = vpop.f32.mrf.mxu0
      %v704 = vadd.f32 %v591, %v703
      %705 = vmatmul.f32.gmra.mxu0 %v437
      %v706 = vpop.f32.mrf.mxu0
      %v707 = vadd.f32 %v594, %v706
      %708 = vmatmul.f32.gmra.mxu0 %v438
      %v709 = vpop.f32.mrf.mxu0
      %v710 = vadd.f32 %v597, %v709
      %711 = vmatmul.f32.gmra.mxu0 %v439
      %v712 = vpop.f32.mrf.mxu0
      %v713 = vadd.f32 %v600, %v712
      %714 = vmatmul.f32.gmra.mxu0 %v440
      %v715 = vpop.f32.mrf.mxu0
      %v716 = vadd.f32 %v603, %v715
      %717 = vmatmul.f32.gmra.mxu0 %v441
      %v718 = vpop.f32.mrf.mxu0
      %v719 = vadd.f32 %v606, %v718
      %720 = vmatmul.f32.gmra.mxu0 %v442
      %v721 = vpop.f32.mrf.mxu0
      %v722 = vadd.f32 %v609, %v721
      %723 = vmatmul.f32.gmra.mxu0 %v443
      %v724 = vpop.f32.mrf.mxu0
      %v725 = vadd.f32 %v612, %v724
      %726 = vmatmul.f32.gmra.mxu0 %v444
      %v727 = vpop.f32.mrf.mxu0
      %v728 = vadd.f32 %v615, %v727
      %729 = vmatmul.f32.gmra.mxu0 %v445
      %v730 = vpop.f32.mrf.mxu0
      %v731 = vadd.f32 %v618, %v730
      %732 = vmatmul.f32.gmra.mxu0 %v446
      %v733 = vpop.f32.mrf.mxu0
      %v734 = vadd.f32 %v621, %v733
      %735 = vmatmul.f32.gmra.mxu0 %v447
      %v736 = vpop.f32.mrf.mxu0
      %v737 = vadd.f32 %v624, %v736
      %738 = vdwg.mxu0
      %v739 = vld [vmem:[#allocation2 + $0x2] sm:$0xff]
      %v740 = vld [vmem:[#allocation2 + $0xa] sm:$0xff]
      %v741 = vld [vmem:[#allocation2 + $0x1a] sm:$0xff]
      %v742 = vld [vmem:[#allocation2 + $0x22] sm:$0xff]
      %v743 = vld [vmem:[#allocation2 + $0x32] sm:$0xff]
      %v744 = vld [vmem:[#allocation2 + $0x3a] sm:$0xff]
      %v745 = vld [vmem:[#allocation2 + $0x4a] sm:$0xff]
      %v746 = vld [vmem:[#allocation2 + $0x52] sm:$0xff]
      %v747 = vld [vmem:[#allocation2 + $0x62] sm:$0xff]
      %v748 = vld [vmem:[#allocation2 + $0x6a] sm:$0xff]
      %v749 = vld [vmem:[#allocation2 + $0x7a] sm:$0xff]
      %v750 = vld [vmem:[#allocation2 + $0x82] sm:$0xff]
      %v751 = vld [vmem:[#allocation2 + $0x92] sm:$0xff]
      %v752 = vld [vmem:[#allocation2 + $0x9a] sm:$0xff]
      %v753 = vld [vmem:[#allocation2 + $0xaa] sm:$0xff]
      %v754 = vld [vmem:[#allocation2 + $0xb2] sm:$0xff]
      %v755 = vld [vmem:[#allocation2 + $0xc2] sm:$0xff]
      %v756 = vld [vmem:[#allocation2 + $0xca] sm:$0xff]
      %v757 = vld [vmem:[#allocation2 + $0xda] sm:$0xff]
      %v758 = vld [vmem:[#allocation2 + $0xe2] sm:$0xff]
      %v759 = vld [vmem:[#allocation2 + $0xf2] sm:$0xff]
      %v760 = vld [vmem:[#allocation2 + $0xfa] sm:$0xff]
      %v761 = vld [vmem:[#allocation2 + $0x10a] sm:$0xff]
      %v762 = vld [vmem:[#allocation2 + $0x112] sm:$0xff]
      %v763 = vld [vmem:[#allocation2 + $0x122] sm:$0xff]
      %v764 = vld [vmem:[#allocation2 + $0x12a] sm:$0xff]
      %v765 = vld [vmem:[#allocation2 + $0x13a] sm:$0xff]
      %v766 = vld [vmem:[#allocation2 + $0x142] sm:$0xff]
      %v767 = vld [vmem:[#allocation2 + $0x152] sm:$0xff]
      %v768 = vld [vmem:[#allocation2 + $0x15a] sm:$0xff]
      %v769 = vld [vmem:[#allocation2 + $0x16a] sm:$0xff]
      %v770 = vld [vmem:[#allocation2 + $0x172] sm:$0xff]
      %s771 = scalar_lea.vmem %s2, 256
      %v772 = vld [vmem:[%s771] sm:$0xff]
      %v773 = vld [vmem:[%s771 + $0x8] sm:$0xff]
      %v774 = vld [vmem:[%s771 + $0x10] sm:$0xff]
      %v775 = vld [vmem:[%s771 + $0x18] sm:$0xff]
      %v776 = vld [vmem:[%s771 + $0x20] sm:$0xff]
      %v777 = vld [vmem:[%s771 + $0x28] sm:$0xff]
      %v778 = vld [vmem:[%s771 + $0x30] sm:$0xff]
      %v779 = vld [vmem:[%s771 + $0x38] sm:$0xff]
      %v780 = vld [vmem:[%s771 + $0x40] sm:$0xff]
      %v781 = vld [vmem:[%s771 + $0x48] sm:$0xff]
      %v782 = vld [vmem:[%s771 + $0x50] sm:$0xff]
      %v783 = vld [vmem:[%s771 + $0x58] sm:$0xff]
      %v784 = vld [vmem:[%s771 + $0x60] sm:$0xff]
      %v785 = vld [vmem:[%s771 + $0x68] sm:$0xff]
      %v786 = vld [vmem:[%s771 + $0x70] sm:$0xff]
      %v787 = vld [vmem:[%s771 + $0x78] sm:$0xff]
      %788 = vmatpush.msra.mxu0 %v787
      %789 = vmatpush.msra.mxu0 %v786
      %790 = vmatpush.msra.mxu0 %v785
      %791 = vmatpush.msra.mxu0 %v784
      %792 = vmatpush.msra.mxu0 %v783
      %793 = vmatpush.msra.mxu0 %v782
      %794 = vmatpush.msra.mxu0 %v781
      %795 = vmatpush.msra.mxu0 %v780
      %796 = vmatpush.msra.mxu0 %v779
      %797 = vmatpush.msra.mxu0 %v778
      %798 = vmatpush.msra.mxu0 %v777
      %799 = vmatpush.msra.mxu0 %v776
      %800 = vmatpush.msra.mxu0 %v775
      %801 = vmatpush.msra.mxu0 %v774
      %802 = vmatpush.msra.mxu0 %v773
      %803 = vmatpush.msra.mxu0 %v772
      %804 = vmatmul.f32.gmra.mxu0 %v739
      %v805 = vpop.f32.mrf.mxu0
      %v806 = vadd.f32 0.0, %v805
      %807 = vmatmul.f32.gmra.mxu0 %v740
      %v808 = vpop.f32.mrf.mxu0
      %v809 = vadd.f32 0.0, %v808
      %810 = vmatmul.f32.gmra.mxu0 %v741
      %v811 = vpop.f32.mrf.mxu0
      %v812 = vadd.f32 0.0, %v811
      %813 = vmatmul.f32.gmra.mxu0 %v742
      %v814 = vpop.f32.mrf.mxu0
      %v815 = vadd.f32 0.0, %v814
      %816 = vmatmul.f32.gmra.mxu0 %v743
      %v817 = vpop.f32.mrf.mxu0
      %v818 = vadd.f32 0.0, %v817
      %819 = vmatmul.f32.gmra.mxu0 %v744
      %v820 = vpop.f32.mrf.mxu0
      %v821 = vadd.f32 0.0, %v820
      %822 = vmatmul.f32.gmra.mxu0 %v745
      %v823 = vpop.f32.mrf.mxu0
      %v824 = vadd.f32 0.0, %v823
      %825 = vmatmul.f32.gmra.mxu0 %v746
      %v826 = vpop.f32.mrf.mxu0
      %v827 = vadd.f32 0.0, %v826
      %828 = vmatmul.f32.gmra.mxu0 %v747
      %v829 = vpop.f32.mrf.mxu0
      %v830 = vadd.f32 0.0, %v829
      %831 = vmatmul.f32.gmra.mxu0 %v748
      %v832 = vpop.f32.mrf.mxu0
      %v833 = vadd.f32 0.0, %v832
      %834 = vmatmul.f32.gmra.mxu0 %v749
      %v835 = vpop.f32.mrf.mxu0
      %v836 = vadd.f32 0.0, %v835
      %837 = vmatmul.f32.gmra.mxu0 %v750
      %v838 = vpop.f32.mrf.mxu0
      %v839 = vadd.f32 0.0, %v838
      %840 = vmatmul.f32.gmra.mxu0 %v751
      %v841 = vpop.f32.mrf.mxu0
      %v842 = vadd.f32 0.0, %v841
      %843 = vmatmul.f32.gmra.mxu0 %v752
      %v844 = vpop.f32.mrf.mxu0
      %v845 = vadd.f32 0.0, %v844
      %846 = vmatmul.f32.gmra.mxu0 %v753
      %v847 = vpop.f32.mrf.mxu0
      %v848 = vadd.f32 0.0, %v847
      %849 = vmatmul.f32.gmra.mxu0 %v754
      %v850 = vpop.f32.mrf.mxu0
      %v851 = vadd.f32 0.0, %v850
      %852 = vmatmul.f32.gmra.mxu0 %v755
      %v853 = vpop.f32.mrf.mxu0
      %v854 = vadd.f32 0.0, %v853
      %855 = vmatmul.f32.gmra.mxu0 %v756
      %v856 = vpop.f32.mrf.mxu0
      %v857 = vadd.f32 0.0, %v856
      %858 = vmatmul.f32.gmra.mxu0 %v757
      %v859 = vpop.f32.mrf.mxu0
      %v860 = vadd.f32 0.0, %v859
      %861 = vmatmul.f32.gmra.mxu0 %v758
      %v862 = vpop.f32.mrf.mxu0
      %v863 = vadd.f32 0.0, %v862
      %864 = vmatmul.f32.gmra.mxu0 %v759
      %v865 = vpop.f32.mrf.mxu0
      %v866 = vadd.f32 0.0, %v865
      %867 = vmatmul.f32.gmra.mxu0 %v760
      %v868 = vpop.f32.mrf.mxu0
      %v869 = vadd.f32 0.0, %v868
      %870 = vmatmul.f32.gmra.mxu0 %v761
      %v871 = vpop.f32.mrf.mxu0
      %v872 = vadd.f32 0.0, %v871
      %873 = vmatmul.f32.gmra.mxu0 %v762
      %v874 = vpop.f32.mrf.mxu0
      %v875 = vadd.f32 0.0, %v874
      %876 = vmatmul.f32.gmra.mxu0 %v763
      %v877 = vpop.f32.mrf.mxu0
      %v878 = vadd.f32 0.0, %v877
      %879 = vmatmul.f32.gmra.mxu0 %v764
      %v880 = vpop.f32.mrf.mxu0
      %v881 = vadd.f32 0.0, %v880
      %882 = vmatmul.f32.gmra.mxu0 %v765
      %v883 = vpop.f32.mrf.mxu0
      %v884 = vadd.f32 0.0, %v883
      %885 = vmatmul.f32.gmra.mxu0 %v766
      %v886 = vpop.f32.mrf.mxu0
      %v887 = vadd.f32 0.0, %v886
      %888 = vmatmul.f32.gmra.mxu0 %v767
      %v889 = vpop.f32.mrf.mxu0
      %v890 = vadd.f32 0.0, %v889
      %891 = vmatmul.f32.gmra.mxu0 %v768
      %v892 = vpop.f32.mrf.mxu0
      %v893 = vadd.f32 0.0, %v892
      %894 = vmatmul.f32.gmra.mxu0 %v769
      %v895 = vpop.f32.mrf.mxu0
      %v896 = vadd.f32 0.0, %v895
      %897 = vmatmul.f32.gmra.mxu0 %v770
      %v898 = vpop.f32.mrf.mxu0
      %v899 = vadd.f32 0.0, %v898
      %900 = vdwg.mxu0
      %v901 = vadd.f32 %v644, %v806
      %v902 = vadd.f32 %v647, %v809
      %v903 = vadd.f32 %v650, %v812
      %v904 = vadd.f32 %v653, %v815
      %v905 = vadd.f32 %v656, %v818
      %v906 = vadd.f32 %v659, %v821
      %v907 = vadd.f32 %v662, %v824
      %v908 = vadd.f32 %v665, %v827
      %v909 = vadd.f32 %v668, %v830
      %v910 = vadd.f32 %v671, %v833
      %v911 = vadd.f32 %v674, %v836
      %v912 = vadd.f32 %v677, %v839
      %v913 = vadd.f32 %v680, %v842
      %v914 = vadd.f32 %v683, %v845
      %v915 = vadd.f32 %v686, %v848
      %v916 = vadd.f32 %v689, %v851
      %v917 = vadd.f32 %v692, %v854
      %v918 = vadd.f32 %v695, %v857
      %v919 = vadd.f32 %v698, %v860
      %v920 = vadd.f32 %v701, %v863
      %v921 = vadd.f32 %v704, %v866
      %v922 = vadd.f32 %v707, %v869
      %v923 = vadd.f32 %v710, %v872
      %v924 = vadd.f32 %v713, %v875
      %v925 = vadd.f32 %v716, %v878
      %v926 = vadd.f32 %v719, %v881
      %v927 = vadd.f32 %v722, %v884
      %v928 = vadd.f32 %v725, %v887
      %v929 = vadd.f32 %v728, %v890
      %v930 = vadd.f32 %v731, %v893
      %v931 = vadd.f32 %v734, %v896
      %v932 = vadd.f32 %v737, %v899
      %v933 = vld [vmem:[%s383] sm:$0xff]
      %v934 = vld [vmem:[%s383 + $0x8] sm:$0xff]
      %v935 = vld [vmem:[%s383 + $0x18] sm:$0xff]
      %v936 = vld [vmem:[%s383 + $0x20] sm:$0xff]
      %v937 = vld [vmem:[%s383 + $0x30] sm:$0xff]
      %v938 = vld [vmem:[%s383 + $0x38] sm:$0xff]
      %v939 = vld [vmem:[%s383 + $0x48] sm:$0xff]
      %v940 = vld [vmem:[%s383 + $0x50] sm:$0xff]
      %v941 = vld [vmem:[%s383 + $0x60] sm:$0xff]
      %v942 = vld [vmem:[%s383 + $0x68] sm:$0xff]
      %v943 = vld [vmem:[%s383 + $0x78] sm:$0xff]
      %v944 = vld [vmem:[%s383 + $0x80] sm:$0xff]
      %v945 = vld [vmem:[%s383 + $0x90] sm:$0xff]
      %v946 = vld [vmem:[%s383 + $0x98] sm:$0xff]
      %v947 = vld [vmem:[%s383 + $0xa8] sm:$0xff]
      %v948 = vld [vmem:[%s383 + $0xb0] sm:$0xff]
      %v949 = vld [vmem:[%s383 + $0xc0] sm:$0xff]
      %v950 = vld [vmem:[%s383 + $0xc8] sm:$0xff]
      %v951 = vld [vmem:[%s383 + $0xd8] sm:$0xff]
      %v952 = vld [vmem:[%s383 + $0xe0] sm:$0xff]
      %v953 = vld [vmem:[%s383 + $0xf0] sm:$0xff]
      %v954 = vld [vmem:[%s383 + $0xf8] sm:$0xff]
      %v955 = vld [vmem:[%s383 + $0x108] sm:$0xff]
      %v956 = vld [vmem:[%s383 + $0x110] sm:$0xff]
      %v957 = vld [vmem:[%s383 + $0x120] sm:$0xff]
      %v958 = vld [vmem:[%s383 + $0x128] sm:$0xff]
      %v959 = vld [vmem:[%s383 + $0x138] sm:$0xff]
      %v960 = vld [vmem:[%s383 + $0x140] sm:$0xff]
      %v961 = vld [vmem:[%s383 + $0x150] sm:$0xff]
      %v962 = vld [vmem:[%s383 + $0x158] sm:$0xff]
      %v963 = vld [vmem:[%s383 + $0x168] sm:$0xff]
      %v964 = vld [vmem:[%s383 + $0x170] sm:$0xff]
      %s965 = scalar_lea.vmem %s2, 384
      %v966 = vld [vmem:[%s965] sm:$0xff]
      %v967 = vld [vmem:[%s965 + $0x8] sm:$0xff]
      %v968 = vld [vmem:[%s965 + $0x10] sm:$0xff]
      %v969 = vld [vmem:[%s965 + $0x18] sm:$0xff]
      %v970 = vld [vmem:[%s965 + $0x20] sm:$0xff]
      %v971 = vld [vmem:[%s965 + $0x28] sm:$0xff]
      %v972 = vld [vmem:[%s965 + $0x30] sm:$0xff]
      %v973 = vld [vmem:[%s965 + $0x38] sm:$0xff]
      %v974 = vld [vmem:[%s965 + $0x40] sm:$0xff]
      %v975 = vld [vmem:[%s965 + $0x48] sm:$0xff]
      %v976 = vld [vmem:[%s965 + $0x50] sm:$0xff]
      %v977 = vld [vmem:[%s965 + $0x58] sm:$0xff]
      %v978 = vld [vmem:[%s965 + $0x60] sm:$0xff]
      %v979 = vld [vmem:[%s965 + $0x68] sm:$0xff]
      %v980 = vld [vmem:[%s965 + $0x70] sm:$0xff]
      %v981 = vld [vmem:[%s965 + $0x78] sm:$0xff]
      %982 = vmatpush.msra.mxu0 %v981
      %983 = vmatpush.msra.mxu0 %v980
      %984 = vmatpush.msra.mxu0 %v979
      %985 = vmatpush.msra.mxu0 %v978
      %986 = vmatpush.msra.mxu0 %v977
      %987 = vmatpush.msra.mxu0 %v976
      %988 = vmatpush.msra.mxu0 %v975
      %989 = vmatpush.msra.mxu0 %v974
      %990 = vmatpush.msra.mxu0 %v973
      %991 = vmatpush.msra.mxu0 %v972
      %992 = vmatpush.msra.mxu0 %v971
      %993 = vmatpush.msra.mxu0 %v970
      %994 = vmatpush.msra.mxu0 %v969
      %995 = vmatpush.msra.mxu0 %v968
      %996 = vmatpush.msra.mxu0 %v967
      %997 = vmatpush.msra.mxu0 %v966
      %998 = vmatmul.f32.gmra.mxu0 %v933
      %v999 = vpop.f32.mrf.mxu0
      %v1000 = vadd.f32 0.0, %v999
      %1001 = vmatmul.f32.gmra.mxu0 %v934
      %v1002 = vpop.f32.mrf.mxu0
      %v1003 = vadd.f32 0.0, %v1002
      %1004 = vmatmul.f32.gmra.mxu0 %v935
      %v1005 = vpop.f32.mrf.mxu0
      %v1006 = vadd.f32 0.0, %v1005
      %1007 = vmatmul.f32.gmra.mxu0 %v936
      %v1008 = vpop.f32.mrf.mxu0
      %v1009 = vadd.f32 0.0, %v1008
      %1010 = vmatmul.f32.gmra.mxu0 %v937
      %v1011 = vpop.f32.mrf.mxu0
      %v1012 = vadd.f32 0.0, %v1011
      %1013 = vmatmul.f32.gmra.mxu0 %v938
      %v1014 = vpop.f32.mrf.mxu0
      %v1015 = vadd.f32 0.0, %v1014
      %1016 = vmatmul.f32.gmra.mxu0 %v939
      %v1017 = vpop.f32.mrf.mxu0
      %v1018 = vadd.f32 0.0, %v1017
      %1019 = vmatmul.f32.gmra.mxu0 %v940
      %v1020 = vpop.f32.mrf.mxu0
      %v1021 = vadd.f32 0.0, %v1020
      %1022 = vmatmul.f32.gmra.mxu0 %v941
      %v1023 = vpop.f32.mrf.mxu0
      %v1024 = vadd.f32 0.0, %v1023
      %1025 = vmatmul.f32.gmra.mxu0 %v942
      %v1026 = vpop.f32.mrf.mxu0
      %v1027 = vadd.f32 0.0, %v1026
      %1028 = vmatmul.f32.gmra.mxu0 %v943
      %v1029 = vpop.f32.mrf.mxu0
      %v1030 = vadd.f32 0.0, %v1029
      %1031 = vmatmul.f32.gmra.mxu0 %v944
      %v1032 = vpop.f32.mrf.mxu0
      %v1033 = vadd.f32 0.0, %v1032
      %1034 = vmatmul.f32.gmra.mxu0 %v945
      %v1035 = vpop.f32.mrf.mxu0
      %v1036 = vadd.f32 0.0, %v1035
      %1037 = vmatmul.f32.gmra.mxu0 %v946
      %v1038 = vpop.f32.mrf.mxu0
      %v1039 = vadd.f32 0.0, %v1038
      %1040 = vmatmul.f32.gmra.mxu0 %v947
      %v1041 = vpop.f32.mrf.mxu0
      %v1042 = vadd.f32 0.0, %v1041
      %1043 = vmatmul.f32.gmra.mxu0 %v948
      %v1044 = vpop.f32.mrf.mxu0
      %v1045 = vadd.f32 0.0, %v1044
      %1046 = vmatmul.f32.gmra.mxu0 %v949
      %v1047 = vpop.f32.mrf.mxu0
      %v1048 = vadd.f32 0.0, %v1047
      %1049 = vmatmul.f32.gmra.mxu0 %v950
      %v1050 = vpop.f32.mrf.mxu0
      %v1051 = vadd.f32 0.0, %v1050
      %1052 = vmatmul.f32.gmra.mxu0 %v951
      %v1053 = vpop.f32.mrf.mxu0
      %v1054 = vadd.f32 0.0, %v1053
      %1055 = vmatmul.f32.gmra.mxu0 %v952
      %v1056 = vpop.f32.mrf.mxu0
      %v1057 = vadd.f32 0.0, %v1056
      %1058 = vmatmul.f32.gmra.mxu0 %v953
      %v1059 = vpop.f32.mrf.mxu0
      %v1060 = vadd.f32 0.0, %v1059
      %1061 = vmatmul.f32.gmra.mxu0 %v954
      %v1062 = vpop.f32.mrf.mxu0
      %v1063 = vadd.f32 0.0, %v1062
      %1064 = vmatmul.f32.gmra.mxu0 %v955
      %v1065 = vpop.f32.mrf.mxu0
      %v1066 = vadd.f32 0.0, %v1065
      %1067 = vmatmul.f32.gmra.mxu0 %v956
      %v1068 = vpop.f32.mrf.mxu0
      %v1069 = vadd.f32 0.0, %v1068
      %1070 = vmatmul.f32.gmra.mxu0 %v957
      %v1071 = vpop.f32.mrf.mxu0
      %v1072 = vadd.f32 0.0, %v1071
      %1073 = vmatmul.f32.gmra.mxu0 %v958
      %v1074 = vpop.f32.mrf.mxu0
      %v1075 = vadd.f32 0.0, %v1074
      %1076 = vmatmul.f32.gmra.mxu0 %v959
      %v1077 = vpop.f32.mrf.mxu0
      %v1078 = vadd.f32 0.0, %v1077
      %1079 = vmatmul.f32.gmra.mxu0 %v960
      %v1080 = vpop.f32.mrf.mxu0
      %v1081 = vadd.f32 0.0, %v1080
      %1082 = vmatmul.f32.gmra.mxu0 %v961
      %v1083 = vpop.f32.mrf.mxu0
      %v1084 = vadd.f32 0.0, %v1083
      %1085 = vmatmul.f32.gmra.mxu0 %v962
      %v1086 = vpop.f32.mrf.mxu0
      %v1087 = vadd.f32 0.0, %v1086
      %1088 = vmatmul.f32.gmra.mxu0 %v963
      %v1089 = vpop.f32.mrf.mxu0
      %v1090 = vadd.f32 0.0, %v1089
      %1091 = vmatmul.f32.gmra.mxu0 %v964
      %v1092 = vpop.f32.mrf.mxu0
      %v1093 = vadd.f32 0.0, %v1092
      %1094 = vdwg.mxu0
      %v1095 = vadd.f32 %v901, %v1000
      %v1096 = vadd.f32 %v902, %v1003
      %v1097 = vadd.f32 %v903, %v1006
      %v1098 = vadd.f32 %v904, %v1009
      %v1099 = vadd.f32 %v905, %v1012
      %v1100 = vadd.f32 %v906, %v1015
      %v1101 = vadd.f32 %v907, %v1018
      %v1102 = vadd.f32 %v908, %v1021
      %v1103 = vadd.f32 %v909, %v1024
      %v1104 = vadd.f32 %v910, %v1027
      %v1105 = vadd.f32 %v911, %v1030
      %v1106 = vadd.f32 %v912, %v1033
      %v1107 = vadd.f32 %v913, %v1036
      %v1108 = vadd.f32 %v914, %v1039
      %v1109 = vadd.f32 %v915, %v1042
      %v1110 = vadd.f32 %v916, %v1045
      %v1111 = vadd.f32 %v917, %v1048
      %v1112 = vadd.f32 %v918, %v1051
      %v1113 = vadd.f32 %v919, %v1054
      %v1114 = vadd.f32 %v920, %v1057
      %v1115 = vadd.f32 %v921, %v1060
      %v1116 = vadd.f32 %v922, %v1063
      %v1117 = vadd.f32 %v923, %v1066
      %v1118 = vadd.f32 %v924, %v1069
      %v1119 = vadd.f32 %v925, %v1072
      %v1120 = vadd.f32 %v926, %v1075
      %v1121 = vadd.f32 %v927, %v1078
      %v1122 = vadd.f32 %v928, %v1081
      %v1123 = vadd.f32 %v929, %v1084
      %v1124 = vadd.f32 %v930, %v1087
      %v1125 = vadd.f32 %v931, %v1090
      %v1126 = vadd.f32 %v932, %v1093
      %v1127 = vld [vmem:[%s383 + $0x1] sm:$0xff]
      %v1128 = vld [vmem:[%s383 + $0x9] sm:$0xff]
      %v1129 = vld [vmem:[%s383 + $0x19] sm:$0xff]
      %v1130 = vld [vmem:[%s383 + $0x21] sm:$0xff]
      %v1131 = vld [vmem:[%s383 + $0x31] sm:$0xff]
      %v1132 = vld [vmem:[%s383 + $0x39] sm:$0xff]
      %v1133 = vld [vmem:[%s383 + $0x49] sm:$0xff]
      %v1134 = vld [vmem:[%s383 + $0x51] sm:$0xff]
      %v1135 = vld [vmem:[%s383 + $0x61] sm:$0xff]
      %v1136 = vld [vmem:[%s383 + $0x69] sm:$0xff]
      %v1137 = vld [vmem:[%s383 + $0x79] sm:$0xff]
      %v1138 = vld [vmem:[%s383 + $0x81] sm:$0xff]
      %v1139 = vld [vmem:[%s383 + $0x91] sm:$0xff]
      %v1140 = vld [vmem:[%s383 + $0x99] sm:$0xff]
      %v1141 = vld [vmem:[%s383 + $0xa9] sm:$0xff]
      %v1142 = vld [vmem:[%s383 + $0xb1] sm:$0xff]
      %v1143 = vld [vmem:[%s383 + $0xc1] sm:$0xff]
      %v1144 = vld [vmem:[%s383 + $0xc9] sm:$0xff]
      %v1145 = vld [vmem:[%s383 + $0xd9] sm:$0xff]
      %v1146 = vld [vmem:[%s383 + $0xe1] sm:$0xff]
      %v1147 = vld [vmem:[%s383 + $0xf1] sm:$0xff]
      %v1148 = vld [vmem:[%s383 + $0xf9] sm:$0xff]
      %v1149 = vld [vmem:[%s383 + $0x109] sm:$0xff]
      %v1150 = vld [vmem:[%s383 + $0x111] sm:$0xff]
      %v1151 = vld [vmem:[%s383 + $0x121] sm:$0xff]
      %v1152 = vld [vmem:[%s383 + $0x129] sm:$0xff]
      %v1153 = vld [vmem:[%s383 + $0x139] sm:$0xff]
      %v1154 = vld [vmem:[%s383 + $0x141] sm:$0xff]
      %v1155 = vld [vmem:[%s383 + $0x151] sm:$0xff]
      %v1156 = vld [vmem:[%s383 + $0x159] sm:$0xff]
      %v1157 = vld [vmem:[%s383 + $0x169] sm:$0xff]
      %v1158 = vld [vmem:[%s383 + $0x171] sm:$0xff]
      %s1159 = scalar_lea.vmem %s2, 512
      %v1160 = vld [vmem:[%s1159] sm:$0xff]
      %v1161 = vld [vmem:[%s1159 + $0x8] sm:$0xff]
      %v1162 = vld [vmem:[%s1159 + $0x10] sm:$0xff]
      %v1163 = vld [vmem:[%s1159 + $0x18] sm:$0xff]
      %v1164 = vld [vmem:[%s1159 + $0x20] sm:$0xff]
      %v1165 = vld [vmem:[%s1159 + $0x28] sm:$0xff]
      %v1166 = vld [vmem:[%s1159 + $0x30] sm:$0xff]
      %v1167 = vld [vmem:[%s1159 + $0x38] sm:$0xff]
      %v1168 = vld [vmem:[%s1159 + $0x40] sm:$0xff]
      %v1169 = vld [vmem:[%s1159 + $0x48] sm:$0xff]
      %v1170 = vld [vmem:[%s1159 + $0x50] sm:$0xff]
      %v1171 = vld [vmem:[%s1159 + $0x58] sm:$0xff]
      %v1172 = vld [vmem:[%s1159 + $0x60] sm:$0xff]
      %v1173 = vld [vmem:[%s1159 + $0x68] sm:$0xff]
      %v1174 = vld [vmem:[%s1159 + $0x70] sm:$0xff]
      %v1175 = vld [vmem:[%s1159 + $0x78] sm:$0xff]
      %1176 = vmatpush.msra.mxu0 %v1175
      %1177 = vmatpush.msra.mxu0 %v1174
      %1178 = vmatpush.msra.mxu0 %v1173
      %1179 = vmatpush.msra.mxu0 %v1172
      %1180 = vmatpush.msra.mxu0 %v1171
      %1181 = vmatpush.msra.mxu0 %v1170
      %1182 = vmatpush.msra.mxu0 %v1169
      %1183 = vmatpush.msra.mxu0 %v1168
      %1184 = vmatpush.msra.mxu0 %v1167
      %1185 = vmatpush.msra.mxu0 %v1166
      %1186 = vmatpush.msra.mxu0 %v1165
      %1187 = vmatpush.msra.mxu0 %v1164
      %1188 = vmatpush.msra.mxu0 %v1163
      %1189 = vmatpush.msra.mxu0 %v1162
      %1190 = vmatpush.msra.mxu0 %v1161
      %1191 = vmatpush.msra.mxu0 %v1160
      %1192 = vmatmul.f32.gmra.mxu0 %v1127
      %v1193 = vpop.f32.mrf.mxu0
      %v1194 = vadd.f32 0.0, %v1193
      %1195 = vmatmul.f32.gmra.mxu0 %v1128
      %v1196 = vpop.f32.mrf.mxu0
      %v1197 = vadd.f32 0.0, %v1196
      %1198 = vmatmul.f32.gmra.mxu0 %v1129
      %v1199 = vpop.f32.mrf.mxu0
      %v1200 = vadd.f32 0.0, %v1199
      %1201 = vmatmul.f32.gmra.mxu0 %v1130
      %v1202 = vpop.f32.mrf.mxu0
      %v1203 = vadd.f32 0.0, %v1202
      %1204 = vmatmul.f32.gmra.mxu0 %v1131
      %v1205 = vpop.f32.mrf.mxu0
      %v1206 = vadd.f32 0.0, %v1205
      %1207 = vmatmul.f32.gmra.mxu0 %v1132
      %v1208 = vpop.f32.mrf.mxu0
      %v1209 = vadd.f32 0.0, %v1208
      %1210 = vmatmul.f32.gmra.mxu0 %v1133
      %v1211 = vpop.f32.mrf.mxu0
      %v1212 = vadd.f32 0.0, %v1211
      %1213 = vmatmul.f32.gmra.mxu0 %v1134
      %v1214 = vpop.f32.mrf.mxu0
      %v1215 = vadd.f32 0.0, %v1214
      %1216 = vmatmul.f32.gmra.mxu0 %v1135
      %v1217 = vpop.f32.mrf.mxu0
      %v1218 = vadd.f32 0.0, %v1217
      %1219 = vmatmul.f32.gmra.mxu0 %v1136
      %v1220 = vpop.f32.mrf.mxu0
      %v1221 = vadd.f32 0.0, %v1220
      %1222 = vmatmul.f32.gmra.mxu0 %v1137
      %v1223 = vpop.f32.mrf.mxu0
      %v1224 = vadd.f32 0.0, %v1223
      %1225 = vmatmul.f32.gmra.mxu0 %v1138
      %v1226 = vpop.f32.mrf.mxu0
      %v1227 = vadd.f32 0.0, %v1226
      %1228 = vmatmul.f32.gmra.mxu0 %v1139
      %v1229 = vpop.f32.mrf.mxu0
      %v1230 = vadd.f32 0.0, %v1229
      %1231 = vmatmul.f32.gmra.mxu0 %v1140
      %v1232 = vpop.f32.mrf.mxu0
      %v1233 = vadd.f32 0.0, %v1232
      %1234 = vmatmul.f32.gmra.mxu0 %v1141
      %v1235 = vpop.f32.mrf.mxu0
      %v1236 = vadd.f32 0.0, %v1235
      %1237 = vmatmul.f32.gmra.mxu0 %v1142
      %v1238 = vpop.f32.mrf.mxu0
      %v1239 = vadd.f32 0.0, %v1238
      %1240 = vmatmul.f32.gmra.mxu0 %v1143
      %v1241 = vpop.f32.mrf.mxu0
      %v1242 = vadd.f32 0.0, %v1241
      %1243 = vmatmul.f32.gmra.mxu0 %v1144
      %v1244 = vpop.f32.mrf.mxu0
      %v1245 = vadd.f32 0.0, %v1244
      %1246 = vmatmul.f32.gmra.mxu0 %v1145
      %v1247 = vpop.f32.mrf.mxu0
      %v1248 = vadd.f32 0.0, %v1247
      %1249 = vmatmul.f32.gmra.mxu0 %v1146
      %v1250 = vpop.f32.mrf.mxu0
      %v1251 = vadd.f32 0.0, %v1250
      %1252 = vmatmul.f32.gmra.mxu0 %v1147
      %v1253 = vpop.f32.mrf.mxu0
      %v1254 = vadd.f32 0.0, %v1253
      %1255 = vmatmul.f32.gmra.mxu0 %v1148
      %v1256 = vpop.f32.mrf.mxu0
      %v1257 = vadd.f32 0.0, %v1256
      %1258 = vmatmul.f32.gmra.mxu0 %v1149
      %v1259 = vpop.f32.mrf.mxu0
      %v1260 = vadd.f32 0.0, %v1259
      %1261 = vmatmul.f32.gmra.mxu0 %v1150
      %v1262 = vpop.f32.mrf.mxu0
      %v1263 = vadd.f32 0.0, %v1262
      %1264 = vmatmul.f32.gmra.mxu0 %v1151
      %v1265 = vpop.f32.mrf.mxu0
      %v1266 = vadd.f32 0.0, %v1265
      %1267 = vmatmul.f32.gmra.mxu0 %v1152
      %v1268 = vpop.f32.mrf.mxu0
      %v1269 = vadd.f32 0.0, %v1268
      %1270 = vmatmul.f32.gmra.mxu0 %v1153
      %v1271 = vpop.f32.mrf.mxu0
      %v1272 = vadd.f32 0.0, %v1271
      %1273 = vmatmul.f32.gmra.mxu0 %v1154
      %v1274 = vpop.f32.mrf.mxu0
      %v1275 = vadd.f32 0.0, %v1274
      %1276 = vmatmul.f32.gmra.mxu0 %v1155
      %v1277 = vpop.f32.mrf.mxu0
      %v1278 = vadd.f32 0.0, %v1277
      %1279 = vmatmul.f32.gmra.mxu0 %v1156
      %v1280 = vpop.f32.mrf.mxu0
      %v1281 = vadd.f32 0.0, %v1280
      %1282 = vmatmul.f32.gmra.mxu0 %v1157
      %v1283 = vpop.f32.mrf.mxu0
      %v1284 = vadd.f32 0.0, %v1283
      %1285 = vmatmul.f32.gmra.mxu0 %v1158
      %v1286 = vpop.f32.mrf.mxu0
      %v1287 = vadd.f32 0.0, %v1286
      %1288 = vdwg.mxu0
      %v1289 = vadd.f32 %v1095, %v1194
      %v1290 = vadd.f32 %v1096, %v1197
      %v1291 = vadd.f32 %v1097, %v1200
      %v1292 = vadd.f32 %v1098, %v1203
      %v1293 = vadd.f32 %v1099, %v1206
      %v1294 = vadd.f32 %v1100, %v1209
      %v1295 = vadd.f32 %v1101, %v1212
      %v1296 = vadd.f32 %v1102, %v1215
      %v1297 = vadd.f32 %v1103, %v1218
      %v1298 = vadd.f32 %v1104, %v1221
      %v1299 = vadd.f32 %v1105, %v1224
      %v1300 = vadd.f32 %v1106, %v1227
      %v1301 = vadd.f32 %v1107, %v1230
      %v1302 = vadd.f32 %v1108, %v1233
      %v1303 = vadd.f32 %v1109, %v1236
      %v1304 = vadd.f32 %v1110, %v1239
      %v1305 = vadd.f32 %v1111, %v1242
      %v1306 = vadd.f32 %v1112, %v1245
      %v1307 = vadd.f32 %v1113, %v1248
      %v1308 = vadd.f32 %v1114, %v1251
      %v1309 = vadd.f32 %v1115, %v1254
      %v1310 = vadd.f32 %v1116, %v1257
      %v1311 = vadd.f32 %v1117, %v1260
      %v1312 = vadd.f32 %v1118, %v1263
      %v1313 = vadd.f32 %v1119, %v1266
      %v1314 = vadd.f32 %v1120, %v1269
      %v1315 = vadd.f32 %v1121, %v1272
      %v1316 = vadd.f32 %v1122, %v1275
      %v1317 = vadd.f32 %v1123, %v1278
      %v1318 = vadd.f32 %v1124, %v1281
      %v1319 = vadd.f32 %v1125, %v1284
      %v1320 = vadd.f32 %v1126, %v1287
      %v1321 = vld [vmem:[%s383 + $0x2] sm:$0xff]
      %v1322 = vld [vmem:[%s383 + $0xa] sm:$0xff]
      %v1323 = vld [vmem:[%s383 + $0x1a] sm:$0xff]
      %v1324 = vld [vmem:[%s383 + $0x22] sm:$0xff]
      %v1325 = vld [vmem:[%s383 + $0x32] sm:$0xff]
      %v1326 = vld [vmem:[%s383 + $0x3a] sm:$0xff]
      %v1327 = vld [vmem:[%s383 + $0x4a] sm:$0xff]
      %v1328 = vld [vmem:[%s383 + $0x52] sm:$0xff]
      %v1329 = vld [vmem:[%s383 + $0x62] sm:$0xff]
      %v1330 = vld [vmem:[%s383 + $0x6a] sm:$0xff]
      %v1331 = vld [vmem:[%s383 + $0x7a] sm:$0xff]
      %v1332 = vld [vmem:[%s383 + $0x82] sm:$0xff]
      %v1333 = vld [vmem:[%s383 + $0x92] sm:$0xff]
      %v1334 = vld [vmem:[%s383 + $0x9a] sm:$0xff]
      %v1335 = vld [vmem:[%s383 + $0xaa] sm:$0xff]
      %v1336 = vld [vmem:[%s383 + $0xb2] sm:$0xff]
      %v1337 = vld [vmem:[%s383 + $0xc2] sm:$0xff]
      %v1338 = vld [vmem:[%s383 + $0xca] sm:$0xff]
      %v1339 = vld [vmem:[%s383 + $0xda] sm:$0xff]
      %v1340 = vld [vmem:[%s383 + $0xe2] sm:$0xff]
      %v1341 = vld [vmem:[%s383 + $0xf2] sm:$0xff]
      %v1342 = vld [vmem:[%s383 + $0xfa] sm:$0xff]
      %v1343 = vld [vmem:[%s383 + $0x10a] sm:$0xff]
      %v1344 = vld [vmem:[%s383 + $0x112] sm:$0xff]
      %v1345 = vld [vmem:[%s383 + $0x122] sm:$0xff]
      %v1346 = vld [vmem:[%s383 + $0x12a] sm:$0xff]
      %v1347 = vld [vmem:[%s383 + $0x13a] sm:$0xff]
      %v1348 = vld [vmem:[%s383 + $0x142] sm:$0xff]
      %v1349 = vld [vmem:[%s383 + $0x152] sm:$0xff]
      %v1350 = vld [vmem:[%s383 + $0x15a] sm:$0xff]
      %v1351 = vld [vmem:[%s383 + $0x16a] sm:$0xff]
      %v1352 = vld [vmem:[%s383 + $0x172] sm:$0xff]
      %s1353 = scalar_lea.vmem %s2, 640
      %v1354 = vld [vmem:[%s1353] sm:$0xff]
      %v1355 = vld [vmem:[%s1353 + $0x8] sm:$0xff]
      %v1356 = vld [vmem:[%s1353 + $0x10] sm:$0xff]
      %v1357 = vld [vmem:[%s1353 + $0x18] sm:$0xff]
      %v1358 = vld [vmem:[%s1353 + $0x20] sm:$0xff]
      %v1359 = vld [vmem:[%s1353 + $0x28] sm:$0xff]
      %v1360 = vld [vmem:[%s1353 + $0x30] sm:$0xff]
      %v1361 = vld [vmem:[%s1353 + $0x38] sm:$0xff]
      %v1362 = vld [vmem:[%s1353 + $0x40] sm:$0xff]
      %v1363 = vld [vmem:[%s1353 + $0x48] sm:$0xff]
      %v1364 = vld [vmem:[%s1353 + $0x50] sm:$0xff]
      %v1365 = vld [vmem:[%s1353 + $0x58] sm:$0xff]
      %v1366 = vld [vmem:[%s1353 + $0x60] sm:$0xff]
      %v1367 = vld [vmem:[%s1353 + $0x68] sm:$0xff]
      %v1368 = vld [vmem:[%s1353 + $0x70] sm:$0xff]
      %v1369 = vld [vmem:[%s1353 + $0x78] sm:$0xff]
      %1370 = vmatpush.msra.mxu0 %v1369
      %1371 = vmatpush.msra.mxu0 %v1368
      %1372 = vmatpush.msra.mxu0 %v1367
      %1373 = vmatpush.msra.mxu0 %v1366
      %1374 = vmatpush.msra.mxu0 %v1365
      %1375 = vmatpush.msra.mxu0 %v1364
      %1376 = vmatpush.msra.mxu0 %v1363
      %1377 = vmatpush.msra.mxu0 %v1362
      %1378 = vmatpush.msra.mxu0 %v1361
      %1379 = vmatpush.msra.mxu0 %v1360
      %1380 = vmatpush.msra.mxu0 %v1359
      %1381 = vmatpush.msra.mxu0 %v1358
      %1382 = vmatpush.msra.mxu0 %v1357
      %1383 = vmatpush.msra.mxu0 %v1356
      %1384 = vmatpush.msra.mxu0 %v1355
      %1385 = vmatpush.msra.mxu0 %v1354
      %1386 = vmatmul.f32.gmra.mxu0 %v1321
      %v1387 = vpop.f32.mrf.mxu0
      %v1388 = vadd.f32 0.0, %v1387
      %1389 = vmatmul.f32.gmra.mxu0 %v1322
      %v1390 = vpop.f32.mrf.mxu0
      %v1391 = vadd.f32 0.0, %v1390
      %1392 = vmatmul.f32.gmra.mxu0 %v1323
      %v1393 = vpop.f32.mrf.mxu0
      %v1394 = vadd.f32 0.0, %v1393
      %1395 = vmatmul.f32.gmra.mxu0 %v1324
      %v1396 = vpop.f32.mrf.mxu0
      %v1397 = vadd.f32 0.0, %v1396
      %1398 = vmatmul.f32.gmra.mxu0 %v1325
      %v1399 = vpop.f32.mrf.mxu0
      %v1400 = vadd.f32 0.0, %v1399
      %1401 = vmatmul.f32.gmra.mxu0 %v1326
      %v1402 = vpop.f32.mrf.mxu0
      %v1403 = vadd.f32 0.0, %v1402
      %1404 = vmatmul.f32.gmra.mxu0 %v1327
      %v1405 = vpop.f32.mrf.mxu0
      %v1406 = vadd.f32 0.0, %v1405
      %1407 = vmatmul.f32.gmra.mxu0 %v1328
      %v1408 = vpop.f32.mrf.mxu0
      %v1409 = vadd.f32 0.0, %v1408
      %1410 = vmatmul.f32.gmra.mxu0 %v1329
      %v1411 = vpop.f32.mrf.mxu0
      %v1412 = vadd.f32 0.0, %v1411
      %1413 = vmatmul.f32.gmra.mxu0 %v1330
      %v1414 = vpop.f32.mrf.mxu0
      %v1415 = vadd.f32 0.0, %v1414
      %1416 = vmatmul.f32.gmra.mxu0 %v1331
      %v1417 = vpop.f32.mrf.mxu0
      %v1418 = vadd.f32 0.0, %v1417
      %1419 = vmatmul.f32.gmra.mxu0 %v1332
      %v1420 = vpop.f32.mrf.mxu0
      %v1421 = vadd.f32 0.0, %v1420
      %1422 = vmatmul.f32.gmra.mxu0 %v1333
      %v1423 = vpop.f32.mrf.mxu0
      %v1424 = vadd.f32 0.0, %v1423
      %1425 = vmatmul.f32.gmra.mxu0 %v1334
      %v1426 = vpop.f32.mrf.mxu0
      %v1427 = vadd.f32 0.0, %v1426
      %1428 = vmatmul.f32.gmra.mxu0 %v1335
      %v1429 = vpop.f32.mrf.mxu0
      %v1430 = vadd.f32 0.0, %v1429
      %1431 = vmatmul.f32.gmra.mxu0 %v1336
      %v1432 = vpop.f32.mrf.mxu0
      %v1433 = vadd.f32 0.0, %v1432
      %1434 = vmatmul.f32.gmra.mxu0 %v1337
      %v1435 = vpop.f32.mrf.mxu0
      %v1436 = vadd.f32 0.0, %v1435
      %1437 = vmatmul.f32.gmra.mxu0 %v1338
      %v1438 = vpop.f32.mrf.mxu0
      %v1439 = vadd.f32 0.0, %v1438
      %1440 = vmatmul.f32.gmra.mxu0 %v1339
      %v1441 = vpop.f32.mrf.mxu0
      %v1442 = vadd.f32 0.0, %v1441
      %1443 = vmatmul.f32.gmra.mxu0 %v1340
      %v1444 = vpop.f32.mrf.mxu0
      %v1445 = vadd.f32 0.0, %v1444
      %1446 = vmatmul.f32.gmra.mxu0 %v1341
      %v1447 = vpop.f32.mrf.mxu0
      %v1448 = vadd.f32 0.0, %v1447
      %1449 = vmatmul.f32.gmra.mxu0 %v1342
      %v1450 = vpop.f32.mrf.mxu0
      %v1451 = vadd.f32 0.0, %v1450
      %1452 = vmatmul.f32.gmra.mxu0 %v1343
      %v1453 = vpop.f32.mrf.mxu0
      %v1454 = vadd.f32 0.0, %v1453
      %1455 = vmatmul.f32.gmra.mxu0 %v1344
      %v1456 = vpop.f32.mrf.mxu0
      %v1457 = vadd.f32 0.0, %v1456
      %1458 = vmatmul.f32.gmra.mxu0 %v1345
      %v1459 = vpop.f32.mrf.mxu0
      %v1460 = vadd.f32 0.0, %v1459
      %1461 = vmatmul.f32.gmra.mxu0 %v1346
      %v1462 = vpop.f32.mrf.mxu0
      %v1463 = vadd.f32 0.0, %v1462
      %1464 = vmatmul.f32.gmra.mxu0 %v1347
      %v1465 = vpop.f32.mrf.mxu0
      %v1466 = vadd.f32 0.0, %v1465
      %1467 = vmatmul.f32.gmra.mxu0 %v1348
      %v1468 = vpop.f32.mrf.mxu0
      %v1469 = vadd.f32 0.0, %v1468
      %1470 = vmatmul.f32.gmra.mxu0 %v1349
      %v1471 = vpop.f32.mrf.mxu0
      %v1472 = vadd.f32 0.0, %v1471
      %1473 = vmatmul.f32.gmra.mxu0 %v1350
      %v1474 = vpop.f32.mrf.mxu0
      %v1475 = vadd.f32 0.0, %v1474
      %1476 = vmatmul.f32.gmra.mxu0 %v1351
      %v1477 = vpop.f32.mrf.mxu0
      %v1478 = vadd.f32 0.0, %v1477
      %1479 = vmatmul.f32.gmra.mxu0 %v1352
      %v1480 = vpop.f32.mrf.mxu0
      %v1481 = vadd.f32 0.0, %v1480
      %1482 = vdwg.mxu0
      %v1483 = vadd.f32 %v1289, %v1388
      %v1484 = vadd.f32 %v1290, %v1391
      %v1485 = vadd.f32 %v1291, %v1394
      %v1486 = vadd.f32 %v1292, %v1397
      %v1487 = vadd.f32 %v1293, %v1400
      %v1488 = vadd.f32 %v1294, %v1403
      %v1489 = vadd.f32 %v1295, %v1406
      %v1490 = vadd.f32 %v1296, %v1409
      %v1491 = vadd.f32 %v1297, %v1412
      %v1492 = vadd.f32 %v1298, %v1415
      %v1493 = vadd.f32 %v1299, %v1418
      %v1494 = vadd.f32 %v1300, %v1421
      %v1495 = vadd.f32 %v1301, %v1424
      %v1496 = vadd.f32 %v1302, %v1427
      %v1497 = vadd.f32 %v1303, %v1430
      %v1498 = vadd.f32 %v1304, %v1433
      %v1499 = vadd.f32 %v1305, %v1436
      %v1500 = vadd.f32 %v1306, %v1439
      %v1501 = vadd.f32 %v1307, %v1442
      %v1502 = vadd.f32 %v1308, %v1445
      %v1503 = vadd.f32 %v1309, %v1448
      %v1504 = vadd.f32 %v1310, %v1451
      %v1505 = vadd.f32 %v1311, %v1454
      %v1506 = vadd.f32 %v1312, %v1457
      %v1507 = vadd.f32 %v1313, %v1460
      %v1508 = vadd.f32 %v1314, %v1463
      %v1509 = vadd.f32 %v1315, %v1466
      %v1510 = vadd.f32 %v1316, %v1469
      %v1511 = vadd.f32 %v1317, %v1472
      %v1512 = vadd.f32 %v1318, %v1475
      %v1513 = vadd.f32 %v1319, %v1478
      %v1514 = vadd.f32 %v1320, %v1481
      %s1515 = scalar_lea.vmem [#allocation2], 48
      %v1516 = vld [vmem:[%s1515] sm:$0xff]
      %v1517 = vld [vmem:[%s1515 + $0x8] sm:$0xff]
      %v1518 = vld [vmem:[%s1515 + $0x18] sm:$0xff]
      %v1519 = vld [vmem:[%s1515 + $0x20] sm:$0xff]
      %v1520 = vld [vmem:[%s1515 + $0x30] sm:$0xff]
      %v1521 = vld [vmem:[%s1515 + $0x38] sm:$0xff]
      %v1522 = vld [vmem:[%s1515 + $0x48] sm:$0xff]
      %v1523 = vld [vmem:[%s1515 + $0x50] sm:$0xff]
      %v1524 = vld [vmem:[%s1515 + $0x60] sm:$0xff]
      %v1525 = vld [vmem:[%s1515 + $0x68] sm:$0xff]
      %v1526 = vld [vmem:[%s1515 + $0x78] sm:$0xff]
      %v1527 = vld [vmem:[%s1515 + $0x80] sm:$0xff]
      %v1528 = vld [vmem:[%s1515 + $0x90] sm:$0xff]
      %v1529 = vld [vmem:[%s1515 + $0x98] sm:$0xff]
      %v1530 = vld [vmem:[%s1515 + $0xa8] sm:$0xff]
      %v1531 = vld [vmem:[%s1515 + $0xb0] sm:$0xff]
      %v1532 = vld [vmem:[%s1515 + $0xc0] sm:$0xff]
      %v1533 = vld [vmem:[%s1515 + $0xc8] sm:$0xff]
      %v1534 = vld [vmem:[%s1515 + $0xd8] sm:$0xff]
      %v1535 = vld [vmem:[%s1515 + $0xe0] sm:$0xff]
      %v1536 = vld [vmem:[%s1515 + $0xf0] sm:$0xff]
      %v1537 = vld [vmem:[%s1515 + $0xf8] sm:$0xff]
      %v1538 = vld [vmem:[%s1515 + $0x108] sm:$0xff]
      %v1539 = vld [vmem:[%s1515 + $0x110] sm:$0xff]
      %v1540 = vld [vmem:[%s1515 + $0x120] sm:$0xff]
      %v1541 = vld [vmem:[%s1515 + $0x128] sm:$0xff]
      %v1542 = vld [vmem:[%s1515 + $0x138] sm:$0xff]
      %v1543 = vld [vmem:[%s1515 + $0x140] sm:$0xff]
      %v1544 = vld [vmem:[%s1515 + $0x150] sm:$0xff]
      %v1545 = vld [vmem:[%s1515 + $0x158] sm:$0xff]
      %v1546 = vld [vmem:[%s1515 + $0x168] sm:$0xff]
      %v1547 = vld [vmem:[%s1515 + $0x170] sm:$0xff]
      %s1548 = scalar_lea.vmem %s2, 768
      %v1549 = vld [vmem:[%s1548] sm:$0xff]
      %v1550 = vld [vmem:[%s1548 + $0x8] sm:$0xff]
      %v1551 = vld [vmem:[%s1548 + $0x10] sm:$0xff]
      %v1552 = vld [vmem:[%s1548 + $0x18] sm:$0xff]
      %v1553 = vld [vmem:[%s1548 + $0x20] sm:$0xff]
      %v1554 = vld [vmem:[%s1548 + $0x28] sm:$0xff]
      %v1555 = vld [vmem:[%s1548 + $0x30] sm:$0xff]
      %v1556 = vld [vmem:[%s1548 + $0x38] sm:$0xff]
      %v1557 = vld [vmem:[%s1548 + $0x40] sm:$0xff]
      %v1558 = vld [vmem:[%s1548 + $0x48] sm:$0xff]
      %v1559 = vld [vmem:[%s1548 + $0x50] sm:$0xff]
      %v1560 = vld [vmem:[%s1548 + $0x58] sm:$0xff]
      %v1561 = vld [vmem:[%s1548 + $0x60] sm:$0xff]
      %v1562 = vld [vmem:[%s1548 + $0x68] sm:$0xff]
      %v1563 = vld [vmem:[%s1548 + $0x70] sm:$0xff]
      %v1564 = vld [vmem:[%s1548 + $0x78] sm:$0xff]
      %1565 = vmatpush.msra.mxu0 %v1564
      %1566 = vmatpush.msra.mxu0 %v1563
      %1567 = vmatpush.msra.mxu0 %v1562
      %1568 = vmatpush.msra.mxu0 %v1561
      %1569 = vmatpush.msra.mxu0 %v1560
      %1570 = vmatpush.msra.mxu0 %v1559
      %1571 = vmatpush.msra.mxu0 %v1558
      %1572 = vmatpush.msra.mxu0 %v1557
      %1573 = vmatpush.msra.mxu0 %v1556
      %1574 = vmatpush.msra.mxu0 %v1555
      %1575 = vmatpush.msra.mxu0 %v1554
      %1576 = vmatpush.msra.mxu0 %v1553
      %1577 = vmatpush.msra.mxu0 %v1552
      %1578 = vmatpush.msra.mxu0 %v1551
      %1579 = vmatpush.msra.mxu0 %v1550
      %1580 = vmatpush.msra.mxu0 %v1549
      %1581 = vmatmul.f32.gmra.mxu0 %v1516
      %v1582 = vpop.f32.mrf.mxu0
      %v1583 = vadd.f32 0.0, %v1582
      %1584 = vmatmul.f32.gmra.mxu0 %v1517
      %v1585 = vpop.f32.mrf.mxu0
      %v1586 = vadd.f32 0.0, %v1585
      %1587 = vmatmul.f32.gmra.mxu0 %v1518
      %v1588 = vpop.f32.mrf.mxu0
      %v1589 = vadd.f32 0.0, %v1588
      %1590 = vmatmul.f32.gmra.mxu0 %v1519
      %v1591 = vpop.f32.mrf.mxu0
      %v1592 = vadd.f32 0.0, %v1591
      %1593 = vmatmul.f32.gmra.mxu0 %v1520
      %v1594 = vpop.f32.mrf.mxu0
      %v1595 = vadd.f32 0.0, %v1594
      %1596 = vmatmul.f32.gmra.mxu0 %v1521
      %v1597 = vpop.f32.mrf.mxu0
      %v1598 = vadd.f32 0.0, %v1597
      %1599 = vmatmul.f32.gmra.mxu0 %v1522
      %v1600 = vpop.f32.mrf.mxu0
      %v1601 = vadd.f32 0.0, %v1600
      %1602 = vmatmul.f32.gmra.mxu0 %v1523
      %v1603 = vpop.f32.mrf.mxu0
      %v1604 = vadd.f32 0.0, %v1603
      %1605 = vmatmul.f32.gmra.mxu0 %v1524
      %v1606 = vpop.f32.mrf.mxu0
      %v1607 = vadd.f32 0.0, %v1606
      %1608 = vmatmul.f32.gmra.mxu0 %v1525
      %v1609 = vpop.f32.mrf.mxu0
      %v1610 = vadd.f32 0.0, %v1609
      %1611 = vmatmul.f32.gmra.mxu0 %v1526
      %v1612 = vpop.f32.mrf.mxu0
      %v1613 = vadd.f32 0.0, %v1612
      %1614 = vmatmul.f32.gmra.mxu0 %v1527
      %v1615 = vpop.f32.mrf.mxu0
      %v1616 = vadd.f32 0.0, %v1615
      %1617 = vmatmul.f32.gmra.mxu0 %v1528
      %v1618 = vpop.f32.mrf.mxu0
      %v1619 = vadd.f32 0.0, %v1618
      %1620 = vmatmul.f32.gmra.mxu0 %v1529
      %v1621 = vpop.f32.mrf.mxu0
      %v1622 = vadd.f32 0.0, %v1621
      %1623 = vmatmul.f32.gmra.mxu0 %v1530
      %v1624 = vpop.f32.mrf.mxu0
      %v1625 = vadd.f32 0.0, %v1624
      %1626 = vmatmul.f32.gmra.mxu0 %v1531
      %v1627 = vpop.f32.mrf.mxu0
      %v1628 = vadd.f32 0.0, %v1627
      %1629 = vmatmul.f32.gmra.mxu0 %v1532
      %v1630 = vpop.f32.mrf.mxu0
      %v1631 = vadd.f32 0.0, %v1630
      %1632 = vmatmul.f32.gmra.mxu0 %v1533
      %v1633 = vpop.f32.mrf.mxu0
      %v1634 = vadd.f32 0.0, %v1633
      %1635 = vmatmul.f32.gmra.mxu0 %v1534
      %v1636 = vpop.f32.mrf.mxu0
      %v1637 = vadd.f32 0.0, %v1636
      %1638 = vmatmul.f32.gmra.mxu0 %v1535
      %v1639 = vpop.f32.mrf.mxu0
      %v1640 = vadd.f32 0.0, %v1639
      %1641 = vmatmul.f32.gmra.mxu0 %v1536
      %v1642 = vpop.f32.mrf.mxu0
      %v1643 = vadd.f32 0.0, %v1642
      %1644 = vmatmul.f32.gmra.mxu0 %v1537
      %v1645 = vpop.f32.mrf.mxu0
      %v1646 = vadd.f32 0.0, %v1645
      %1647 = vmatmul.f32.gmra.mxu0 %v1538
      %v1648 = vpop.f32.mrf.mxu0
      %v1649 = vadd.f32 0.0, %v1648
      %1650 = vmatmul.f32.gmra.mxu0 %v1539
      %v1651 = vpop.f32.mrf.mxu0
      %v1652 = vadd.f32 0.0, %v1651
      %1653 = vmatmul.f32.gmra.mxu0 %v1540
      %v1654 = vpop.f32.mrf.mxu0
      %v1655 = vadd.f32 0.0, %v1654
      %1656 = vmatmul.f32.gmra.mxu0 %v1541
      %v1657 = vpop.f32.mrf.mxu0
      %v1658 = vadd.f32 0.0, %v1657
      %1659 = vmatmul.f32.gmra.mxu0 %v1542
      %v1660 = vpop.f32.mrf.mxu0
      %v1661 = vadd.f32 0.0, %v1660
      %1662 = vmatmul.f32.gmra.mxu0 %v1543
      %v1663 = vpop.f32.mrf.mxu0
      %v1664 = vadd.f32 0.0, %v1663
      %1665 = vmatmul.f32.gmra.mxu0 %v1544
      %v1666 = vpop.f32.mrf.mxu0
      %v1667 = vadd.f32 0.0, %v1666
      %1668 = vmatmul.f32.gmra.mxu0 %v1545
      %v1669 = vpop.f32.mrf.mxu0
      %v1670 = vadd.f32 0.0, %v1669
      %1671 = vmatmul.f32.gmra.mxu0 %v1546
      %v1672 = vpop.f32.mrf.mxu0
      %v1673 = vadd.f32 0.0, %v1672
      %1674 = vmatmul.f32.gmra.mxu0 %v1547
      %v1675 = vpop.f32.mrf.mxu0
      %v1676 = vadd.f32 0.0, %v1675
      %1677 = vdwg.mxu0
      %v1678 = vadd.f32 %v1483, %v1583
      %v1679 = vadd.f32 %v1484, %v1586
      %v1680 = vadd.f32 %v1485, %v1589
      %v1681 = vadd.f32 %v1486, %v1592
      %v1682 = vadd.f32 %v1487, %v1595
      %v1683 = vadd.f32 %v1488, %v1598
      %v1684 = vadd.f32 %v1489, %v1601
      %v1685 = vadd.f32 %v1490, %v1604
      %v1686 = vadd.f32 %v1491, %v1607
      %v1687 = vadd.f32 %v1492, %v1610
      %v1688 = vadd.f32 %v1493, %v1613
      %v1689 = vadd.f32 %v1494, %v1616
      %v1690 = vadd.f32 %v1495, %v1619
      %v1691 = vadd.f32 %v1496, %v1622
      %v1692 = vadd.f32 %v1497, %v1625
      %v1693 = vadd.f32 %v1498, %v1628
      %v1694 = vadd.f32 %v1499, %v1631
      %v1695 = vadd.f32 %v1500, %v1634
      %v1696 = vadd.f32 %v1501, %v1637
      %v1697 = vadd.f32 %v1502, %v1640
      %v1698 = vadd.f32 %v1503, %v1643
      %v1699 = vadd.f32 %v1504, %v1646
      %v1700 = vadd.f32 %v1505, %v1649
      %v1701 = vadd.f32 %v1506, %v1652
      %v1702 = vadd.f32 %v1507, %v1655
      %v1703 = vadd.f32 %v1508, %v1658
      %v1704 = vadd.f32 %v1509, %v1661
      %v1705 = vadd.f32 %v1510, %v1664
      %v1706 = vadd.f32 %v1511, %v1667
      %v1707 = vadd.f32 %v1512, %v1670
      %v1708 = vadd.f32 %v1513, %v1673
      %v1709 = vadd.f32 %v1514, %v1676
      %v1710 = vld [vmem:[%s1515 + $0x1] sm:$0xff]
      %v1711 = vld [vmem:[%s1515 + $0x9] sm:$0xff]
      %v1712 = vld [vmem:[%s1515 + $0x19] sm:$0xff]
      %v1713 = vld [vmem:[%s1515 + $0x21] sm:$0xff]
      %v1714 = vld [vmem:[%s1515 + $0x31] sm:$0xff]
      %v1715 = vld [vmem:[%s1515 + $0x39] sm:$0xff]
      %v1716 = vld [vmem:[%s1515 + $0x49] sm:$0xff]
      %v1717 = vld [vmem:[%s1515 + $0x51] sm:$0xff]
      %v1718 = vld [vmem:[%s1515 + $0x61] sm:$0xff]
      %v1719 = vld [vmem:[%s1515 + $0x69] sm:$0xff]
      %v1720 = vld [vmem:[%s1515 + $0x79] sm:$0xff]
      %v1721 = vld [vmem:[%s1515 + $0x81] sm:$0xff]
      %v1722 = vld [vmem:[%s1515 + $0x91] sm:$0xff]
      %v1723 = vld [vmem:[%s1515 + $0x99] sm:$0xff]
      %v1724 = vld [vmem:[%s1515 + $0xa9] sm:$0xff]
      %v1725 = vld [vmem:[%s1515 + $0xb1] sm:$0xff]
      %v1726 = vld [vmem:[%s1515 + $0xc1] sm:$0xff]
      %v1727 = vld [vmem:[%s1515 + $0xc9] sm:$0xff]
      %v1728 = vld [vmem:[%s1515 + $0xd9] sm:$0xff]
      %v1729 = vld [vmem:[%s1515 + $0xe1] sm:$0xff]
      %v1730 = vld [vmem:[%s1515 + $0xf1] sm:$0xff]
      %v1731 = vld [vmem:[%s1515 + $0xf9] sm:$0xff]
      %v1732 = vld [vmem:[%s1515 + $0x109] sm:$0xff]
      %v1733 = vld [vmem:[%s1515 + $0x111] sm:$0xff]
      %v1734 = vld [vmem:[%s1515 + $0x121] sm:$0xff]
      %v1735 = vld [vmem:[%s1515 + $0x129] sm:$0xff]
      %v1736 = vld [vmem:[%s1515 + $0x139] sm:$0xff]
      %v1737 = vld [vmem:[%s1515 + $0x141] sm:$0xff]
      %v1738 = vld [vmem:[%s1515 + $0x151] sm:$0xff]
      %v1739 = vld [vmem:[%s1515 + $0x159] sm:$0xff]
      %v1740 = vld [vmem:[%s1515 + $0x169] sm:$0xff]
      %v1741 = vld [vmem:[%s1515 + $0x171] sm:$0xff]
      %s1742 = scalar_lea.vmem %s2, 896
      %v1743 = vld [vmem:[%s1742] sm:$0xff]
      %v1744 = vld [vmem:[%s1742 + $0x8] sm:$0xff]
      %v1745 = vld [vmem:[%s1742 + $0x10] sm:$0xff]
      %v1746 = vld [vmem:[%s1742 + $0x18] sm:$0xff]
      %v1747 = vld [vmem:[%s1742 + $0x20] sm:$0xff]
      %v1748 = vld [vmem:[%s1742 + $0x28] sm:$0xff]
      %v1749 = vld [vmem:[%s1742 + $0x30] sm:$0xff]
      %v1750 = vld [vmem:[%s1742 + $0x38] sm:$0xff]
      %v1751 = vld [vmem:[%s1742 + $0x40] sm:$0xff]
      %v1752 = vld [vmem:[%s1742 + $0x48] sm:$0xff]
      %v1753 = vld [vmem:[%s1742 + $0x50] sm:$0xff]
      %v1754 = vld [vmem:[%s1742 + $0x58] sm:$0xff]
      %v1755 = vld [vmem:[%s1742 + $0x60] sm:$0xff]
      %v1756 = vld [vmem:[%s1742 + $0x68] sm:$0xff]
      %v1757 = vld [vmem:[%s1742 + $0x70] sm:$0xff]
      %v1758 = vld [vmem:[%s1742 + $0x78] sm:$0xff]
      %1759 = vmatpush.msra.mxu0 %v1758
      %1760 = vmatpush.msra.mxu0 %v1757
      %1761 = vmatpush.msra.mxu0 %v1756
      %1762 = vmatpush.msra.mxu0 %v1755
      %1763 = vmatpush.msra.mxu0 %v1754
      %1764 = vmatpush.msra.mxu0 %v1753
      %1765 = vmatpush.msra.mxu0 %v1752
      %1766 = vmatpush.msra.mxu0 %v1751
      %1767 = vmatpush.msra.mxu0 %v1750
      %1768 = vmatpush.msra.mxu0 %v1749
      %1769 = vmatpush.msra.mxu0 %v1748
      %1770 = vmatpush.msra.mxu0 %v1747
      %1771 = vmatpush.msra.mxu0 %v1746
      %1772 = vmatpush.msra.mxu0 %v1745
      %1773 = vmatpush.msra.mxu0 %v1744
      %1774 = vmatpush.msra.mxu0 %v1743
      %1775 = vmatmul.f32.gmra.mxu0 %v1710
      %v1776 = vpop.f32.mrf.mxu0
      %v1777 = vadd.f32 0.0, %v1776
      %1778 = vmatmul.f32.gmra.mxu0 %v1711
      %v1779 = vpop.f32.mrf.mxu0
      %v1780 = vadd.f32 0.0, %v1779
      %1781 = vmatmul.f32.gmra.mxu0 %v1712
      %v1782 = vpop.f32.mrf.mxu0
      %v1783 = vadd.f32 0.0, %v1782
      %1784 = vmatmul.f32.gmra.mxu0 %v1713
      %v1785 = vpop.f32.mrf.mxu0
      %v1786 = vadd.f32 0.0, %v1785
      %1787 = vmatmul.f32.gmra.mxu0 %v1714
      %v1788 = vpop.f32.mrf.mxu0
      %v1789 = vadd.f32 0.0, %v1788
      %1790 = vmatmul.f32.gmra.mxu0 %v1715
      %v1791 = vpop.f32.mrf.mxu0
      %v1792 = vadd.f32 0.0, %v1791
      %1793 = vmatmul.f32.gmra.mxu0 %v1716
      %v1794 = vpop.f32.mrf.mxu0
      %v1795 = vadd.f32 0.0, %v1794
      %1796 = vmatmul.f32.gmra.mxu0 %v1717
      %v1797 = vpop.f32.mrf.mxu0
      %v1798 = vadd.f32 0.0, %v1797
      %1799 = vmatmul.f32.gmra.mxu0 %v1718
      %v1800 = vpop.f32.mrf.mxu0
      %v1801 = vadd.f32 0.0, %v1800
      %1802 = vmatmul.f32.gmra.mxu0 %v1719
      %v1803 = vpop.f32.mrf.mxu0
      %v1804 = vadd.f32 0.0, %v1803
      %1805 = vmatmul.f32.gmra.mxu0 %v1720
      %v1806 = vpop.f32.mrf.mxu0
      %v1807 = vadd.f32 0.0, %v1806
      %1808 = vmatmul.f32.gmra.mxu0 %v1721
      %v1809 = vpop.f32.mrf.mxu0
      %v1810 = vadd.f32 0.0, %v1809
      %1811 = vmatmul.f32.gmra.mxu0 %v1722
      %v1812 = vpop.f32.mrf.mxu0
      %v1813 = vadd.f32 0.0, %v1812
      %1814 = vmatmul.f32.gmra.mxu0 %v1723
      %v1815 = vpop.f32.mrf.mxu0
      %v1816 = vadd.f32 0.0, %v1815
      %1817 = vmatmul.f32.gmra.mxu0 %v1724
      %v1818 = vpop.f32.mrf.mxu0
      %v1819 = vadd.f32 0.0, %v1818
      %1820 = vmatmul.f32.gmra.mxu0 %v1725
      %v1821 = vpop.f32.mrf.mxu0
      %v1822 = vadd.f32 0.0, %v1821
      %1823 = vmatmul.f32.gmra.mxu0 %v1726
      %v1824 = vpop.f32.mrf.mxu0
      %v1825 = vadd.f32 0.0, %v1824
      %1826 = vmatmul.f32.gmra.mxu0 %v1727
      %v1827 = vpop.f32.mrf.mxu0
      %v1828 = vadd.f32 0.0, %v1827
      %1829 = vmatmul.f32.gmra.mxu0 %v1728
      %v1830 = vpop.f32.mrf.mxu0
      %v1831 = vadd.f32 0.0, %v1830
      %1832 = vmatmul.f32.gmra.mxu0 %v1729
      %v1833 = vpop.f32.mrf.mxu0
      %v1834 = vadd.f32 0.0, %v1833
      %1835 = vmatmul.f32.gmra.mxu0 %v1730
      %v1836 = vpop.f32.mrf.mxu0
      %v1837 = vadd.f32 0.0, %v1836
      %1838 = vmatmul.f32.gmra.mxu0 %v1731
      %v1839 = vpop.f32.mrf.mxu0
      %v1840 = vadd.f32 0.0, %v1839
      %1841 = vmatmul.f32.gmra.mxu0 %v1732
      %v1842 = vpop.f32.mrf.mxu0
      %v1843 = vadd.f32 0.0, %v1842
      %1844 = vmatmul.f32.gmra.mxu0 %v1733
      %v1845 = vpop.f32.mrf.mxu0
      %v1846 = vadd.f32 0.0, %v1845
      %1847 = vmatmul.f32.gmra.mxu0 %v1734
      %v1848 = vpop.f32.mrf.mxu0
      %v1849 = vadd.f32 0.0, %v1848
      %1850 = vmatmul.f32.gmra.mxu0 %v1735
      %v1851 = vpop.f32.mrf.mxu0
      %v1852 = vadd.f32 0.0, %v1851
      %1853 = vmatmul.f32.gmra.mxu0 %v1736
      %v1854 = vpop.f32.mrf.mxu0
      %v1855 = vadd.f32 0.0, %v1854
      %1856 = vmatmul.f32.gmra.mxu0 %v1737
      %v1857 = vpop.f32.mrf.mxu0
      %v1858 = vadd.f32 0.0, %v1857
      %1859 = vmatmul.f32.gmra.mxu0 %v1738
      %v1860 = vpop.f32.mrf.mxu0
      %v1861 = vadd.f32 0.0, %v1860
      %1862 = vmatmul.f32.gmra.mxu0 %v1739
      %v1863 = vpop.f32.mrf.mxu0
      %v1864 = vadd.f32 0.0, %v1863
      %1865 = vmatmul.f32.gmra.mxu0 %v1740
      %v1866 = vpop.f32.mrf.mxu0
      %v1867 = vadd.f32 0.0, %v1866
      %1868 = vmatmul.f32.gmra.mxu0 %v1741
      %v1869 = vpop.f32.mrf.mxu0
      %v1870 = vadd.f32 0.0, %v1869
      %1871 = vdwg.mxu0
      %v1872 = vadd.f32 %v1678, %v1777
      %v1873 = vadd.f32 %v1679, %v1780
      %v1874 = vadd.f32 %v1680, %v1783
      %v1875 = vadd.f32 %v1681, %v1786
      %v1876 = vadd.f32 %v1682, %v1789
      %v1877 = vadd.f32 %v1683, %v1792
      %v1878 = vadd.f32 %v1684, %v1795
      %v1879 = vadd.f32 %v1685, %v1798
      %v1880 = vadd.f32 %v1686, %v1801
      %v1881 = vadd.f32 %v1687, %v1804
      %v1882 = vadd.f32 %v1688, %v1807
      %v1883 = vadd.f32 %v1689, %v1810
      %v1884 = vadd.f32 %v1690, %v1813
      %v1885 = vadd.f32 %v1691, %v1816
      %v1886 = vadd.f32 %v1692, %v1819
      %v1887 = vadd.f32 %v1693, %v1822
      %v1888 = vadd.f32 %v1694, %v1825
      %v1889 = vadd.f32 %v1695, %v1828
      %v1890 = vadd.f32 %v1696, %v1831
      %v1891 = vadd.f32 %v1697, %v1834
      %v1892 = vadd.f32 %v1698, %v1837
      %v1893 = vadd.f32 %v1699, %v1840
      %v1894 = vadd.f32 %v1700, %v1843
      %v1895 = vadd.f32 %v1701, %v1846
      %v1896 = vadd.f32 %v1702, %v1849
      %v1897 = vadd.f32 %v1703, %v1852
      %v1898 = vadd.f32 %v1704, %v1855
      %v1899 = vadd.f32 %v1705, %v1858
      %v1900 = vadd.f32 %v1706, %v1861
      %v1901 = vadd.f32 %v1707, %v1864
      %v1902 = vadd.f32 %v1708, %v1867
      %v1903 = vadd.f32 %v1709, %v1870
      %v1904 = vld [vmem:[%s1515 + $0x2] sm:$0xff]
      %v1905 = vld [vmem:[%s1515 + $0xa] sm:$0xff]
      %v1906 = vld [vmem:[%s1515 + $0x1a] sm:$0xff]
      %v1907 = vld [vmem:[%s1515 + $0x22] sm:$0xff]
      %v1908 = vld [vmem:[%s1515 + $0x32] sm:$0xff]
      %v1909 = vld [vmem:[%s1515 + $0x3a] sm:$0xff]
      %v1910 = vld [vmem:[%s1515 + $0x4a] sm:$0xff]
      %v1911 = vld [vmem:[%s1515 + $0x52] sm:$0xff]
      %v1912 = vld [vmem:[%s1515 + $0x62] sm:$0xff]
      %v1913 = vld [vmem:[%s1515 + $0x6a] sm:$0xff]
      %v1914 = vld [vmem:[%s1515 + $0x7a] sm:$0xff]
      %v1915 = vld [vmem:[%s1515 + $0x82] sm:$0xff]
      %v1916 = vld [vmem:[%s1515 + $0x92] sm:$0xff]
      %v1917 = vld [vmem:[%s1515 + $0x9a] sm:$0xff]
      %v1918 = vld [vmem:[%s1515 + $0xaa] sm:$0xff]
      %v1919 = vld [vmem:[%s1515 + $0xb2] sm:$0xff]
      %v1920 = vld [vmem:[%s1515 + $0xc2] sm:$0xff]
      %v1921 = vld [vmem:[%s1515 + $0xca] sm:$0xff]
      %v1922 = vld [vmem:[%s1515 + $0xda] sm:$0xff]
      %v1923 = vld [vmem:[%s1515 + $0xe2] sm:$0xff]
      %v1924 = vld [vmem:[%s1515 + $0xf2] sm:$0xff]
      %v1925 = vld [vmem:[%s1515 + $0xfa] sm:$0xff]
      %v1926 = vld [vmem:[%s1515 + $0x10a] sm:$0xff]
      %v1927 = vld [vmem:[%s1515 + $0x112] sm:$0xff]
      %v1928 = vld [vmem:[%s1515 + $0x122] sm:$0xff]
      %v1929 = vld [vmem:[%s1515 + $0x12a] sm:$0xff]
      %v1930 = vld [vmem:[%s1515 + $0x13a] sm:$0xff]
      %v1931 = vld [vmem:[%s1515 + $0x142] sm:$0xff]
      %v1932 = vld [vmem:[%s1515 + $0x152] sm:$0xff]
      %v1933 = vld [vmem:[%s1515 + $0x15a] sm:$0xff]
      %v1934 = vld [vmem:[%s1515 + $0x16a] sm:$0xff]
      %v1935 = vld [vmem:[%s1515 + $0x172] sm:$0xff]
      %s1936 = scalar_lea.vmem %s2, 1024
      %v1937 = vld [vmem:[%s1936] sm:$0xff]
      %v1938 = vld [vmem:[%s1936 + $0x8] sm:$0xff]
      %v1939 = vld [vmem:[%s1936 + $0x10] sm:$0xff]
      %v1940 = vld [vmem:[%s1936 + $0x18] sm:$0xff]
      %v1941 = vld [vmem:[%s1936 + $0x20] sm:$0xff]
      %v1942 = vld [vmem:[%s1936 + $0x28] sm:$0xff]
      %v1943 = vld [vmem:[%s1936 + $0x30] sm:$0xff]
      %v1944 = vld [vmem:[%s1936 + $0x38] sm:$0xff]
      %v1945 = vld [vmem:[%s1936 + $0x40] sm:$0xff]
      %v1946 = vld [vmem:[%s1936 + $0x48] sm:$0xff]
      %v1947 = vld [vmem:[%s1936 + $0x50] sm:$0xff]
      %v1948 = vld [vmem:[%s1936 + $0x58] sm:$0xff]
      %v1949 = vld [vmem:[%s1936 + $0x60] sm:$0xff]
      %v1950 = vld [vmem:[%s1936 + $0x68] sm:$0xff]
      %v1951 = vld [vmem:[%s1936 + $0x70] sm:$0xff]
      %v1952 = vld [vmem:[%s1936 + $0x78] sm:$0xff]
      %1953 = vmatpush.msra.mxu0 %v1952
      %1954 = vmatpush.msra.mxu0 %v1951
      %1955 = vmatpush.msra.mxu0 %v1950
      %1956 = vmatpush.msra.mxu0 %v1949
      %1957 = vmatpush.msra.mxu0 %v1948
      %1958 = vmatpush.msra.mxu0 %v1947
      %1959 = vmatpush.msra.mxu0 %v1946
      %1960 = vmatpush.msra.mxu0 %v1945
      %1961 = vmatpush.msra.mxu0 %v1944
      %1962 = vmatpush.msra.mxu0 %v1943
      %1963 = vmatpush.msra.mxu0 %v1942
      %1964 = vmatpush.msra.mxu0 %v1941
      %1965 = vmatpush.msra.mxu0 %v1940
      %1966 = vmatpush.msra.mxu0 %v1939
      %1967 = vmatpush.msra.mxu0 %v1938
      %1968 = vmatpush.msra.mxu0 %v1937
      %1969 = vmatmul.f32.gmra.mxu0 %v1904
      %v1970 = vpop.f32.mrf.mxu0
      %v1971 = vadd.f32 0.0, %v1970
      %1972 = vmatmul.f32.gmra.mxu0 %v1905
      %v1973 = vpop.f32.mrf.mxu0
      %v1974 = vadd.f32 0.0, %v1973
      %1975 = vmatmul.f32.gmra.mxu0 %v1906
      %v1976 = vpop.f32.mrf.mxu0
      %v1977 = vadd.f32 0.0, %v1976
      %1978 = vmatmul.f32.gmra.mxu0 %v1907
      %v1979 = vpop.f32.mrf.mxu0
      %v1980 = vadd.f32 0.0, %v1979
      %1981 = vmatmul.f32.gmra.mxu0 %v1908
      %v1982 = vpop.f32.mrf.mxu0
      %v1983 = vadd.f32 0.0, %v1982
      %1984 = vmatmul.f32.gmra.mxu0 %v1909
      %v1985 = vpop.f32.mrf.mxu0
      %v1986 = vadd.f32 0.0, %v1985
      %1987 = vmatmul.f32.gmra.mxu0 %v1910
      %v1988 = vpop.f32.mrf.mxu0
      %v1989 = vadd.f32 0.0, %v1988
      %1990 = vmatmul.f32.gmra.mxu0 %v1911
      %v1991 = vpop.f32.mrf.mxu0
      %v1992 = vadd.f32 0.0, %v1991
      %1993 = vmatmul.f32.gmra.mxu0 %v1912
      %v1994 = vpop.f32.mrf.mxu0
      %v1995 = vadd.f32 0.0, %v1994
      %1996 = vmatmul.f32.gmra.mxu0 %v1913
      %v1997 = vpop.f32.mrf.mxu0
      %v1998 = vadd.f32 0.0, %v1997
      %1999 = vmatmul.f32.gmra.mxu0 %v1914
      %v2000 = vpop.f32.mrf.mxu0
      %v2001 = vadd.f32 0.0, %v2000
      %2002 = vmatmul.f32.gmra.mxu0 %v1915
      %v2003 = vpop.f32.mrf.mxu0
      %v2004 = vadd.f32 0.0, %v2003
      %2005 = vmatmul.f32.gmra.mxu0 %v1916
      %v2006 = vpop.f32.mrf.mxu0
      %v2007 = vadd.f32 0.0, %v2006
      %2008 = vmatmul.f32.gmra.mxu0 %v1917
      %v2009 = vpop.f32.mrf.mxu0
      %v2010 = vadd.f32 0.0, %v2009
      %2011 = vmatmul.f32.gmra.mxu0 %v1918
      %v2012 = vpop.f32.mrf.mxu0
      %v2013 = vadd.f32 0.0, %v2012
      %2014 = vmatmul.f32.gmra.mxu0 %v1919
      %v2015 = vpop.f32.mrf.mxu0
      %v2016 = vadd.f32 0.0, %v2015
      %2017 = vmatmul.f32.gmra.mxu0 %v1920
      %v2018 = vpop.f32.mrf.mxu0
      %v2019 = vadd.f32 0.0, %v2018
      %2020 = vmatmul.f32.gmra.mxu0 %v1921
      %v2021 = vpop.f32.mrf.mxu0
      %v2022 = vadd.f32 0.0, %v2021
      %2023 = vmatmul.f32.gmra.mxu0 %v1922
      %v2024 = vpop.f32.mrf.mxu0
      %v2025 = vadd.f32 0.0, %v2024
      %2026 = vmatmul.f32.gmra.mxu0 %v1923
      %v2027 = vpop.f32.mrf.mxu0
      %v2028 = vadd.f32 0.0, %v2027
      %2029 = vmatmul.f32.gmra.mxu0 %v1924
      %v2030 = vpop.f32.mrf.mxu0
      %v2031 = vadd.f32 0.0, %v2030
      %2032 = vmatmul.f32.gmra.mxu0 %v1925
      %v2033 = vpop.f32.mrf.mxu0
      %v2034 = vadd.f32 0.0, %v2033
      %2035 = vmatmul.f32.gmra.mxu0 %v1926
      %v2036 = vpop.f32.mrf.mxu0
      %v2037 = vadd.f32 0.0, %v2036
      %2038 = vmatmul.f32.gmra.mxu0 %v1927
      %v2039 = vpop.f32.mrf.mxu0
      %v2040 = vadd.f32 0.0, %v2039
      %2041 = vmatmul.f32.gmra.mxu0 %v1928
      %v2042 = vpop.f32.mrf.mxu0
      %v2043 = vadd.f32 0.0, %v2042
      %2044 = vmatmul.f32.gmra.mxu0 %v1929
      %v2045 = vpop.f32.mrf.mxu0
      %v2046 = vadd.f32 0.0, %v2045
      %2047 = vmatmul.f32.gmra.mxu0 %v1930
      %v2048 = vpop.f32.mrf.mxu0
      %v2049 = vadd.f32 0.0, %v2048
      %2050 = vmatmul.f32.gmra.mxu0 %v1931
      %v2051 = vpop.f32.mrf.mxu0
      %v2052 = vadd.f32 0.0, %v2051
      %2053 = vmatmul.f32.gmra.mxu0 %v1932
      %v2054 = vpop.f32.mrf.mxu0
      %v2055 = vadd.f32 0.0, %v2054
      %2056 = vmatmul.f32.gmra.mxu0 %v1933
      %v2057 = vpop.f32.mrf.mxu0
      %v2058 = vadd.f32 0.0, %v2057
      %2059 = vmatmul.f32.gmra.mxu0 %v1934
      %v2060 = vpop.f32.mrf.mxu0
      %v2061 = vadd.f32 0.0, %v2060
      %2062 = vmatmul.f32.gmra.mxu0 %v1935
      %v2063 = vpop.f32.mrf.mxu0
      %v2064 = vadd.f32 0.0, %v2063
      %2065 = vdwg.mxu0
      %v2066 = vadd.f32 %v1872, %v1971
      %v2067 = vadd.f32 %v1873, %v1974
      %v2068 = vadd.f32 %v1874, %v1977
      %v2069 = vadd.f32 %v1875, %v1980
      %v2070 = vadd.f32 %v1876, %v1983
      %v2071 = vadd.f32 %v1877, %v1986
      %v2072 = vadd.f32 %v1878, %v1989
      %v2073 = vadd.f32 %v1879, %v1992
      %v2074 = vadd.f32 %v1880, %v1995
      %v2075 = vadd.f32 %v1881, %v1998
      %v2076 = vadd.f32 %v1882, %v2001
      %v2077 = vadd.f32 %v1883, %v2004
      %v2078 = vadd.f32 %v1884, %v2007
      %v2079 = vadd.f32 %v1885, %v2010
      %v2080 = vadd.f32 %v1886, %v2013
      %v2081 = vadd.f32 %v1887, %v2016
      %v2082 = vadd.f32 %v1888, %v2019
      %v2083 = vadd.f32 %v1889, %v2022
      %v2084 = vadd.f32 %v1890, %v2025
      %v2085 = vadd.f32 %v1891, %v2028
      %v2086 = vadd.f32 %v1892, %v2031
      %v2087 = vadd.f32 %v1893, %v2034
      %v2088 = vadd.f32 %v1894, %v2037
      %v2089 = vadd.f32 %v1895, %v2040
      %v2090 = vadd.f32 %v1896, %v2043
      %v2091 = vadd.f32 %v1897, %v2046
      %v2092 = vadd.f32 %v1898, %v2049
      %v2093 = vadd.f32 %v1899, %v2052
      %v2094 = vadd.f32 %v1900, %v2055
      %v2095 = vadd.f32 %v1901, %v2058
      %v2096 = vadd.f32 %v1902, %v2061
      %v2097 = vadd.f32 %v1903, %v2064
      %v2098 = vadd.f32 %v2066, %v2067
      %v2099 = vadd.f32 %v2098, %v2068
      %v2100 = vadd.f32 %v2099, %v2069
      %v2101 = vadd.f32 %v2100, %v2070
      %v2102 = vadd.f32 %v2101, %v2071
      %v2103 = vadd.f32 %v2102, %v2072
      %v2104 = vadd.f32 %v2103, %v2073
      %v2105 = vadd.f32 %v2104, %v2074
      %v2106 = vadd.f32 %v2105, %v2075
      %v2107 = vadd.f32 %v2106, %v2076
      %v2108 = vadd.f32 %v2107, %v2077
      %v2109 = vadd.f32 %v2108, %v2078
      %v2110 = vadd.f32 %v2109, %v2079
      %v2111 = vadd.f32 %v2110, %v2080
      %v2112 = vadd.f32 %v2111, %v2081
      %v2113 = vadd.f32 %v2112, %v2082
      %v2114 = vadd.f32 %v2113, %v2083
      %v2115 = vadd.f32 %v2114, %v2084
      %v2116 = vadd.f32 %v2115, %v2085
      %v2117 = vadd.f32 %v2116, %v2086
      %v2118 = vadd.f32 %v2117, %v2087
      %v2119 = vadd.f32 %v2118, %v2088
      %v2120 = vadd.f32 %v2119, %v2089
      %v2121 = vadd.f32 %v2120, %v2090
      %v2122 = vadd.f32 %v2121, %v2091
      %v2123 = vadd.f32 %v2122, %v2092
      %v2124 = vadd.f32 %v2123, %v2093
      %v2125 = vadd.f32 %v2124, %v2094
      %v2126 = vadd.f32 %v2125, %v2095
      %v2127 = vadd.f32 %v2126, %v2096
      %v2128 = vadd.f32 %v2127, %v2097
      %v2129 = vrot.slane %v2128, 4
      %v2130 = vadd.f32 %v2128, %v2129
      %v2131 = vrot.slane %v2130, 2
      %v2132 = vadd.f32 %v2130, %v2131
      %v2133 = vrot.slane %v2132, 1
      %v2134 = vadd.f32 %v2132, %v2133
      %2135 = vst [vmem:[%s208] sm:$0x1] %v2134
      %v2136 = vmul.f32 %v2066, %v2066
      %v2137 = vmul.f32 %v2067, %v2067
      %v2138 = vmul.f32 %v2068, %v2068
      %v2139 = vmul.f32 %v2069, %v2069
      %v2140 = vmul.f32 %v2070, %v2070
      %v2141 = vmul.f32 %v2071, %v2071
      %v2142 = vmul.f32 %v2072, %v2072
      %v2143 = vmul.f32 %v2073, %v2073
      %v2144 = vmul.f32 %v2074, %v2074
      %v2145 = vmul.f32 %v2075, %v2075
      %v2146 = vmul.f32 %v2076, %v2076
      %v2147 = vmul.f32 %v2077, %v2077
      %v2148 = vmul.f32 %v2078, %v2078
      %v2149 = vmul.f32 %v2079, %v2079
      %v2150 = vmul.f32 %v2080, %v2080
      %v2151 = vmul.f32 %v2081, %v2081
      %v2152 = vmul.f32 %v2082, %v2082
      %v2153 = vmul.f32 %v2083, %v2083
      %v2154 = vmul.f32 %v2084, %v2084
      %v2155 = vmul.f32 %v2085, %v2085
      %v2156 = vmul.f32 %v2086, %v2086
      %v2157 = vmul.f32 %v2087, %v2087
      %v2158 = vmul.f32 %v2088, %v2088
      %v2159 = vmul.f32 %v2089, %v2089
      %v2160 = vmul.f32 %v2090, %v2090
      %v2161 = vmul.f32 %v2091, %v2091
      %v2162 = vmul.f32 %v2092, %v2092
      %v2163 = vmul.f32 %v2093, %v2093
      %v2164 = vmul.f32 %v2094, %v2094
      %v2165 = vmul.f32 %v2095, %v2095
      %v2166 = vmul.f32 %v2096, %v2096
      %v2167 = vmul.f32 %v2097, %v2097
      %v2168 = vadd.f32 %v2136, %v2137
      %v2169 = vadd.f32 %v2168, %v2138
      %v2170 = vadd.f32 %v2169, %v2139
      %v2171 = vadd.f32 %v2170, %v2140
      %v2172 = vadd.f32 %v2171, %v2141
      %v2173 = vadd.f32 %v2172, %v2142
      %v2174 = vadd.f32 %v2173, %v2143
      %v2175 = vadd.f32 %v2174, %v2144
      %v2176 = vadd.f32 %v2175, %v2145
      %v2177 = vadd.f32 %v2176, %v2146
      %v2178 = vadd.f32 %v2177, %v2147
      %v2179 = vadd.f32 %v2178, %v2148
      %v2180 = vadd.f32 %v2179, %v2149
      %v2181 = vadd.f32 %v2180, %v2150
      %v2182 = vadd.f32 %v2181, %v2151
      %v2183 = vadd.f32 %v2182, %v2152
      %v2184 = vadd.f32 %v2183, %v2153
      %v2185 = vadd.f32 %v2184, %v2154
      %v2186 = vadd.f32 %v2185, %v2155
      %v2187 = vadd.f32 %v2186, %v2156
      %v2188 = vadd.f32 %v2187, %v2157
      %v2189 = vadd.f32 %v2188, %v2158
      %v2190 = vadd.f32 %v2189, %v2159
      %v2191 = vadd.f32 %v2190, %v2160
      %v2192 = vadd.f32 %v2191, %v2161
      %v2193 = vadd.f32 %v2192, %v2162
      %v2194 = vadd.f32 %v2193, %v2163
      %v2195 = vadd.f32 %v2194, %v2164
      %v2196 = vadd.f32 %v2195, %v2165
      %v2197 = vadd.f32 %v2196, %v2166
      %v2198 = vadd.f32 %v2197, %v2167
      %v2199 = vrot.slane %v2198, 4
      %v2200 = vadd.f32 %v2198, %v2199
      %v2201 = vrot.slane %v2200, 2
      %v2202 = vadd.f32 %v2200, %v2201
      %v2203 = vrot.slane %v2202, 1
      %v2204 = vadd.f32 %v2202, %v2203
      %2205 = vst [vmem:[%s208 + $0x1] sm:$0x1] %v2204
      %2206 = vst [vmem:[%s204] sm:$0xff] %v2066
      %2207 = vst [vmem:[%s204 + $0x8] sm:$0xff] %v2067
      %2208 = vst [vmem:[%s204 + $0x10] sm:$0xff] %v2068
      %2209 = vst [vmem:[%s204 + $0x18] sm:$0xff] %v2069
      %2210 = vst [vmem:[%s204 + $0x20] sm:$0xff] %v2070
      %2211 = vst [vmem:[%s204 + $0x28] sm:$0xff] %v2071
      %2212 = vst [vmem:[%s204 + $0x30] sm:$0xff] %v2072
      %2213 = vst [vmem:[%s204 + $0x38] sm:$0xff] %v2073
      %2214 = vst [vmem:[%s204 + $0x40] sm:$0xff] %v2074
      %2215 = vst [vmem:[%s204 + $0x48] sm:$0xff] %v2075
      %2216 = vst [vmem:[%s204 + $0x50] sm:$0xff] %v2076
      %2217 = vst [vmem:[%s204 + $0x58] sm:$0xff] %v2077
      %2218 = vst [vmem:[%s204 + $0x60] sm:$0xff] %v2078
      %2219 = vst [vmem:[%s204 + $0x68] sm:$0xff] %v2079
      %2220 = vst [vmem:[%s204 + $0x70] sm:$0xff] %v2080
      %2221 = vst [vmem:[%s204 + $0x78] sm:$0xff] %v2081
      %2222 = vst [vmem:[%s204 + $0x80] sm:$0xff] %v2082
      %2223 = vst [vmem:[%s204 + $0x88] sm:$0xff] %v2083
      %2224 = vst [vmem:[%s204 + $0x90] sm:$0xff] %v2084
      %2225 = vst [vmem:[%s204 + $0x98] sm:$0xff] %v2085
      %2226 = vst [vmem:[%s204 + $0xa0] sm:$0xff] %v2086
      %2227 = vst [vmem:[%s204 + $0xa8] sm:$0xff] %v2087
      %2228 = vst [vmem:[%s204 + $0xb0] sm:$0xff] %v2088
      %2229 = vst [vmem:[%s204 + $0xb8] sm:$0xff] %v2089
      %2230 = vst [vmem:[%s204 + $0xc0] sm:$0xff] %v2090
      %2231 = vst [vmem:[%s204 + $0xc8] sm:$0xff] %v2091
      %2232 = vst [vmem:[%s204 + $0xd0] sm:$0xff] %v2092
      %2233 = vst [vmem:[%s204 + $0xd8] sm:$0xff] %v2093
      %2234 = vst [vmem:[%s204 + $0xe0] sm:$0xff] %v2094
      %2235 = vst [vmem:[%s204 + $0xe8] sm:$0xff] %v2095
      %2236 = vst [vmem:[%s204 + $0xf0] sm:$0xff] %v2096
      %2237 = vst [vmem:[%s204 + $0xf8] sm:$0xff] %v2097
      %p2238 = scmp.lt.s32.totalorder %s16, 1
      %s2239 = scalar_select %p2238, %s16, 1
      %s2240 = smul.addr %s2239, 32
      %s2241 = smul.addr %s2240, 8
      %s2242 = scalar_lea.vmem %s3, %s2241
      %p2243 = scmp.lt.s32.totalorder %s16, 1
      %s2244 = scalar_select %p2243, %s16, 1
      %s2245 = smul.addr %s2244, 2
      %s2246 = scalar_lea.vmem %s4, %s2245
      // Predicated region
      $region33: #{basic_block.4} parent=31 // pred_check
        %p2247 = pneg %p102
      $region34: #{basic_block.4} parent=31 // pred_check_branch
        %2249 = sbr.rel (%p2247) target = $region36
      $region35: #{basic_block.4} parent=31 // pred_region
        _
      $region36: #{basic_block.4} parent=31 // pred_fallthru
        _
      // Predicated region
      $region37: #{basic_block.4} parent=31 // pred_check
        %p2250 = pneg %p128
      $region38: #{basic_block.4} parent=31 // pred_check_branch
        %2252 = sbr.rel (%p2250) target = $region40
      $region39: #{basic_block.4} parent=31 // pred_region
        _
      $region40: #{basic_block.4} parent=31 // pred_fallthru
        _
    $region32: #{basic_block.4} parent=5 // pred_fallthru
      _
    %p2253 = scmp.le.s32.totalorder 2, %s11
    // Predicated region
    $region41: #{basic_block.4} parent=5 // pred_check
      %p2254 = pneg %p2253
    $region42: #{basic_block.4} parent=5 // pred_check_branch
      %2256 = sbr.rel (%p2254) target = $region44
    $region43: #{basic_block.4} parent=5 // pred_region
      %s2257 = ssub.s32 %s11, 2
      // Predicated region
      $region45: #{basic_block.4} parent=43 // pred_check
        %p2258 = pneg %p108
      $region46: #{basic_block.4} parent=43 // pred_check_branch
        %2260 = sbr.rel (%p2258) target = $region48
      $region47: #{basic_block.4} parent=43 // pred_region
        %p2261 = scmp.lt.s32.totalorder %s17, 1
        %s2262 = scalar_select %p2261, %s17, 1
        %s2263 = smul.addr %s2262, 32
        %s2264 = smul.addr %s2263, 8
        %s2265 = scalar_lea.vmem %s3, %s2264
      $region48: #{basic_block.4} parent=43 // pred_fallthru
        _
      // Predicated region
      $region49: #{basic_block.4} parent=43 // pred_check
        %p2266 = pneg %p134
      $region50: #{basic_block.4} parent=43 // pred_check_branch
        %2268 = sbr.rel (%p2266) target = $region52
      $region51: #{basic_block.4} parent=43 // pred_region
        %p2269 = scmp.lt.s32.totalorder %s17, 1
        %s2270 = scalar_select %p2269, %s17, 1
        %s2271 = smul.addr %s2270, 2
        %s2272 = scalar_lea.vmem %s4, %s2271
      $region52: #{basic_block.4} parent=43 // pred_fallthru
        _
    $region44: #{basic_block.4} parent=5 // pred_fallthru
      _
  $region6: #{basic_block.4} parent=0 // loop_footer
    %s15 = sadd.s32 1, %s11
  $region7: #{basic_block.4} parent=0 // loop_footer_branch
    %10 = sbr.rel target = $region3
  $region8: #{basic_block.4} parent=0 // loop_exit
    _

</llo_original>
